<compile_context>
chip_gen: v7x
topology: tpu7x:2x2x1
jax: 0.10.0
libtpu: 0.0.40
codegen_flags: <defaults>
</compile_context>

<pallas_src>
import math

import jax
import jax.numpy as jnp
from jax.experimental import pallas as pl
from jax.experimental.pallas import tpu as pltpu

# ----------------- config (small, consistent with the module) -----------------
SEQUENCE = "sequence"
B = 2             # batch_size
L = 8             # max_len (= seq_len of items / input)
D = 32            # hidden_dim
H = 2             # n_head
DH = D // H       # dim_head
N_ITER = 2        # n_iter
N_NODES = 50      # n_nodes[SEQUENCE]
NT = L + 2        # cls token + sequence + mask token

NEG = -1e30
SCALE = 1.0 / math.sqrt(DH)


# ================================ fused Pallas kernel ================================

def _graphformer_kernel(ht_ref, hs_ref, hg_ref, adj_ref, mt_ref, mf_ref,
                        agg_ref, ln_ref, wqkv_ref, wo_ref, w1_ref, w2_ref,
                        toq_ref, tok_ref,
                        o_local_ref, o_g_ref):
    """Full GRAPHFORMER forward for one batch element (everything VMEM-resident).

    ht_ref  : (1, NT, D)  initial h_trans = [cls, h_seq, mask_tok] + pos_emb
    hs_ref  : (1, L, D)   h_seq (cross-attn keys/values)
    hg_ref  : (1, L, D)   initial h_local (graph embeddings)
    adj_ref : (1, L, L)   int32 relation ids {0..4}
    mt_ref  : (1, 1, NT)  transformer key mask (1=valid)
    mf_ref  : (1, 1, L)   item mask (1=valid)
    agg_ref : (N_ITER*4, D)        relation attention vectors, packed
    ln_ref  : (N_ITER*4, D)        [ln1_w, ln1_b, ln2_w, ln2_b] per iteration
    wqkv_ref: (N_ITER*D, 3D)       [Wq;Wk;Wv]^T per iteration (pre-transposed)
    wo_ref  : (N_ITER*D, D)        Wo^T per iteration
    w1_ref  : (N_ITER*D, 4D)       W1^T per iteration
    w2_ref  : (N_ITER*4D, D)       W2^T per iteration
    toq_ref : (D, D)               to_q^T
    tok_ref : (D, DH)              to_k^T
    """
    h_trans = ht_ref[0]            # (NT, D)
    h_seq = hs_ref[0]              # (L, D)
    h_local = hg_ref[0]            # (L, D)
    adj = adj_ref[0]               # (L, L) int32
    kmask_t = mt_ref[0]            # (1, NT)
    kmask_s = mf_ref[0]            # (1, L)

    # ---- constants hoisted out of the n_iter loop (built once) ----
    row = jax.lax.broadcasted_iota(jnp.int32, (NT, NT), 0)
    col = jax.lax.broadcasted_iota(jnp.int32, (NT, NT), 1)
    causal_valid = (col <= row) & (kmask_t > 0.5)            # (NT, NT) causal & key-pad

    r2 = jax.lax.broadcasted_iota(jnp.int32, (NT, L), 0)
    c2 = jax.lax.broadcasted_iota(jnp.int32, (NT, L), 1)
    shift = (r2 == c2 + 1).astype(jnp.float32)               # maps (L,D) into rows 1..L of (NT,D)

    def softmax_rows(s):
        m = jnp.max(s, axis=-1, keepdims=True)
        p = jnp.exp(s - m)
        return p * pl.reciprocal(jnp.sum(p, axis=-1, keepdims=True), approx=True)

    def layer_norm(v, w, b):
        mu = jnp.mean(v, axis=-1, keepdims=True)
        var = jnp.mean((v - mu) ** 2, axis=-1, keepdims=True)
        return (v - mu) * jax.lax.rsqrt(var + 1e-5) * w + b

    for i in range(N_ITER):                                  # static, unrolled (N_ITER=2)
        # ---------- local aggregator (relation-typed graph attention) ----------
        # batch the 4 relation score matmuls into one MXU call: (4L, D) x (D, L)
        stacked = jnp.concatenate(
            [h_local * agg_ref[i * 4 + k:i * 4 + k + 1, :] for k in range(4)], axis=0)
        e_all = jnp.dot(stacked, h_local.T, preferred_element_type=jnp.float32)   # (4L, L)
        e_all = jnp.where(e_all > 0, e_all, 0.2 * e_all)      # LeakyReLU(0.2)
        alpha = jnp.full((L, L), -9e15, dtype=jnp.float32)
        for k in range(4):
            alpha = jnp.where(adj == (k + 1), e_all[k * L:(k + 1) * L, :], alpha)
        # TODO(synk): rows with no relation in {1..4} soften to a uniform average over
        # all L positions (reference LocalAggregator definition not provided).
        h_local = jnp.dot(softmax_rows(alpha), h_local, preferred_element_type=jnp.float32)

        # ---------- residual: h_trans[:, 1:-1] += h_local (tiny shift matmul) ----------
        h_trans = h_trans + jnp.dot(shift, h_local, preferred_element_type=jnp.float32)

        # ---------- pre-LN transformer block (depth=1, causal) ----------
        xn = layer_norm(h_trans,
                        ln_ref[i * 4 + 0:i * 4 + 1, :], ln_ref[i * 4 + 1:i * 4 + 2, :])
        qkv = jnp.dot(xn, wqkv_ref[i * D:(i + 1) * D, :],
                      preferred_element_type=jnp.float32)     # (NT, 3D) fused projection
        attn = jnp.zeros((NT, D), jnp.float32)
        for h in range(H):                                    # tiny static head loop
            q_h = qkv[:, h * DH:(h + 1) * DH]
            k_h = qkv[:, D + h * DH:D + (h + 1) * DH]
            v_h = qkv[:, 2 * D + h * DH:2 * D + (h + 1) * DH]
            s = jnp.dot(q_h, k_h.T, preferred_element_type=jnp.float32) * SCALE
            s = jnp.where(causal_valid, s, NEG)
            oh = jnp.dot(softmax_rows(s), v_h, preferred_element_type=jnp.float32)   # (NT, DH)
            attn = attn + jnp.dot(oh, wo_ref[i * D + h * DH:i * D + (h + 1) * DH, :],
                                  preferred_element_type=jnp.float32)
        h_trans = h_trans + attn

        xn2 = layer_norm(h_trans,
                         ln_ref[i * 4 + 2:i * 4 + 3, :], ln_ref[i * 4 + 3:i * 4 + 4, :])
        hdn = jax.nn.gelu(jnp.dot(xn2, w1_ref[i * D:(i + 1) * D, :],
                                  preferred_element_type=jnp.float32))                # (NT, 4D)
        h_trans = h_trans + jnp.dot(hdn, w2_ref[i * 4 * D:(i + 1) * 4 * D, :],
                                    preferred_element_type=jnp.float32)

    # ---------- output cross-attention (q = to_q(h_trans), k = to_k(h_seq), v = h_seq) ----------
    q = jnp.dot(h_trans, toq_ref[...], preferred_element_type=jnp.float32)   # (NT, D)
    kk = jnp.dot(h_seq, tok_ref[...], preferred_element_type=jnp.float32)    # (L, DH), shared by heads
    valid_s = kmask_s > 0.5
    g = jnp.zeros((NT, D), jnp.float32)
    for h in range(H):
        s = jnp.dot(q[:, h * DH:(h + 1) * DH], kk.T, preferred_element_type=jnp.float32)  # (NT, L)
        s = jnp.where(valid_s, s, NEG)                      # -1e30 (stable softmax)
        g = g + jnp.dot(softmax_rows(s), h_seq, preferred_element_type=jnp.float32)

    o_local_ref[0] = h_local
    o_g_ref[0] = g


# ================================ pallas_call wrapper ================================

def _full_spec(shape):
    return pl.BlockSpec(shape, lambda b, _n=len(shape): (0,) * _n)


def graphformer_fused(h_trans0, h_seq, h_graph, adj, mask_trans_f, mask_f,
                      agg2, ln2, wqkv2, wo2, w12, w22, toq_t, tok_t):
    out_shape = (jax.ShapeDtypeStruct((B, L, D), jnp.float32),    # h_local
                 jax.ShapeDtypeStruct((B, NT, D), jnp.float32))   # g
    return pl.pallas_call(
        _graphformer_kernel,
        out_shape=out_shape,
        grid=(B,),
        in_specs=[
            pl.BlockSpec((1, NT, D), lambda b: (b, 0, 0)),   # h_trans0
            pl.BlockSpec((1, L, D), lambda b: (b, 0, 0)),    # h_seq
            pl.BlockSpec((1, L, D), lambda b: (b, 0, 0)),    # h_graph
            pl.BlockSpec((1, L, L), lambda b: (b, 0, 0)),    # adj (int32)
            pl.BlockSpec((1, 1, NT), lambda b: (b, 0, 0)),   # mask_trans
            pl.BlockSpec((1, 1, L), lambda b: (b, 0, 0)),    # mask
            _full_spec((N_ITER * 4, D)),                     # agg_a packed
            _full_spec((N_ITER * 4, D)),                     # ln packed
            _full_spec((N_ITER * D, 3 * D)),                 # Wqkv^T packed
            _full_spec((N_ITER * D, D)),                     # Wo^T packed
            _full_spec((N_ITER * D, 4 * D)),                 # W1^T packed
            _full_spec((N_ITER * 4 * D, D)),                 # W2^T packed
            _full_spec((D, D)),                              # to_q^T
            _full_spec((D, DH)),                             # to_k^T
        ],
        out_specs=(
            pl.BlockSpec((1, L, D), lambda b: (b, 0, 0)),
            pl.BlockSpec((1, NT, D), lambda b: (b, 0, 0)),
        ),
        compiler_params=pltpu.CompilerParams(dimension_semantics=("parallel",)),
    )(h_trans0, h_seq, h_graph, adj, mask_trans_f, mask_f,
      agg2, ln2, wqkv2, wo2, w12, w22, toq_t, tok_t)


# ================================ forward (eval mode) ================================

@jax.jit
def graphformer_forward(params, inp_ids, item_ids, adj, mask):
    # embeddings (glue gather)
    emb_w = params["emb"]
    h_seq = jnp.take(emb_w, inp_ids, axis=0)        # (B, L, D)
    h_graph = jnp.take(emb_w, item_ids, axis=0)     # (B, L, D)

    # h_trans = [cls, mean_over_keys(h_seqs)=h_seq, mask_token]
    cls = jnp.broadcast_to(params["cls"][None, :, :], (B, 1, D))
    mtok = jnp.broadcast_to(params["mask_tok"][None, :, :], (B, 1, D))
    h_trans0 = jnp.concatenate([cls, h_seq, mtok], axis=1)         # (B, NT, D)

    ones = jnp.ones((B, 1), dtype=bool)
    mask_trans = jnp.concatenate([ones, mask, ones], axis=1)       # (B, NT)
    pos_idx = jnp.maximum(jnp.cumsum(mask_trans.astype(jnp.int32), axis=1) - 1, 0)
    pos_emb = jnp.take(params["pos_emb"], pos_idx, axis=0)         # (B, NT, D)
    # pos_emb is added once (i==0) before the first transformer; it commutes with
    # the i==0 local residual add, so fold it into the initial h_trans.
    h_trans0 = h_trans0 + pos_emb

    mask_trans_f = mask_trans.astype(jnp.float32)[:, None, :]      # (B, 1, NT)
    mask_f = mask.astype(jnp.float32)[:, None, :]                  # (B, 1, L)

    # pack per-iteration weights into contiguous slabs (fewer DMA descriptors);
    # pre-transpose so the kernel never transposes weights on the XLU.
    tp = params["transformers"]
    agg2 = jnp.concatenate(params["agg_a"], axis=0)                                    # (2*4, D)
    ln2 = jnp.concatenate([jnp.concatenate([t[0], t[1], t[6], t[7]], axis=0) for t in tp], axis=0)
    wqkv2 = jnp.concatenate([jnp.concatenate([t[2], t[3], t[4]], axis=0).T for t in tp], axis=0)
    wo2 = jnp.concatenate([t[5].T for t in tp], axis=0)                                # (2*D, D)
    w12 = jnp.concatenate([t[8].T for t in tp], axis=0)                                # (2*D, 4D)
    w22 = jnp.concatenate([t[9].T for t in tp], axis=0)                                # (2*4D, D)
    toq_t = params["to_q"].T                                                           # (D, D)
    tok_t = params["to_k"].T                                                           # (D, DH)

    h_local, g = graphformer_fused(
        h_trans0, h_seq, h_graph, adj.astype(jnp.int32), mask_trans_f, mask_f,
        agg2, ln2, wqkv2, wo2, w12, w22, toq_t, tok_t)

    # output head (mtl=False -> SEQUENCE only); dropout is identity in eval
    return h_local, g[:, 1:-1], g[:, -1]


# ================================ init + run ================================

def init_params(key):
    stdv = 1.0 / math.sqrt(D)
    keys = list(jax.random.split(key, 32))
    nk = iter(keys)
    u = lambda shp: jax.random.uniform(next(nk), shp, jnp.float32, -stdv, stdv)

    params = {
        "emb": u((N_NODES, D)),
        "pos_emb": u((L + 2, D)),
        "cls": u((1, D)),
        "mask_tok": u((1, D)),
        "to_q": u((D, D)),
        "to_k": u((DH, D)),
        "agg_a": [],
        "transformers": [],
    }
    for _ in range(N_ITER):
        params["agg_a"].append(u((4, D)))
        params["transformers"].append((
            jnp.ones((1, D), jnp.float32), jnp.zeros((1, D), jnp.float32),   # ln1
            u((D, D)), u((D, D)), u((D, D)), u((D, D)),                      # wq wk wv wo
            jnp.ones((1, D), jnp.float32), jnp.zeros((1, D), jnp.float32),   # ln2
            u((4 * D, D)), u((D, 4 * D)),                                    # ffn
        ))
    return params


if __name__ == "__main__":
    root = jax.random.PRNGKey(0)
    pkey, k1, k2, k3 = jax.random.split(root, 4)
    params = init_params(pkey)

    lengths = jnp.array([6, 8], dtype=jnp.int32)
    pos = jnp.arange(L, dtype=jnp.int32)[None, :]
    mask = pos < lengths[:, None]                                  # (B, L) bool

    inp_ids = jnp.where(mask, jax.random.randint(k1, (B, L), 1, N_NODES), 0).astype(jnp.int32)
    item_ids = jnp.where(mask, jax.random.randint(k2, (B, L), 1, N_NODES), 0).astype(jnp.int32)
    adj = jax.random.randint(k3, (B, L, L), 0, 5).astype(jnp.int32)

    h_local, g_mid, g_last = graphformer_forward(params, inp_ids, item_ids, adj, mask)
    jax.block_until_ready((h_local, g_mid, g_last))

    assert h_local.shape == (B, L, D)
    assert g_mid.shape == (B, L, D)
    assert g_last.shape == (B, D)
    assert bool(jnp.all(jnp.isfinite(h_local))) and bool(jnp.all(jnp.isfinite(g_mid)))
    print("KERNEL_OK")
</pallas_src>

<mosaic_0001>
module attributes {stable_mosaic.version = 11 : i64} {
  func.func @_graphformer_kernel(%arg0: i32, %arg1: memref<1x10x32xf32, #tpu.memory_space<vmem>>, %arg2: memref<1x8x32xf32, #tpu.memory_space<vmem>>, %arg3: memref<1x8x32xf32, #tpu.memory_space<vmem>>, %arg4: memref<1x8x8xi32, #tpu.memory_space<vmem>>, %arg5: memref<1x1x10xf32, #tpu.memory_space<vmem>>, %arg6: memref<1x1x8xf32, #tpu.memory_space<vmem>>, %arg7: memref<8x32xf32, #tpu.memory_space<vmem>>, %arg8: memref<8x32xf32, #tpu.memory_space<vmem>>, %arg9: memref<64x96xf32, #tpu.memory_space<vmem>>, %arg10: memref<64x32xf32, #tpu.memory_space<vmem>>, %arg11: memref<64x128xf32, #tpu.memory_space<vmem>>, %arg12: memref<256x32xf32, #tpu.memory_space<vmem>>, %arg13: memref<32x32xf32, #tpu.memory_space<vmem>>, %arg14: memref<32x16xf32, #tpu.memory_space<vmem>>, %arg15: memref<1x8x32xf32, #tpu.memory_space<vmem>>, %arg16: memref<1x10x32xf32, #tpu.memory_space<vmem>>) attributes {dimension_semantics = [#tpu.dimension_semantics<parallel>], iteration_bounds = array<i64: 2>, scalar_prefetch = 0 : i64, scratch_operands = 0 : i64, tpu.core_type = #tpu.core_type<tc>, window_params = [{transform_indices = @transform_0, window_bounds = array<i64: 1, 10, 32>}, {transform_indices = @transform_1, window_bounds = array<i64: 1, 8, 32>}, {transform_indices = @transform_2, window_bounds = array<i64: 1, 8, 32>}, {transform_indices = @transform_3, window_bounds = array<i64: 1, 8, 8>}, {transform_indices = @transform_4, window_bounds = array<i64: 1, 1, 10>}, {transform_indices = @transform_5, window_bounds = array<i64: 1, 1, 8>}, {pipeline_mode = #tpu.pipeline_mode<synchronous>, transform_indices = @transform_6, window_bounds = array<i64: 8, 32>}, {pipeline_mode = #tpu.pipeline_mode<synchronous>, transform_indices = @transform_7, window_bounds = array<i64: 8, 32>}, {pipeline_mode = #tpu.pipeline_mode<synchronous>, transform_indices = @transform_8, window_bounds = array<i64: 64, 96>}, {pipeline_mode = #tpu.pipeline_mode<synchronous>, transform_indices = @transform_9, window_bounds = array<i64: 64, 32>}, {pipeline_mode = #tpu.pipeline_mode<synchronous>, transform_indices = @transform_10, window_bounds = array<i64: 64, 128>}, {pipeline_mode = #tpu.pipeline_mode<synchronous>, transform_indices = @transform_11, window_bounds = array<i64: 256, 32>}, {pipeline_mode = #tpu.pipeline_mode<synchronous>, transform_indices = @transform_12, window_bounds = array<i64: 32, 32>}, {pipeline_mode = #tpu.pipeline_mode<synchronous>, transform_indices = @transform_13, window_bounds = array<i64: 32, 16>}, {transform_indices = @transform_14, window_bounds = array<i64: 1, 8, 32>}, {transform_indices = @transform_15, window_bounds = array<i64: 1, 10, 32>}]} {
    %c0 = arith.constant 0 : index
    %c0_0 = arith.constant 0 : index
    %c0_1 = arith.constant 0 : index
    %0 = vector.load %arg1[%c0, %c0_0, %c0_1] : memref<1x10x32xf32, #tpu.memory_space<vmem>>, vector<1x10x32xf32>
    %1 = vector.shape_cast %0 : vector<1x10x32xf32> to vector<10x32xf32>
    %c0_2 = arith.constant 0 : index
    %c0_3 = arith.constant 0 : index
    %c0_4 = arith.constant 0 : index
    %2 = vector.load %arg2[%c0_2, %c0_3, %c0_4] : memref<1x8x32xf32, #tpu.memory_space<vmem>>, vector<1x8x32xf32>
    %3 = vector.shape_cast %2 : vector<1x8x32xf32> to vector<8x32xf32>
    %c0_5 = arith.constant 0 : index
    %c0_6 = arith.constant 0 : index
    %c0_7 = arith.constant 0 : index
    %4 = vector.load %arg3[%c0_5, %c0_6, %c0_7] : memref<1x8x32xf32, #tpu.memory_space<vmem>>, vector<1x8x32xf32>
    %5 = vector.shape_cast %4 : vector<1x8x32xf32> to vector<8x32xf32>
    %c0_8 = arith.constant 0 : index
    %c0_9 = arith.constant 0 : index
    %c0_10 = arith.constant 0 : index
    %6 = vector.load %arg4[%c0_8, %c0_9, %c0_10] : memref<1x8x8xi32, #tpu.memory_space<vmem>>, vector<1x8x8xi32>
    %7 = vector.shape_cast %6 : vector<1x8x8xi32> to vector<8x8xi32>
    %c0_11 = arith.constant 0 : index
    %c0_12 = arith.constant 0 : index
    %c0_13 = arith.constant 0 : index
    %8 = vector.load %arg5[%c0_11, %c0_12, %c0_13] : memref<1x1x10xf32, #tpu.memory_space<vmem>>, vector<1x1x10xf32>
    %9 = vector.shape_cast %8 : vector<1x1x10xf32> to vector<1x10xf32>
    %c0_14 = arith.constant 0 : index
    %c0_15 = arith.constant 0 : index
    %c0_16 = arith.constant 0 : index
    %10 = vector.load %arg6[%c0_14, %c0_15, %c0_16] : memref<1x1x8xf32, #tpu.memory_space<vmem>>, vector<1x1x8xf32>
    %11 = vector.shape_cast %10 : vector<1x1x8xf32> to vector<1x8xf32>
    %12 = tpu.iota {dimensions = array<i32: 0>} : vector<10x10xi32>
    %13 = tpu.iota {dimensions = array<i32: 1>} : vector<10x10xi32>
    %14 = arith.cmpi sle, %13, %12 : vector<10x10xi32>
    %cst = arith.constant 5.000000e-01 : f32
    %15 = vector.broadcast %cst : f32 to vector<1x10xf32>
    %16 = arith.cmpf ogt, %9, %15 : vector<1x10xf32>
    %17 = vector.broadcast %16 : vector<1x10xi1> to vector<10x10xi1>
    %18 = arith.andi %14, %17 : vector<10x10xi1>
    %19 = tpu.iota {dimensions = array<i32: 0>} : vector<10x8xi32>
    %20 = tpu.iota {dimensions = array<i32: 1>} : vector<10x8xi32>
    %c1_i32 = arith.constant 1 : i32
    %21 = vector.broadcast %c1_i32 : i32 to vector<10x8xi32>
    %22 = arith.addi %20, %21 : vector<10x8xi32>
    %23 = arith.cmpi eq, %19, %22 : vector<10x8xi32>
    %24 = arith.extui %23 : vector<10x8xi1> to vector<10x8xi32>
    %25 = arith.sitofp %24 : vector<10x8xi32> to vector<10x8xf32>
    %c0_17 = arith.constant 0 : index
    %c0_18 = arith.constant 0 : index
    %26 = vector.load %arg7[%c0_17, %c0_18] : memref<8x32xf32, #tpu.memory_space<vmem>>, vector<1x32xf32>
    %27 = vector.broadcast %26 : vector<1x32xf32> to vector<8x32xf32>
    %28 = arith.mulf %5, %27 : vector<8x32xf32>
    %c1 = arith.constant 1 : index
    %c0_19 = arith.constant 0 : index
    %29 = vector.load %arg7[%c1, %c0_19] : memref<8x32xf32, #tpu.memory_space<vmem>>, vector<1x32xf32>
    %30 = vector.broadcast %29 : vector<1x32xf32> to vector<8x32xf32>
    %31 = arith.mulf %5, %30 : vector<8x32xf32>
    %c2 = arith.constant 2 : index
    %c0_20 = arith.constant 0 : index
    %32 = vector.load %arg7[%c2, %c0_20] : memref<8x32xf32, #tpu.memory_space<vmem>>, vector<1x32xf32>
    %33 = vector.broadcast %32 : vector<1x32xf32> to vector<8x32xf32>
    %34 = arith.mulf %5, %33 : vector<8x32xf32>
    %c3 = arith.constant 3 : index
    %c0_21 = arith.constant 0 : index
    %35 = vector.load %arg7[%c3, %c0_21] : memref<8x32xf32, #tpu.memory_space<vmem>>, vector<1x32xf32>
    %36 = vector.broadcast %35 : vector<1x32xf32> to vector<8x32xf32>
    %37 = arith.mulf %5, %36 : vector<8x32xf32>
    %38 = tpu.concatenate %28, %31, %34, %37 in 0 : vector<8x32xf32>, vector<8x32xf32>, vector<8x32xf32>, vector<8x32xf32> -> vector<32x32xf32>
    %39 = tpu.transpose %5, [1, 0] : vector<8x32xf32> -> vector<32x8xf32>
    %cst_22 = arith.constant dense<0.000000e+00> : vector<32x8xf32>
    %40 = tpu.matmul %38, %39, %cst_22 {dimension_numbers = #tpu.dot_dimension_numbers<[1], [0], [0], [1], [0, 0, 1, 1], [], []>} : vector<32x32xf32>, vector<32x8xf32>, vector<32x8xf32> -> vector<32x8xf32>
    %cst_23 = arith.constant 0.000000e+00 : f32
    %41 = vector.broadcast %cst_23 : f32 to vector<32x8xf32>
    %42 = arith.cmpf ogt, %40, %41 : vector<32x8xf32>
    %cst_24 = arith.constant 2.000000e-01 : f32
    %43 = vector.broadcast %cst_24 : f32 to vector<32x8xf32>
    %44 = arith.mulf %43, %40 : vector<32x8xf32>
    %45 = arith.select %42, %40, %44 : vector<32x8xi1>, vector<32x8xf32>
    %cst_25 = arith.constant -9.000000e+15 : f32
    %46 = vector.broadcast %cst_25 : f32 to vector<8x8xf32>
    %c1_i32_26 = arith.constant 1 : i32
    %47 = vector.broadcast %c1_i32_26 : i32 to vector<8x8xi32>
    %48 = arith.cmpi eq, %7, %47 : vector<8x8xi32>
    %49 = vector.extract_strided_slice %45 {offsets = [0, 0], sizes = [8, 8], strides = [1, 1]} : vector<32x8xf32> to vector<8x8xf32>
    %50 = arith.select %48, %49, %46 : vector<8x8xi1>, vector<8x8xf32>
    %c2_i32 = arith.constant 2 : i32
    %51 = vector.broadcast %c2_i32 : i32 to vector<8x8xi32>
    %52 = arith.cmpi eq, %7, %51 : vector<8x8xi32>
    %53 = vector.extract_strided_slice %45 {offsets = [8, 0], sizes = [8, 8], strides = [1, 1]} : vector<32x8xf32> to vector<8x8xf32>
    %54 = arith.select %52, %53, %50 : vector<8x8xi1>, vector<8x8xf32>
    %c3_i32 = arith.constant 3 : i32
    %55 = vector.broadcast %c3_i32 : i32 to vector<8x8xi32>
    %56 = arith.cmpi eq, %7, %55 : vector<8x8xi32>
    %57 = vector.extract_strided_slice %45 {offsets = [16, 0], sizes = [8, 8], strides = [1, 1]} : vector<32x8xf32> to vector<8x8xf32>
    %58 = arith.select %56, %57, %54 : vector<8x8xi1>, vector<8x8xf32>
    %c4_i32 = arith.constant 4 : i32
    %59 = vector.broadcast %c4_i32 : i32 to vector<8x8xi32>
    %60 = arith.cmpi eq, %7, %59 : vector<8x8xi32>
    %61 = vector.extract_strided_slice %45 {offsets = [24, 0], sizes = [8, 8], strides = [1, 1]} : vector<32x8xf32> to vector<8x8xf32>
    %62 = arith.select %60, %61, %58 : vector<8x8xi1>, vector<8x8xf32>
    %cst_27 = arith.constant dense<0xFF800000> : vector<8xf32>
    %63 = vector.multi_reduction <maximumf>, %62, %cst_27 [1] : vector<8x8xf32> to vector<8xf32>
    %64 = vector.shape_cast %63 : vector<8xf32> to vector<8x1xf32>
    %65 = vector.broadcast %64 : vector<8x1xf32> to vector<8x8xf32>
    %66 = arith.subf %62, %65 : vector<8x8xf32>
    %67 = math.exp %66 : vector<8x8xf32>
    %cst_28 = arith.constant dense<0.000000e+00> : vector<8xf32>
    %68 = vector.multi_reduction <add>, %67, %cst_28 [1] : vector<8x8xf32> to vector<8xf32>
    %69 = vector.shape_cast %68 : vector<8xf32> to vector<8x1xf32>
    %70 = tpu.reciprocal %69 {approx = true} : vector<8x1xf32> -> vector<8x1xf32>
    %71 = vector.broadcast %70 : vector<8x1xf32> to vector<8x8xf32>
    %72 = arith.mulf %67, %71 : vector<8x8xf32>
    %cst_29 = arith.constant dense<0.000000e+00> : vector<8x32xf32>
    %73 = tpu.matmul %72, %5, %cst_29 {dimension_numbers = #tpu.dot_dimension_numbers<[1], [0], [0], [1], [0, 0, 1, 1], [], []>} : vector<8x8xf32>, vector<8x32xf32>, vector<8x32xf32> -> vector<8x32xf32>
    %cst_30 = arith.constant dense<0.000000e+00> : vector<10x32xf32>
    %74 = tpu.matmul %25, %73, %cst_30 {dimension_numbers = #tpu.dot_dimension_numbers<[1], [0], [0], [1], [0, 0, 1, 1], [], []>} : vector<10x8xf32>, vector<8x32xf32>, vector<10x32xf32> -> vector<10x32xf32>
    %75 = arith.addf %1, %74 : vector<10x32xf32>
    %c0_31 = arith.constant 0 : index
    %c0_32 = arith.constant 0 : index
    %76 = vector.load %arg8[%c0_31, %c0_32] : memref<8x32xf32, #tpu.memory_space<vmem>>, vector<1x32xf32>
    %c1_33 = arith.constant 1 : index
    %c0_34 = arith.constant 0 : index
    %77 = vector.load %arg8[%c1_33, %c0_34] : memref<8x32xf32, #tpu.memory_space<vmem>>, vector<1x32xf32>
    %cst_35 = arith.constant dense<0.000000e+00> : vector<10xf32>
    %78 = vector.multi_reduction <add>, %75, %cst_35 [1] : vector<10x32xf32> to vector<10xf32>
    %79 = vector.shape_cast %78 : vector<10xf32> to vector<10x1xf32>
    %cst_36 = arith.constant 3.200000e+01 : f32
    %80 = vector.broadcast %cst_36 : f32 to vector<10x1xf32>
    %81 = arith.divf %79, %80 : vector<10x1xf32>
    %82 = vector.broadcast %81 : vector<10x1xf32> to vector<10x32xf32>
    %83 = arith.subf %75, %82 : vector<10x32xf32>
    %84 = arith.mulf %83, %83 : vector<10x32xf32>
    %cst_37 = arith.constant dense<0.000000e+00> : vector<10xf32>
    %85 = vector.multi_reduction <add>, %84, %cst_37 [1] : vector<10x32xf32> to vector<10xf32>
    %86 = vector.shape_cast %85 : vector<10xf32> to vector<10x1xf32>
    %cst_38 = arith.constant 3.200000e+01 : f32
    %87 = vector.broadcast %cst_38 : f32 to vector<10x1xf32>
    %88 = arith.divf %86, %87 : vector<10x1xf32>
    %89 = vector.broadcast %81 : vector<10x1xf32> to vector<10x32xf32>
    %90 = arith.subf %75, %89 : vector<10x32xf32>
    %cst_39 = arith.constant 9.99999974E-6 : f32
    %91 = vector.broadcast %cst_39 : f32 to vector<10x1xf32>
    %92 = arith.addf %88, %91 : vector<10x1xf32>
    %93 = math.rsqrt %92 : vector<10x1xf32>
    %94 = vector.broadcast %93 : vector<10x1xf32> to vector<10x32xf32>
    %95 = arith.mulf %90, %94 : vector<10x32xf32>
    %96 = vector.broadcast %76 : vector<1x32xf32> to vector<10x32xf32>
    %97 = arith.mulf %95, %96 : vector<10x32xf32>
    %98 = vector.broadcast %77 : vector<1x32xf32> to vector<10x32xf32>
    %99 = arith.addf %97, %98 : vector<10x32xf32>
    %c0_40 = arith.constant 0 : index
    %c0_41 = arith.constant 0 : index
    %100 = vector.load %arg9[%c0_40, %c0_41] : memref<64x96xf32, #tpu.memory_space<vmem>>, vector<32x96xf32>
    %cst_42 = arith.constant dense<0.000000e+00> : vector<10x96xf32>
    %101 = tpu.matmul %99, %100, %cst_42 {dimension_numbers = #tpu.dot_dimension_numbers<[1], [0], [0], [1], [0, 0, 1, 1], [], []>} : vector<10x32xf32>, vector<32x96xf32>, vector<10x96xf32> -> vector<10x96xf32>
    %cst_43 = arith.constant 0.000000e+00 : f32
    %102 = vector.broadcast %cst_43 : f32 to vector<10x32xf32>
    %103 = vector.extract_strided_slice %101 {offsets = [0, 0], sizes = [10, 16], strides = [1, 1]} : vector<10x96xf32> to vector<10x16xf32>
    %104 = vector.extract_strided_slice %101 {offsets = [0, 32], sizes = [10, 16], strides = [1, 1]} : vector<10x96xf32> to vector<10x16xf32>
    %105 = vector.extract_strided_slice %101 {offsets = [0, 64], sizes = [10, 16], strides = [1, 1]} : vector<10x96xf32> to vector<10x16xf32>
    %106 = tpu.transpose %104, [1, 0] : vector<10x16xf32> -> vector<16x10xf32>
    %cst_44 = arith.constant dense<0.000000e+00> : vector<10x10xf32>
    %107 = tpu.matmul %103, %106, %cst_44 {dimension_numbers = #tpu.dot_dimension_numbers<[1], [0], [0], [1], [0, 0, 1, 1], [], []>} : vector<10x16xf32>, vector<16x10xf32>, vector<10x10xf32> -> vector<10x10xf32>
    %cst_45 = arith.constant 2.500000e-01 : f32
    %108 = vector.broadcast %cst_45 : f32 to vector<10x10xf32>
    %109 = arith.mulf %107, %108 : vector<10x10xf32>
    %cst_46 = arith.constant -1.000000e+30 : f32
    %110 = vector.broadcast %cst_46 : f32 to vector<10x10xf32>
    %111 = arith.select %18, %109, %110 : vector<10x10xi1>, vector<10x10xf32>
    %cst_47 = arith.constant dense<0xFF800000> : vector<10xf32>
    %112 = vector.multi_reduction <maximumf>, %111, %cst_47 [1] : vector<10x10xf32> to vector<10xf32>
    %113 = vector.shape_cast %112 : vector<10xf32> to vector<10x1xf32>
    %114 = vector.broadcast %113 : vector<10x1xf32> to vector<10x10xf32>
    %115 = arith.subf %111, %114 : vector<10x10xf32>
    %116 = math.exp %115 : vector<10x10xf32>
    %cst_48 = arith.constant dense<0.000000e+00> : vector<10xf32>
    %117 = vector.multi_reduction <add>, %116, %cst_48 [1] : vector<10x10xf32> to vector<10xf32>
    %118 = vector.shape_cast %117 : vector<10xf32> to vector<10x1xf32>
    %119 = tpu.reciprocal %118 {approx = true} : vector<10x1xf32> -> vector<10x1xf32>
    %120 = vector.broadcast %119 : vector<10x1xf32> to vector<10x10xf32>
    %121 = arith.mulf %116, %120 : vector<10x10xf32>
    %cst_49 = arith.constant dense<0.000000e+00> : vector<10x16xf32>
    %122 = tpu.matmul %121, %105, %cst_49 {dimension_numbers = #tpu.dot_dimension_numbers<[1], [0], [0], [1], [0, 0, 1, 1], [], []>} : vector<10x10xf32>, vector<10x16xf32>, vector<10x16xf32> -> vector<10x16xf32>
    %c0_50 = arith.constant 0 : index
    %c0_51 = arith.constant 0 : index
    %123 = vector.load %arg10[%c0_50, %c0_51] : memref<64x32xf32, #tpu.memory_space<vmem>>, vector<16x32xf32>
    %cst_52 = arith.constant dense<0.000000e+00> : vector<10x32xf32>
    %124 = tpu.matmul %122, %123, %cst_52 {dimension_numbers = #tpu.dot_dimension_numbers<[1], [0], [0], [1], [0, 0, 1, 1], [], []>} : vector<10x16xf32>, vector<16x32xf32>, vector<10x32xf32> -> vector<10x32xf32>
    %125 = arith.addf %102, %124 : vector<10x32xf32>
    %126 = vector.extract_strided_slice %101 {offsets = [0, 16], sizes = [10, 16], strides = [1, 1]} : vector<10x96xf32> to vector<10x16xf32>
    %127 = vector.extract_strided_slice %101 {offsets = [0, 48], sizes = [10, 16], strides = [1, 1]} : vector<10x96xf32> to vector<10x16xf32>
    %128 = vector.extract_strided_slice %101 {offsets = [0, 80], sizes = [10, 16], strides = [1, 1]} : vector<10x96xf32> to vector<10x16xf32>
    %129 = tpu.transpose %127, [1, 0] : vector<10x16xf32> -> vector<16x10xf32>
    %cst_53 = arith.constant dense<0.000000e+00> : vector<10x10xf32>
    %130 = tpu.matmul %126, %129, %cst_53 {dimension_numbers = #tpu.dot_dimension_numbers<[1], [0], [0], [1], [0, 0, 1, 1], [], []>} : vector<10x16xf32>, vector<16x10xf32>, vector<10x10xf32> -> vector<10x10xf32>
    %cst_54 = arith.constant 2.500000e-01 : f32
    %131 = vector.broadcast %cst_54 : f32 to vector<10x10xf32>
    %132 = arith.mulf %130, %131 : vector<10x10xf32>
    %cst_55 = arith.constant -1.000000e+30 : f32
    %133 = vector.broadcast %cst_55 : f32 to vector<10x10xf32>
    %134 = arith.select %18, %132, %133 : vector<10x10xi1>, vector<10x10xf32>
    %cst_56 = arith.constant dense<0xFF800000> : vector<10xf32>
    %135 = vector.multi_reduction <maximumf>, %134, %cst_56 [1] : vector<10x10xf32> to vector<10xf32>
    %136 = vector.shape_cast %135 : vector<10xf32> to vector<10x1xf32>
    %137 = vector.broadcast %136 : vector<10x1xf32> to vector<10x10xf32>
    %138 = arith.subf %134, %137 : vector<10x10xf32>
    %139 = math.exp %138 : vector<10x10xf32>
    %cst_57 = arith.constant dense<0.000000e+00> : vector<10xf32>
    %140 = vector.multi_reduction <add>, %139, %cst_57 [1] : vector<10x10xf32> to vector<10xf32>
    %141 = vector.shape_cast %140 : vector<10xf32> to vector<10x1xf32>
    %142 = tpu.reciprocal %141 {approx = true} : vector<10x1xf32> -> vector<10x1xf32>
    %143 = vector.broadcast %142 : vector<10x1xf32> to vector<10x10xf32>
    %144 = arith.mulf %139, %143 : vector<10x10xf32>
    %cst_58 = arith.constant dense<0.000000e+00> : vector<10x16xf32>
    %145 = tpu.matmul %144, %128, %cst_58 {dimension_numbers = #tpu.dot_dimension_numbers<[1], [0], [0], [1], [0, 0, 1, 1], [], []>} : vector<10x10xf32>, vector<10x16xf32>, vector<10x16xf32> -> vector<10x16xf32>
    %c16 = arith.constant 16 : index
    %c0_59 = arith.constant 0 : index
    %146 = vector.load %arg10[%c16, %c0_59] : memref<64x32xf32, #tpu.memory_space<vmem>>, vector<16x32xf32>
    %cst_60 = arith.constant dense<0.000000e+00> : vector<10x32xf32>
    %147 = tpu.matmul %145, %146, %cst_60 {dimension_numbers = #tpu.dot_dimension_numbers<[1], [0], [0], [1], [0, 0, 1, 1], [], []>} : vector<10x16xf32>, vector<16x32xf32>, vector<10x32xf32> -> vector<10x32xf32>
    %148 = arith.addf %125, %147 : vector<10x32xf32>
    %149 = arith.addf %75, %148 : vector<10x32xf32>
    %c2_61 = arith.constant 2 : index
    %c0_62 = arith.constant 0 : index
    %150 = vector.load %arg8[%c2_61, %c0_62] : memref<8x32xf32, #tpu.memory_space<vmem>>, vector<1x32xf32>
    %c3_63 = arith.constant 3 : index
    %c0_64 = arith.constant 0 : index
    %151 = vector.load %arg8[%c3_63, %c0_64] : memref<8x32xf32, #tpu.memory_space<vmem>>, vector<1x32xf32>
    %cst_65 = arith.constant dense<0.000000e+00> : vector<10xf32>
    %152 = vector.multi_reduction <add>, %149, %cst_65 [1] : vector<10x32xf32> to vector<10xf32>
    %153 = vector.shape_cast %152 : vector<10xf32> to vector<10x1xf32>
    %cst_66 = arith.constant 3.200000e+01 : f32
    %154 = vector.broadcast %cst_66 : f32 to vector<10x1xf32>
    %155 = arith.divf %153, %154 : vector<10x1xf32>
    %156 = vector.broadcast %155 : vector<10x1xf32> to vector<10x32xf32>
    %157 = arith.subf %149, %156 : vector<10x32xf32>
    %158 = arith.mulf %157, %157 : vector<10x32xf32>
    %cst_67 = arith.constant dense<0.000000e+00> : vector<10xf32>
    %159 = vector.multi_reduction <add>, %158, %cst_67 [1] : vector<10x32xf32> to vector<10xf32>
    %160 = vector.shape_cast %159 : vector<10xf32> to vector<10x1xf32>
    %cst_68 = arith.constant 3.200000e+01 : f32
    %161 = vector.broadcast %cst_68 : f32 to vector<10x1xf32>
    %162 = arith.divf %160, %161 : vector<10x1xf32>
    %163 = vector.broadcast %155 : vector<10x1xf32> to vector<10x32xf32>
    %164 = arith.subf %149, %163 : vector<10x32xf32>
    %cst_69 = arith.constant 9.99999974E-6 : f32
    %165 = vector.broadcast %cst_69 : f32 to vector<10x1xf32>
    %166 = arith.addf %162, %165 : vector<10x1xf32>
    %167 = math.rsqrt %166 : vector<10x1xf32>
    %168 = vector.broadcast %167 : vector<10x1xf32> to vector<10x32xf32>
    %169 = arith.mulf %164, %168 : vector<10x32xf32>
    %170 = vector.broadcast %150 : vector<1x32xf32> to vector<10x32xf32>
    %171 = arith.mulf %169, %170 : vector<10x32xf32>
    %172 = vector.broadcast %151 : vector<1x32xf32> to vector<10x32xf32>
    %173 = arith.addf %171, %172 : vector<10x32xf32>
    %c0_70 = arith.constant 0 : index
    %c0_71 = arith.constant 0 : index
    %174 = vector.load %arg11[%c0_70, %c0_71] : memref<64x128xf32, #tpu.memory_space<vmem>>, vector<32x128xf32>
    %cst_72 = arith.constant dense<0.000000e+00> : vector<10x128xf32>
    %175 = tpu.matmul %173, %174, %cst_72 {dimension_numbers = #tpu.dot_dimension_numbers<[1], [0], [0], [1], [0, 0, 1, 1], [], []>} : vector<10x32xf32>, vector<32x128xf32>, vector<10x128xf32> -> vector<10x128xf32>
    %176 = arith.mulf %175, %175 : vector<10x128xf32>
    %177 = arith.mulf %175, %176 : vector<10x128xf32>
    %cst_73 = arith.constant 4.471500e-02 : f32
    %178 = vector.broadcast %cst_73 : f32 to vector<10x128xf32>
    %179 = arith.mulf %178, %177 : vector<10x128xf32>
    %180 = arith.addf %175, %179 : vector<10x128xf32>
    %cst_74 = arith.constant 0.797884583 : f32
    %181 = vector.broadcast %cst_74 : f32 to vector<10x128xf32>
    %182 = arith.mulf %181, %180 : vector<10x128xf32>
    %183 = math.tanh %182 : vector<10x128xf32>
    %cst_75 = arith.constant 1.000000e+00 : f32
    %184 = vector.broadcast %cst_75 : f32 to vector<10x128xf32>
    %185 = arith.addf %184, %183 : vector<10x128xf32>
    %cst_76 = arith.constant 5.000000e-01 : f32
    %186 = vector.broadcast %cst_76 : f32 to vector<10x128xf32>
    %187 = arith.mulf %186, %185 : vector<10x128xf32>
    %188 = arith.mulf %175, %187 : vector<10x128xf32>
    %c0_77 = arith.constant 0 : index
    %c0_78 = arith.constant 0 : index
    %189 = vector.load %arg12[%c0_77, %c0_78] : memref<256x32xf32, #tpu.memory_space<vmem>>, vector<128x32xf32>
    %cst_79 = arith.constant dense<0.000000e+00> : vector<10x32xf32>
    %190 = tpu.matmul %188, %189, %cst_79 {dimension_numbers = #tpu.dot_dimension_numbers<[1], [0], [0], [1], [0, 0, 1, 1], [], []>} : vector<10x128xf32>, vector<128x32xf32>, vector<10x32xf32> -> vector<10x32xf32>
    %191 = arith.addf %149, %190 : vector<10x32xf32>
    %c4 = arith.constant 4 : index
    %c0_80 = arith.constant 0 : index
    %192 = vector.load %arg7[%c4, %c0_80] : memref<8x32xf32, #tpu.memory_space<vmem>>, vector<1x32xf32>
    %193 = vector.broadcast %192 : vector<1x32xf32> to vector<8x32xf32>
    %194 = arith.mulf %73, %193 : vector<8x32xf32>
    %c5 = arith.constant 5 : index
    %c0_81 = arith.constant 0 : index
    %195 = vector.load %arg7[%c5, %c0_81] : memref<8x32xf32, #tpu.memory_space<vmem>>, vector<1x32xf32>
    %196 = vector.broadcast %195 : vector<1x32xf32> to vector<8x32xf32>
    %197 = arith.mulf %73, %196 : vector<8x32xf32>
    %c6 = arith.constant 6 : index
    %c0_82 = arith.constant 0 : index
    %198 = vector.load %arg7[%c6, %c0_82] : memref<8x32xf32, #tpu.memory_space<vmem>>, vector<1x32xf32>
    %199 = vector.broadcast %198 : vector<1x32xf32> to vector<8x32xf32>
    %200 = arith.mulf %73, %199 : vector<8x32xf32>
    %c7 = arith.constant 7 : index
    %c0_83 = arith.constant 0 : index
    %201 = vector.load %arg7[%c7, %c0_83] : memref<8x32xf32, #tpu.memory_space<vmem>>, vector<1x32xf32>
    %202 = vector.broadcast %201 : vector<1x32xf32> to vector<8x32xf32>
    %203 = arith.mulf %73, %202 : vector<8x32xf32>
    %204 = tpu.concatenate %194, %197, %200, %203 in 0 : vector<8x32xf32>, vector<8x32xf32>, vector<8x32xf32>, vector<8x32xf32> -> vector<32x32xf32>
    %205 = tpu.transpose %73, [1, 0] : vector<8x32xf32> -> vector<32x8xf32>
    %cst_84 = arith.constant dense<0.000000e+00> : vector<32x8xf32>
    %206 = tpu.matmul %204, %205, %cst_84 {dimension_numbers = #tpu.dot_dimension_numbers<[1], [0], [0], [1], [0, 0, 1, 1], [], []>} : vector<32x32xf32>, vector<32x8xf32>, vector<32x8xf32> -> vector<32x8xf32>
    %cst_85 = arith.constant 0.000000e+00 : f32
    %207 = vector.broadcast %cst_85 : f32 to vector<32x8xf32>
    %208 = arith.cmpf ogt, %206, %207 : vector<32x8xf32>
    %cst_86 = arith.constant 2.000000e-01 : f32
    %209 = vector.broadcast %cst_86 : f32 to vector<32x8xf32>
    %210 = arith.mulf %209, %206 : vector<32x8xf32>
    %211 = arith.select %208, %206, %210 : vector<32x8xi1>, vector<32x8xf32>
    %cst_87 = arith.constant -9.000000e+15 : f32
    %212 = vector.broadcast %cst_87 : f32 to vector<8x8xf32>
    %c1_i32_88 = arith.constant 1 : i32
    %213 = vector.broadcast %c1_i32_88 : i32 to vector<8x8xi32>
    %214 = arith.cmpi eq, %7, %213 : vector<8x8xi32>
    %215 = vector.extract_strided_slice %211 {offsets = [0, 0], sizes = [8, 8], strides = [1, 1]} : vector<32x8xf32> to vector<8x8xf32>
    %216 = arith.select %214, %215, %212 : vector<8x8xi1>, vector<8x8xf32>
    %c2_i32_89 = arith.constant 2 : i32
    %217 = vector.broadcast %c2_i32_89 : i32 to vector<8x8xi32>
    %218 = arith.cmpi eq, %7, %217 : vector<8x8xi32>
    %219 = vector.extract_strided_slice %211 {offsets = [8, 0], sizes = [8, 8], strides = [1, 1]} : vector<32x8xf32> to vector<8x8xf32>
    %220 = arith.select %218, %219, %216 : vector<8x8xi1>, vector<8x8xf32>
    %c3_i32_90 = arith.constant 3 : i32
    %221 = vector.broadcast %c3_i32_90 : i32 to vector<8x8xi32>
    %222 = arith.cmpi eq, %7, %221 : vector<8x8xi32>
    %223 = vector.extract_strided_slice %211 {offsets = [16, 0], sizes = [8, 8], strides = [1, 1]} : vector<32x8xf32> to vector<8x8xf32>
    %224 = arith.select %222, %223, %220 : vector<8x8xi1>, vector<8x8xf32>
    %c4_i32_91 = arith.constant 4 : i32
    %225 = vector.broadcast %c4_i32_91 : i32 to vector<8x8xi32>
    %226 = arith.cmpi eq, %7, %225 : vector<8x8xi32>
    %227 = vector.extract_strided_slice %211 {offsets = [24, 0], sizes = [8, 8], strides = [1, 1]} : vector<32x8xf32> to vector<8x8xf32>
    %228 = arith.select %226, %227, %224 : vector<8x8xi1>, vector<8x8xf32>
    %cst_92 = arith.constant dense<0xFF800000> : vector<8xf32>
    %229 = vector.multi_reduction <maximumf>, %228, %cst_92 [1] : vector<8x8xf32> to vector<8xf32>
    %230 = vector.shape_cast %229 : vector<8xf32> to vector<8x1xf32>
    %231 = vector.broadcast %230 : vector<8x1xf32> to vector<8x8xf32>
    %232 = arith.subf %228, %231 : vector<8x8xf32>
    %233 = math.exp %232 : vector<8x8xf32>
    %cst_93 = arith.constant dense<0.000000e+00> : vector<8xf32>
    %234 = vector.multi_reduction <add>, %233, %cst_93 [1] : vector<8x8xf32> to vector<8xf32>
    %235 = vector.shape_cast %234 : vector<8xf32> to vector<8x1xf32>
    %236 = tpu.reciprocal %235 {approx = true} : vector<8x1xf32> -> vector<8x1xf32>
    %237 = vector.broadcast %236 : vector<8x1xf32> to vector<8x8xf32>
    %238 = arith.mulf %233, %237 : vector<8x8xf32>
    %cst_94 = arith.constant dense<0.000000e+00> : vector<8x32xf32>
    %239 = tpu.matmul %238, %73, %cst_94 {dimension_numbers = #tpu.dot_dimension_numbers<[1], [0], [0], [1], [0, 0, 1, 1], [], []>} : vector<8x8xf32>, vector<8x32xf32>, vector<8x32xf32> -> vector<8x32xf32>
    %cst_95 = arith.constant dense<0.000000e+00> : vector<10x32xf32>
    %240 = tpu.matmul %25, %239, %cst_95 {dimension_numbers = #tpu.dot_dimension_numbers<[1], [0], [0], [1], [0, 0, 1, 1], [], []>} : vector<10x8xf32>, vector<8x32xf32>, vector<10x32xf32> -> vector<10x32xf32>
    %241 = arith.addf %191, %240 : vector<10x32xf32>
    %c4_96 = arith.constant 4 : index
    %c0_97 = arith.constant 0 : index
    %242 = vector.load %arg8[%c4_96, %c0_97] : memref<8x32xf32, #tpu.memory_space<vmem>>, vector<1x32xf32>
    %c5_98 = arith.constant 5 : index
    %c0_99 = arith.constant 0 : index
    %243 = vector.load %arg8[%c5_98, %c0_99] : memref<8x32xf32, #tpu.memory_space<vmem>>, vector<1x32xf32>
    %cst_100 = arith.constant dense<0.000000e+00> : vector<10xf32>
    %244 = vector.multi_reduction <add>, %241, %cst_100 [1] : vector<10x32xf32> to vector<10xf32>
    %245 = vector.shape_cast %244 : vector<10xf32> to vector<10x1xf32>
    %cst_101 = arith.constant 3.200000e+01 : f32
    %246 = vector.broadcast %cst_101 : f32 to vector<10x1xf32>
    %247 = arith.divf %245, %246 : vector<10x1xf32>
    %248 = vector.broadcast %247 : vector<10x1xf32> to vector<10x32xf32>
    %249 = arith.subf %241, %248 : vector<10x32xf32>
    %250 = arith.mulf %249, %249 : vector<10x32xf32>
    %cst_102 = arith.constant dense<0.000000e+00> : vector<10xf32>
    %251 = vector.multi_reduction <add>, %250, %cst_102 [1] : vector<10x32xf32> to vector<10xf32>
    %252 = vector.shape_cast %251 : vector<10xf32> to vector<10x1xf32>
    %cst_103 = arith.constant 3.200000e+01 : f32
    %253 = vector.broadcast %cst_103 : f32 to vector<10x1xf32>
    %254 = arith.divf %252, %253 : vector<10x1xf32>
    %255 = vector.broadcast %247 : vector<10x1xf32> to vector<10x32xf32>
    %256 = arith.subf %241, %255 : vector<10x32xf32>
    %cst_104 = arith.constant 9.99999974E-6 : f32
    %257 = vector.broadcast %cst_104 : f32 to vector<10x1xf32>
    %258 = arith.addf %254, %257 : vector<10x1xf32>
    %259 = math.rsqrt %258 : vector<10x1xf32>
    %260 = vector.broadcast %259 : vector<10x1xf32> to vector<10x32xf32>
    %261 = arith.mulf %256, %260 : vector<10x32xf32>
    %262 = vector.broadcast %242 : vector<1x32xf32> to vector<10x32xf32>
    %263 = arith.mulf %261, %262 : vector<10x32xf32>
    %264 = vector.broadcast %243 : vector<1x32xf32> to vector<10x32xf32>
    %265 = arith.addf %263, %264 : vector<10x32xf32>
    %c32 = arith.constant 32 : index
    %c0_105 = arith.constant 0 : index
    %266 = vector.load %arg9[%c32, %c0_105] : memref<64x96xf32, #tpu.memory_space<vmem>>, vector<32x96xf32>
    %cst_106 = arith.constant dense<0.000000e+00> : vector<10x96xf32>
    %267 = tpu.matmul %265, %266, %cst_106 {dimension_numbers = #tpu.dot_dimension_numbers<[1], [0], [0], [1], [0, 0, 1, 1], [], []>} : vector<10x32xf32>, vector<32x96xf32>, vector<10x96xf32> -> vector<10x96xf32>
    %cst_107 = arith.constant 0.000000e+00 : f32
    %268 = vector.broadcast %cst_107 : f32 to vector<10x32xf32>
    %269 = vector.extract_strided_slice %267 {offsets = [0, 0], sizes = [10, 16], strides = [1, 1]} : vector<10x96xf32> to vector<10x16xf32>
    %270 = vector.extract_strided_slice %267 {offsets = [0, 32], sizes = [10, 16], strides = [1, 1]} : vector<10x96xf32> to vector<10x16xf32>
    %271 = vector.extract_strided_slice %267 {offsets = [0, 64], sizes = [10, 16], strides = [1, 1]} : vector<10x96xf32> to vector<10x16xf32>
    %272 = tpu.transpose %270, [1, 0] : vector<10x16xf32> -> vector<16x10xf32>
    %cst_108 = arith.constant dense<0.000000e+00> : vector<10x10xf32>
    %273 = tpu.matmul %269, %272, %cst_108 {dimension_numbers = #tpu.dot_dimension_numbers<[1], [0], [0], [1], [0, 0, 1, 1], [], []>} : vector<10x16xf32>, vector<16x10xf32>, vector<10x10xf32> -> vector<10x10xf32>
    %cst_109 = arith.constant 2.500000e-01 : f32
    %274 = vector.broadcast %cst_109 : f32 to vector<10x10xf32>
    %275 = arith.mulf %273, %274 : vector<10x10xf32>
    %cst_110 = arith.constant -1.000000e+30 : f32
    %276 = vector.broadcast %cst_110 : f32 to vector<10x10xf32>
    %277 = arith.select %18, %275, %276 : vector<10x10xi1>, vector<10x10xf32>
    %cst_111 = arith.constant dense<0xFF800000> : vector<10xf32>
    %278 = vector.multi_reduction <maximumf>, %277, %cst_111 [1] : vector<10x10xf32> to vector<10xf32>
    %279 = vector.shape_cast %278 : vector<10xf32> to vector<10x1xf32>
    %280 = vector.broadcast %279 : vector<10x1xf32> to vector<10x10xf32>
    %281 = arith.subf %277, %280 : vector<10x10xf32>
    %282 = math.exp %281 : vector<10x10xf32>
    %cst_112 = arith.constant dense<0.000000e+00> : vector<10xf32>
    %283 = vector.multi_reduction <add>, %282, %cst_112 [1] : vector<10x10xf32> to vector<10xf32>
    %284 = vector.shape_cast %283 : vector<10xf32> to vector<10x1xf32>
    %285 = tpu.reciprocal %284 {approx = true} : vector<10x1xf32> -> vector<10x1xf32>
    %286 = vector.broadcast %285 : vector<10x1xf32> to vector<10x10xf32>
    %287 = arith.mulf %282, %286 : vector<10x10xf32>
    %cst_113 = arith.constant dense<0.000000e+00> : vector<10x16xf32>
    %288 = tpu.matmul %287, %271, %cst_113 {dimension_numbers = #tpu.dot_dimension_numbers<[1], [0], [0], [1], [0, 0, 1, 1], [], []>} : vector<10x10xf32>, vector<10x16xf32>, vector<10x16xf32> -> vector<10x16xf32>
    %c32_114 = arith.constant 32 : index
    %c0_115 = arith.constant 0 : index
    %289 = vector.load %arg10[%c32_114, %c0_115] : memref<64x32xf32, #tpu.memory_space<vmem>>, vector<16x32xf32>
    %cst_116 = arith.constant dense<0.000000e+00> : vector<10x32xf32>
    %290 = tpu.matmul %288, %289, %cst_116 {dimension_numbers = #tpu.dot_dimension_numbers<[1], [0], [0], [1], [0, 0, 1, 1], [], []>} : vector<10x16xf32>, vector<16x32xf32>, vector<10x32xf32> -> vector<10x32xf32>
    %291 = arith.addf %268, %290 : vector<10x32xf32>
    %292 = vector.extract_strided_slice %267 {offsets = [0, 16], sizes = [10, 16], strides = [1, 1]} : vector<10x96xf32> to vector<10x16xf32>
    %293 = vector.extract_strided_slice %267 {offsets = [0, 48], sizes = [10, 16], strides = [1, 1]} : vector<10x96xf32> to vector<10x16xf32>
    %294 = vector.extract_strided_slice %267 {offsets = [0, 80], sizes = [10, 16], strides = [1, 1]} : vector<10x96xf32> to vector<10x16xf32>
    %295 = tpu.transpose %293, [1, 0] : vector<10x16xf32> -> vector<16x10xf32>
    %cst_117 = arith.constant dense<0.000000e+00> : vector<10x10xf32>
    %296 = tpu.matmul %292, %295, %cst_117 {dimension_numbers = #tpu.dot_dimension_numbers<[1], [0], [0], [1], [0, 0, 1, 1], [], []>} : vector<10x16xf32>, vector<16x10xf32>, vector<10x10xf32> -> vector<10x10xf32>
    %cst_118 = arith.constant 2.500000e-01 : f32
    %297 = vector.broadcast %cst_118 : f32 to vector<10x10xf32>
    %298 = arith.mulf %296, %297 : vector<10x10xf32>
    %cst_119 = arith.constant -1.000000e+30 : f32
    %299 = vector.broadcast %cst_119 : f32 to vector<10x10xf32>
    %300 = arith.select %18, %298, %299 : vector<10x10xi1>, vector<10x10xf32>
    %cst_120 = arith.constant dense<0xFF800000> : vector<10xf32>
    %301 = vector.multi_reduction <maximumf>, %300, %cst_120 [1] : vector<10x10xf32> to vector<10xf32>
    %302 = vector.shape_cast %301 : vector<10xf32> to vector<10x1xf32>
    %303 = vector.broadcast %302 : vector<10x1xf32> to vector<10x10xf32>
    %304 = arith.subf %300, %303 : vector<10x10xf32>
    %305 = math.exp %304 : vector<10x10xf32>
    %cst_121 = arith.constant dense<0.000000e+00> : vector<10xf32>
    %306 = vector.multi_reduction <add>, %305, %cst_121 [1] : vector<10x10xf32> to vector<10xf32>
    %307 = vector.shape_cast %306 : vector<10xf32> to vector<10x1xf32>
    %308 = tpu.reciprocal %307 {approx = true} : vector<10x1xf32> -> vector<10x1xf32>
    %309 = vector.broadcast %308 : vector<10x1xf32> to vector<10x10xf32>
    %310 = arith.mulf %305, %309 : vector<10x10xf32>
    %cst_122 = arith.constant dense<0.000000e+00> : vector<10x16xf32>
    %311 = tpu.matmul %310, %294, %cst_122 {dimension_numbers = #tpu.dot_dimension_numbers<[1], [0], [0], [1], [0, 0, 1, 1], [], []>} : vector<10x10xf32>, vector<10x16xf32>, vector<10x16xf32> -> vector<10x16xf32>
    %c48 = arith.constant 48 : index
    %c0_123 = arith.constant 0 : index
    %312 = vector.load %arg10[%c48, %c0_123] : memref<64x32xf32, #tpu.memory_space<vmem>>, vector<16x32xf32>
    %cst_124 = arith.constant dense<0.000000e+00> : vector<10x32xf32>
    %313 = tpu.matmul %311, %312, %cst_124 {dimension_numbers = #tpu.dot_dimension_numbers<[1], [0], [0], [1], [0, 0, 1, 1], [], []>} : vector<10x16xf32>, vector<16x32xf32>, vector<10x32xf32> -> vector<10x32xf32>
    %314 = arith.addf %291, %313 : vector<10x32xf32>
    %315 = arith.addf %241, %314 : vector<10x32xf32>
    %c6_125 = arith.constant 6 : index
    %c0_126 = arith.constant 0 : index
    %316 = vector.load %arg8[%c6_125, %c0_126] : memref<8x32xf32, #tpu.memory_space<vmem>>, vector<1x32xf32>
    %c7_127 = arith.constant 7 : index
    %c0_128 = arith.constant 0 : index
    %317 = vector.load %arg8[%c7_127, %c0_128] : memref<8x32xf32, #tpu.memory_space<vmem>>, vector<1x32xf32>
    %cst_129 = arith.constant dense<0.000000e+00> : vector<10xf32>
    %318 = vector.multi_reduction <add>, %315, %cst_129 [1] : vector<10x32xf32> to vector<10xf32>
    %319 = vector.shape_cast %318 : vector<10xf32> to vector<10x1xf32>
    %cst_130 = arith.constant 3.200000e+01 : f32
    %320 = vector.broadcast %cst_130 : f32 to vector<10x1xf32>
    %321 = arith.divf %319, %320 : vector<10x1xf32>
    %322 = vector.broadcast %321 : vector<10x1xf32> to vector<10x32xf32>
    %323 = arith.subf %315, %322 : vector<10x32xf32>
    %324 = arith.mulf %323, %323 : vector<10x32xf32>
    %cst_131 = arith.constant dense<0.000000e+00> : vector<10xf32>
    %325 = vector.multi_reduction <add>, %324, %cst_131 [1] : vector<10x32xf32> to vector<10xf32>
    %326 = vector.shape_cast %325 : vector<10xf32> to vector<10x1xf32>
    %cst_132 = arith.constant 3.200000e+01 : f32
    %327 = vector.broadcast %cst_132 : f32 to vector<10x1xf32>
    %328 = arith.divf %326, %327 : vector<10x1xf32>
    %329 = vector.broadcast %321 : vector<10x1xf32> to vector<10x32xf32>
    %330 = arith.subf %315, %329 : vector<10x32xf32>
    %cst_133 = arith.constant 9.99999974E-6 : f32
    %331 = vector.broadcast %cst_133 : f32 to vector<10x1xf32>
    %332 = arith.addf %328, %331 : vector<10x1xf32>
    %333 = math.rsqrt %332 : vector<10x1xf32>
    %334 = vector.broadcast %333 : vector<10x1xf32> to vector<10x32xf32>
    %335 = arith.mulf %330, %334 : vector<10x32xf32>
    %336 = vector.broadcast %316 : vector<1x32xf32> to vector<10x32xf32>
    %337 = arith.mulf %335, %336 : vector<10x32xf32>
    %338 = vector.broadcast %317 : vector<1x32xf32> to vector<10x32xf32>
    %339 = arith.addf %337, %338 : vector<10x32xf32>
    %c32_134 = arith.constant 32 : index
    %c0_135 = arith.constant 0 : index
    %340 = vector.load %arg11[%c32_134, %c0_135] : memref<64x128xf32, #tpu.memory_space<vmem>>, vector<32x128xf32>
    %cst_136 = arith.constant dense<0.000000e+00> : vector<10x128xf32>
    %341 = tpu.matmul %339, %340, %cst_136 {dimension_numbers = #tpu.dot_dimension_numbers<[1], [0], [0], [1], [0, 0, 1, 1], [], []>} : vector<10x32xf32>, vector<32x128xf32>, vector<10x128xf32> -> vector<10x128xf32>
    %342 = arith.mulf %341, %341 : vector<10x128xf32>
    %343 = arith.mulf %341, %342 : vector<10x128xf32>
    %cst_137 = arith.constant 4.471500e-02 : f32
    %344 = vector.broadcast %cst_137 : f32 to vector<10x128xf32>
    %345 = arith.mulf %344, %343 : vector<10x128xf32>
    %346 = arith.addf %341, %345 : vector<10x128xf32>
    %cst_138 = arith.constant 0.797884583 : f32
    %347 = vector.broadcast %cst_138 : f32 to vector<10x128xf32>
    %348 = arith.mulf %347, %346 : vector<10x128xf32>
    %349 = math.tanh %348 : vector<10x128xf32>
    %cst_139 = arith.constant 1.000000e+00 : f32
    %350 = vector.broadcast %cst_139 : f32 to vector<10x128xf32>
    %351 = arith.addf %350, %349 : vector<10x128xf32>
    %cst_140 = arith.constant 5.000000e-01 : f32
    %352 = vector.broadcast %cst_140 : f32 to vector<10x128xf32>
    %353 = arith.mulf %352, %351 : vector<10x128xf32>
    %354 = arith.mulf %341, %353 : vector<10x128xf32>
    %c128 = arith.constant 128 : index
    %c0_141 = arith.constant 0 : index
    %355 = vector.load %arg12[%c128, %c0_141] : memref<256x32xf32, #tpu.memory_space<vmem>>, vector<128x32xf32>
    %cst_142 = arith.constant dense<0.000000e+00> : vector<10x32xf32>
    %356 = tpu.matmul %354, %355, %cst_142 {dimension_numbers = #tpu.dot_dimension_numbers<[1], [0], [0], [1], [0, 0, 1, 1], [], []>} : vector<10x128xf32>, vector<128x32xf32>, vector<10x32xf32> -> vector<10x32xf32>
    %357 = arith.addf %315, %356 : vector<10x32xf32>
    %c0_143 = arith.constant 0 : index
    %c0_144 = arith.constant 0 : index
    %358 = vector.load %arg13[%c0_143, %c0_144] : memref<32x32xf32, #tpu.memory_space<vmem>>, vector<32x32xf32>
    %cst_145 = arith.constant dense<0.000000e+00> : vector<10x32xf32>
    %359 = tpu.matmul %357, %358, %cst_145 {dimension_numbers = #tpu.dot_dimension_numbers<[1], [0], [0], [1], [0, 0, 1, 1], [], []>} : vector<10x32xf32>, vector<32x32xf32>, vector<10x32xf32> -> vector<10x32xf32>
    %c0_146 = arith.constant 0 : index
    %c0_147 = arith.constant 0 : index
    %360 = vector.load %arg14[%c0_146, %c0_147] : memref<32x16xf32, #tpu.memory_space<vmem>>, vector<32x16xf32>
    %cst_148 = arith.constant dense<0.000000e+00> : vector<8x16xf32>
    %361 = tpu.matmul %3, %360, %cst_148 {dimension_numbers = #tpu.dot_dimension_numbers<[1], [0], [0], [1], [0, 0, 1, 1], [], []>} : vector<8x32xf32>, vector<32x16xf32>, vector<8x16xf32> -> vector<8x16xf32>
    %cst_149 = arith.constant 5.000000e-01 : f32
    %362 = vector.broadcast %cst_149 : f32 to vector<1x8xf32>
    %363 = arith.cmpf ogt, %11, %362 : vector<1x8xf32>
    %cst_150 = arith.constant 0.000000e+00 : f32
    %364 = vector.broadcast %cst_150 : f32 to vector<10x32xf32>
    %365 = vector.extract_strided_slice %359 {offsets = [0, 0], sizes = [10, 16], strides = [1, 1]} : vector<10x32xf32> to vector<10x16xf32>
    %366 = tpu.transpose %361, [1, 0] : vector<8x16xf32> -> vector<16x8xf32>
    %cst_151 = arith.constant dense<0.000000e+00> : vector<10x8xf32>
    %367 = tpu.matmul %365, %366, %cst_151 {dimension_numbers = #tpu.dot_dimension_numbers<[1], [0], [0], [1], [0, 0, 1, 1], [], []>} : vector<10x16xf32>, vector<16x8xf32>, vector<10x8xf32> -> vector<10x8xf32>
    %cst_152 = arith.constant -1.000000e+30 : f32
    %368 = vector.shape_cast %363 : vector<1x8xi1> to vector<1x8xi1>
    %369 = vector.broadcast %368 : vector<1x8xi1> to vector<10x8xi1>
    %370 = vector.broadcast %cst_152 : f32 to vector<10x8xf32>
    %371 = arith.select %369, %367, %370 : vector<10x8xi1>, vector<10x8xf32>
    %cst_153 = arith.constant dense<0xFF800000> : vector<10xf32>
    %372 = vector.multi_reduction <maximumf>, %371, %cst_153 [1] : vector<10x8xf32> to vector<10xf32>
    %373 = vector.shape_cast %372 : vector<10xf32> to vector<10x1xf32>
    %374 = vector.broadcast %373 : vector<10x1xf32> to vector<10x8xf32>
    %375 = arith.subf %371, %374 : vector<10x8xf32>
    %376 = math.exp %375 : vector<10x8xf32>
    %cst_154 = arith.constant dense<0.000000e+00> : vector<10xf32>
    %377 = vector.multi_reduction <add>, %376, %cst_154 [1] : vector<10x8xf32> to vector<10xf32>
    %378 = vector.shape_cast %377 : vector<10xf32> to vector<10x1xf32>
    %379 = tpu.reciprocal %378 {approx = true} : vector<10x1xf32> -> vector<10x1xf32>
    %380 = vector.broadcast %379 : vector<10x1xf32> to vector<10x8xf32>
    %381 = arith.mulf %376, %380 : vector<10x8xf32>
    %cst_155 = arith.constant dense<0.000000e+00> : vector<10x32xf32>
    %382 = tpu.matmul %381, %3, %cst_155 {dimension_numbers = #tpu.dot_dimension_numbers<[1], [0], [0], [1], [0, 0, 1, 1], [], []>} : vector<10x8xf32>, vector<8x32xf32>, vector<10x32xf32> -> vector<10x32xf32>
    %383 = arith.addf %364, %382 : vector<10x32xf32>
    %384 = vector.extract_strided_slice %359 {offsets = [0, 16], sizes = [10, 16], strides = [1, 1]} : vector<10x32xf32> to vector<10x16xf32>
    %385 = tpu.transpose %361, [1, 0] : vector<8x16xf32> -> vector<16x8xf32>
    %cst_156 = arith.constant dense<0.000000e+00> : vector<10x8xf32>
    %386 = tpu.matmul %384, %385, %cst_156 {dimension_numbers = #tpu.dot_dimension_numbers<[1], [0], [0], [1], [0, 0, 1, 1], [], []>} : vector<10x16xf32>, vector<16x8xf32>, vector<10x8xf32> -> vector<10x8xf32>
    %cst_157 = arith.constant -1.000000e+30 : f32
    %387 = vector.shape_cast %363 : vector<1x8xi1> to vector<1x8xi1>
    %388 = vector.broadcast %387 : vector<1x8xi1> to vector<10x8xi1>
    %389 = vector.broadcast %cst_157 : f32 to vector<10x8xf32>
    %390 = arith.select %388, %386, %389 : vector<10x8xi1>, vector<10x8xf32>
    %cst_158 = arith.constant dense<0xFF800000> : vector<10xf32>
    %391 = vector.multi_reduction <maximumf>, %390, %cst_158 [1] : vector<10x8xf32> to vector<10xf32>
    %392 = vector.shape_cast %391 : vector<10xf32> to vector<10x1xf32>
    %393 = vector.broadcast %392 : vector<10x1xf32> to vector<10x8xf32>
    %394 = arith.subf %390, %393 : vector<10x8xf32>
    %395 = math.exp %394 : vector<10x8xf32>
    %cst_159 = arith.constant dense<0.000000e+00> : vector<10xf32>
    %396 = vector.multi_reduction <add>, %395, %cst_159 [1] : vector<10x8xf32> to vector<10xf32>
    %397 = vector.shape_cast %396 : vector<10xf32> to vector<10x1xf32>
    %398 = tpu.reciprocal %397 {approx = true} : vector<10x1xf32> -> vector<10x1xf32>
    %399 = vector.broadcast %398 : vector<10x1xf32> to vector<10x8xf32>
    %400 = arith.mulf %395, %399 : vector<10x8xf32>
    %cst_160 = arith.constant dense<0.000000e+00> : vector<10x32xf32>
    %401 = tpu.matmul %400, %3, %cst_160 {dimension_numbers = #tpu.dot_dimension_numbers<[1], [0], [0], [1], [0, 0, 1, 1], [], []>} : vector<10x8xf32>, vector<8x32xf32>, vector<10x32xf32> -> vector<10x32xf32>
    %402 = arith.addf %383, %401 : vector<10x32xf32>
    %c0_161 = arith.constant 0 : index
    %c0_162 = arith.constant 0 : index
    %c0_163 = arith.constant 0 : index
    %403 = vector.load %arg15[%c0_161, %c0_162, %c0_163] : memref<1x8x32xf32, #tpu.memory_space<vmem>>, vector<1x8x32xf32>
    %404 = vector.shape_cast %403 : vector<1x8x32xf32> to vector<8x32xf32>
    %405 = vector.shape_cast %239 : vector<8x32xf32> to vector<1x8x32xf32>
    tpu.vector_store %arg15[%c0_161, %c0_162, %c0_163], %405 {strides = array<i32>} : memref<1x8x32xf32, #tpu.memory_space<vmem>>, vector<1x8x32xf32>,
    %c0_164 = arith.constant 0 : index
    %c0_165 = arith.constant 0 : index
    %c0_166 = arith.constant 0 : index
    %406 = vector.load %arg16[%c0_164, %c0_165, %c0_166] : memref<1x10x32xf32, #tpu.memory_space<vmem>>, vector<1x10x32xf32>
    %407 = vector.shape_cast %406 : vector<1x10x32xf32> to vector<10x32xf32>
    %408 = vector.shape_cast %402 : vector<10x32xf32> to vector<1x10x32xf32>
    tpu.vector_store %arg16[%c0_164, %c0_165, %c0_166], %408 {strides = array<i32>} : memref<1x10x32xf32, #tpu.memory_space<vmem>>, vector<1x10x32xf32>,
    return
  }
  func.func @transform_0(%arg0: i32) -> (i32, i32, i32) {
    %c0_i32 = arith.constant 0 : i32
    %c0_i32_0 = arith.constant 0 : i32
    %c0_i32_1 = arith.constant 0 : i32
    return %arg0, %c0_i32, %c0_i32_0 : i32, i32, i32
  }
  func.func @transform_1(%arg0: i32) -> (i32, i32, i32) {
    %c0_i32 = arith.constant 0 : i32
    %c0_i32_0 = arith.constant 0 : i32
    %c0_i32_1 = arith.constant 0 : i32
    return %arg0, %c0_i32, %c0_i32_0 : i32, i32, i32
  }
  func.func @transform_2(%arg0: i32) -> (i32, i32, i32) {
    %c0_i32 = arith.constant 0 : i32
    %c0_i32_0 = arith.constant 0 : i32
    %c0_i32_1 = arith.constant 0 : i32
    return %arg0, %c0_i32, %c0_i32_0 : i32, i32, i32
  }
  func.func @transform_3(%arg0: i32) -> (i32, i32, i32) {
    %c0_i32 = arith.constant 0 : i32
    %c0_i32_0 = arith.constant 0 : i32
    %c0_i32_1 = arith.constant 0 : i32
    return %arg0, %c0_i32, %c0_i32_0 : i32, i32, i32
  }
  func.func @transform_4(%arg0: i32) -> (i32, i32, i32) {
    %c0_i32 = arith.constant 0 : i32
    %c0_i32_0 = arith.constant 0 : i32
    %c0_i32_1 = arith.constant 0 : i32
    return %arg0, %c0_i32, %c0_i32_0 : i32, i32, i32
  }
  func.func @transform_5(%arg0: i32) -> (i32, i32, i32) {
    %c0_i32 = arith.constant 0 : i32
    %c0_i32_0 = arith.constant 0 : i32
    %c0_i32_1 = arith.constant 0 : i32
    return %arg0, %c0_i32, %c0_i32_0 : i32, i32, i32
  }
  func.func @transform_6(%arg0: i32) -> (i32, i32) {
    %c0_i32 = arith.constant 0 : i32
    %c0_i32_0 = arith.constant 0 : i32
    %c0_i32_1 = arith.constant 0 : i32
    return %c0_i32, %c0_i32_0 : i32, i32
  }
  func.func @transform_7(%arg0: i32) -> (i32, i32) {
    %c0_i32 = arith.constant 0 : i32
    %c0_i32_0 = arith.constant 0 : i32
    %c0_i32_1 = arith.constant 0 : i32
    return %c0_i32, %c0_i32_0 : i32, i32
  }
  func.func @transform_8(%arg0: i32) -> (i32, i32) {
    %c0_i32 = arith.constant 0 : i32
    %c0_i32_0 = arith.constant 0 : i32
    %c0_i32_1 = arith.constant 0 : i32
    return %c0_i32, %c0_i32_0 : i32, i32
  }
  func.func @transform_9(%arg0: i32) -> (i32, i32) {
    %c0_i32 = arith.constant 0 : i32
    %c0_i32_0 = arith.constant 0 : i32
    %c0_i32_1 = arith.constant 0 : i32
    return %c0_i32, %c0_i32_0 : i32, i32
  }
  func.func @transform_10(%arg0: i32) -> (i32, i32) {
    %c0_i32 = arith.constant 0 : i32
    %c0_i32_0 = arith.constant 0 : i32
    %c0_i32_1 = arith.constant 0 : i32
    return %c0_i32, %c0_i32_0 : i32, i32
  }
  func.func @transform_11(%arg0: i32) -> (i32, i32) {
    %c0_i32 = arith.constant 0 : i32
    %c0_i32_0 = arith.constant 0 : i32
    %c0_i32_1 = arith.constant 0 : i32
    return %c0_i32, %c0_i32_0 : i32, i32
  }
  func.func @transform_12(%arg0: i32) -> (i32, i32) {
    %c0_i32 = arith.constant 0 : i32
    %c0_i32_0 = arith.constant 0 : i32
    %c0_i32_1 = arith.constant 0 : i32
    return %c0_i32, %c0_i32_0 : i32, i32
  }
  func.func @transform_13(%arg0: i32) -> (i32, i32) {
    %c0_i32 = arith.constant 0 : i32
    %c0_i32_0 = arith.constant 0 : i32
    %c0_i32_1 = arith.constant 0 : i32
    return %c0_i32, %c0_i32_0 : i32, i32
  }
  func.func @transform_14(%arg0: i32) -> (i32, i32, i32) {
    %c0_i32 = arith.constant 0 : i32
    %c0_i32_0 = arith.constant 0 : i32
    %c0_i32_1 = arith.constant 0 : i32
    return %arg0, %c0_i32, %c0_i32_0 : i32, i32, i32
  }
  func.func @transform_15(%arg0: i32) -> (i32, i32, i32) {
    %c0_i32 = arith.constant 0 : i32
    %c0_i32_0 = arith.constant 0 : i32
    %c0_i32_1 = arith.constant 0 : i32
    return %arg0, %c0_i32, %c0_i32_0 : i32, i32, i32
  }
}

</mosaic_0001>

<llo_original>
// kernel: graphformer_forward.1
$region0: #{graphformer_forward.1}
  #allocation0 [shape = 'u32[]', space=smem, size = 0x4, offset = 0x4, fixed_abs, tag = 'smem constant byte address 0x4 - core index']
  #allocation1 [shape = 'u32[144,128]{1,0:T(1,128)}', space=vmem, size = 0x12000, scoped, tag = 'internal scratch']
  %s0 = inlined_call_operand.vmem [shape: f32[2,10,32], index: 0, kind: input, shape index: {}]
  %s1 = inlined_call_operand.vmem [shape: f32[2,8,32], index: 1, kind: input, shape index: {}]
  %s2 = inlined_call_operand.vmem [shape: f32[2,8,32], index: 2, kind: input, shape index: {}]
  %s3 = inlined_call_operand.vmem [shape: s32[2,8,8], index: 3, kind: input, shape index: {}]
  %s4 = inlined_call_operand.vmem [shape: f32[2,1,10], index: 4, kind: input, shape index: {}]
  %s5 = inlined_call_operand.vmem [shape: f32[2,1,8], index: 5, kind: input, shape index: {}]
  %s6 = inlined_call_operand.vmem [shape: f32[8,32], index: 6, kind: input, shape index: {}]
  %s7 = inlined_call_operand.vmem [shape: f32[8,32], index: 7, kind: input, shape index: {}]
  %s8 = inlined_call_operand.vmem [shape: f32[64,96], index: 8, kind: input, shape index: {}]
  %s9 = inlined_call_operand.vmem [shape: f32[64,32], index: 9, kind: input, shape index: {}]
  %s10 = inlined_call_operand.vmem [shape: f32[64,128], index: 10, kind: input, shape index: {}]
  %s11 = inlined_call_operand.vmem [shape: f32[256,32], index: 11, kind: input, shape index: {}]
  %s12 = inlined_call_operand.vmem [shape: f32[32,32], index: 12, kind: input, shape index: {}]
  %s13 = inlined_call_operand.vmem [shape: f32[32,16], index: 13, kind: input, shape index: {}]
  %s14 = inlined_call_operand.hbm [shape: f32[2,8,32], index: 14, kind: output, shape index: {0}]
  %s15 = inlined_call_operand.vmem [shape: f32[2,10,32], index: 15, kind: output, shape index: {1}]
  %16 = xla_tuple %s14, %s15
  %s17 = sld [smem:[#allocation0]]
  $region97: #{graphformer_forward.1} parent=0
    _
  %s19 = ssub.s32 1, %s17
  %s20 = scalar_select 0, %s19, %s17
  $region1: #{graphformer_forward.1} parent=0
    #allocation2 [shape = 'u8[8192]{0}', space=vmem, size = 0x2000, scoped, tag = 'output window, operand 0']
    #allocation3 [shape = 's32[2]{0}', space=sflag, size = 0x8, scoped, tag = 'scoped memory for graphformer_forward.1']
    %21 = vsyncpa [#allocation3], 0
    %s22 = scalar_lea.sflag [#allocation3], 1
    %23 = vsyncpa %s22, 0
    loop: start=0, step=1, limit=4
    $region2: #{graphformer_forward.1} parent=1 // loop_pre_header
      _
    $region3: #{graphformer_forward.1} parent=1 // loop_header
      %s25 = sphi 0, %s29
      %p26 = scmp.ge.s32.totalorder %s25, 4
      %s35 = sphi 0, %s37
      %s38 = sphi 0, %s35
      %s39 = sphi 0, %s38
      %s55 = sphi 0, %s39
      %s61 = sphi 0, %s63
      %s64 = sphi 0, %s61
      %s65 = sphi 0, %s64
      %s81 = sphi 0, %s65
      %s87 = sphi 0, %s89
      %s90 = sphi 0, %s87
      %s91 = sphi 0, %s90
      %s107 = sphi 0, %s91
      %s113 = sphi 0, %s115
      %s116 = sphi 0, %s113
      %s117 = sphi 0, %s116
      %s133 = sphi 0, %s117
      %s139 = sphi 0, %s141
      %s142 = sphi 0, %s139
      %s143 = sphi 0, %s142
      %s159 = sphi 0, %s143
      %s165 = sphi 0, %s167
      %s168 = sphi 0, %s165
      %s169 = sphi 0, %s168
      %s185 = sphi 0, %s169
      %s189 = sphi 0, %s189
      %s191 = sphi 0, %s189
      %s192 = sphi 0, %s191
      %s206 = sphi 0, %s192
      %s210 = sphi 0, %s210
      %s212 = sphi 0, %s210
      %s213 = sphi 0, %s212
      %s227 = sphi 0, %s213
      %s231 = sphi 0, %s231
      %s233 = sphi 0, %s231
      %s234 = sphi 0, %s233
      %s248 = sphi 0, %s234
      %s252 = sphi 0, %s252
      %s254 = sphi 0, %s252
      %s255 = sphi 0, %s254
      %s269 = sphi 0, %s255
      %s273 = sphi 0, %s273
      %s275 = sphi 0, %s273
      %s276 = sphi 0, %s275
      %s290 = sphi 0, %s276
      %s294 = sphi 0, %s294
      %s296 = sphi 0, %s294
      %s297 = sphi 0, %s296
      %s311 = sphi 0, %s297
      %s315 = sphi 0, %s315
      %s317 = sphi 0, %s315
      %s318 = sphi 0, %s317
      %s332 = sphi 0, %s318
      %s336 = sphi 0, %s336
      %s338 = sphi 0, %s336
      %s339 = sphi 0, %s338
      %s353 = sphi 0, %s339
      %s359 = sphi 0, %s361
      %s362 = sphi 0, %s359
      %s363 = sphi 0, %s362
      %s379 = sphi 0, %s363
      %s385 = sphi 0, %s387
      %s388 = sphi 0, %s385
      %s389 = sphi 0, %s388
      %s405 = sphi 0, %s389
    $region4: #{graphformer_forward.1} parent=1 // loop_header_branch
      %28 = sbr.rel (%p26) target = $region8
    $region5: #{graphformer_forward.1} parent=1 // loop_body
      %s30 = ssub.s32 %s25, 1
      %s31 = ssub.s32 %s25, 2
      %s32 = sadd.s32 %s25, 1
      %s33 = ssub.s32 %s25, %s32
      %p34 = scmp.eq.s32.totalorder %s33, 0
      %s36 = sadd.s32 %s35, 1
      %s37 = scalar_select %p34, %s35, %s36
      %p40 = pneg %p34
      %p41 = scmp.eq.s32.totalorder %s25, 1
      %p42 = por %p40, %p41
      %p43 = scmp.ne.s32.totalorder %s35, %s38
      %p44 = scmp.eq.s32.totalorder %s25, 0
      %p45 = por %p43, %p44
      %p46 = scmp.ne.s32.totalorder %s35, %s38
      %p47 = scmp.eq.s32.totalorder %s30, 1
      %p48 = por %p46, %p47
      %p49 = scmp.ne.s32.totalorder %s38, %s39
      %p50 = scmp.eq.s32.totalorder %s30, 0
      %p51 = por %p49, %p50
      %p52 = scmp.ne.s32.totalorder %s38, %s39
      %p53 = scmp.eq.s32.totalorder %s31, 1
      %p54 = por %p52, %p53
      %p56 = scmp.ne.s32.totalorder %s39, %s55
      %p57 = scmp.eq.s32.totalorder %s31, 0
      %p58 = por %p56, %p57
      %s59 = ssub.s32 %s25, %s32
      %p60 = scmp.eq.s32.totalorder %s59, 0
      %s62 = sadd.s32 %s61, 1
      %s63 = scalar_select %p60, %s61, %s62
      %p66 = pneg %p60
      %p67 = scmp.eq.s32.totalorder %s25, 1
      %p68 = por %p66, %p67
      %p69 = scmp.ne.s32.totalorder %s61, %s64
      %p70 = scmp.eq.s32.totalorder %s25, 0
      %p71 = por %p69, %p70
      %p72 = scmp.ne.s32.totalorder %s61, %s64
      %p73 = scmp.eq.s32.totalorder %s30, 1
      %p74 = por %p72, %p73
      %p75 = scmp.ne.s32.totalorder %s64, %s65
      %p76 = scmp.eq.s32.totalorder %s30, 0
      %p77 = por %p75, %p76
      %p78 = scmp.ne.s32.totalorder %s64, %s65
      %p79 = scmp.eq.s32.totalorder %s31, 1
      %p80 = por %p78, %p79
      %p82 = scmp.ne.s32.totalorder %s65, %s81
      %p83 = scmp.eq.s32.totalorder %s31, 0
      %p84 = por %p82, %p83
      %s85 = ssub.s32 %s25, %s32
      %p86 = scmp.eq.s32.totalorder %s85, 0
      %s88 = sadd.s32 %s87, 1
      %s89 = scalar_select %p86, %s87, %s88
      %p92 = pneg %p86
      %p93 = scmp.eq.s32.totalorder %s25, 1
      %p94 = por %p92, %p93
      %p95 = scmp.ne.s32.totalorder %s87, %s90
      %p96 = scmp.eq.s32.totalorder %s25, 0
      %p97 = por %p95, %p96
      %p98 = scmp.ne.s32.totalorder %s87, %s90
      %p99 = scmp.eq.s32.totalorder %s30, 1
      %p100 = por %p98, %p99
      %p101 = scmp.ne.s32.totalorder %s90, %s91
      %p102 = scmp.eq.s32.totalorder %s30, 0
      %p103 = por %p101, %p102
      %p104 = scmp.ne.s32.totalorder %s90, %s91
      %p105 = scmp.eq.s32.totalorder %s31, 1
      %p106 = por %p104, %p105
      %p108 = scmp.ne.s32.totalorder %s91, %s107
      %p109 = scmp.eq.s32.totalorder %s31, 0
      %p110 = por %p108, %p109
      %s111 = ssub.s32 %s25, %s32
      %p112 = scmp.eq.s32.totalorder %s111, 0
      %s114 = sadd.s32 %s113, 1
      %s115 = scalar_select %p112, %s113, %s114
      %p118 = pneg %p112
      %p119 = scmp.eq.s32.totalorder %s25, 1
      %p120 = por %p118, %p119
      %p121 = scmp.ne.s32.totalorder %s113, %s116
      %p122 = scmp.eq.s32.totalorder %s25, 0
      %p123 = por %p121, %p122
      %p124 = scmp.ne.s32.totalorder %s113, %s116
      %p125 = scmp.eq.s32.totalorder %s30, 1
      %p126 = por %p124, %p125
      %p127 = scmp.ne.s32.totalorder %s116, %s117
      %p128 = scmp.eq.s32.totalorder %s30, 0
      %p129 = por %p127, %p128
      %p130 = scmp.ne.s32.totalorder %s116, %s117
      %p131 = scmp.eq.s32.totalorder %s31, 1
      %p132 = por %p130, %p131
      %p134 = scmp.ne.s32.totalorder %s117, %s133
      %p135 = scmp.eq.s32.totalorder %s31, 0
      %p136 = por %p134, %p135
      %s137 = ssub.s32 %s25, %s32
      %p138 = scmp.eq.s32.totalorder %s137, 0
      %s140 = sadd.s32 %s139, 1
      %s141 = scalar_select %p138, %s139, %s140
      %p144 = pneg %p138
      %p145 = scmp.eq.s32.totalorder %s25, 1
      %p146 = por %p144, %p145
      %p147 = scmp.ne.s32.totalorder %s139, %s142
      %p148 = scmp.eq.s32.totalorder %s25, 0
      %p149 = por %p147, %p148
      %p150 = scmp.ne.s32.totalorder %s139, %s142
      %p151 = scmp.eq.s32.totalorder %s30, 1
      %p152 = por %p150, %p151
      %p153 = scmp.ne.s32.totalorder %s142, %s143
      %p154 = scmp.eq.s32.totalorder %s30, 0
      %p155 = por %p153, %p154
      %p156 = scmp.ne.s32.totalorder %s142, %s143
      %p157 = scmp.eq.s32.totalorder %s31, 1
      %p158 = por %p156, %p157
      %p160 = scmp.ne.s32.totalorder %s143, %s159
      %p161 = scmp.eq.s32.totalorder %s31, 0
      %p162 = por %p160, %p161
      %s163 = ssub.s32 %s25, %s32
      %p164 = scmp.eq.s32.totalorder %s163, 0
      %s166 = sadd.s32 %s165, 1
      %s167 = scalar_select %p164, %s165, %s166
      %p170 = pneg %p164
      %p171 = scmp.eq.s32.totalorder %s25, 1
      %p172 = por %p170, %p171
      %p173 = scmp.ne.s32.totalorder %s165, %s168
      %p174 = scmp.eq.s32.totalorder %s25, 0
      %p175 = por %p173, %p174
      %p176 = scmp.ne.s32.totalorder %s165, %s168
      %p177 = scmp.eq.s32.totalorder %s30, 1
      %p178 = por %p176, %p177
      %p179 = scmp.ne.s32.totalorder %s168, %s169
      %p180 = scmp.eq.s32.totalorder %s30, 0
      %p181 = por %p179, %p180
      %p182 = scmp.ne.s32.totalorder %s168, %s169
      %p183 = scmp.eq.s32.totalorder %s31, 1
      %p184 = por %p182, %p183
      %p186 = scmp.ne.s32.totalorder %s169, %s185
      %p187 = scmp.eq.s32.totalorder %s31, 0
      %p188 = por %p186, %p187
      %s190 = sadd.s32 %s189, 1
      %p193 = scmp.eq.s32.totalorder %s25, 1
      %p194 = scmp.ne.s32.totalorder %s189, %s191
      %p195 = scmp.eq.s32.totalorder %s25, 0
      %p196 = por %p194, %p195
      %p197 = scmp.ne.s32.totalorder %s189, %s191
      %p198 = scmp.eq.s32.totalorder %s30, 1
      %p199 = por %p197, %p198
      %p200 = scmp.ne.s32.totalorder %s191, %s192
      %p201 = scmp.eq.s32.totalorder %s30, 0
      %p202 = por %p200, %p201
      %p203 = scmp.ne.s32.totalorder %s191, %s192
      %p204 = scmp.eq.s32.totalorder %s31, 1
      %p205 = por %p203, %p204
      %p207 = scmp.ne.s32.totalorder %s192, %s206
      %p208 = scmp.eq.s32.totalorder %s31, 0
      %p209 = por %p207, %p208
      %s211 = sadd.s32 %s210, 1
      %p214 = scmp.eq.s32.totalorder %s25, 1
      %p215 = scmp.ne.s32.totalorder %s210, %s212
      %p216 = scmp.eq.s32.totalorder %s25, 0
      %p217 = por %p215, %p216
      %p218 = scmp.ne.s32.totalorder %s210, %s212
      %p219 = scmp.eq.s32.totalorder %s30, 1
      %p220 = por %p218, %p219
      %p221 = scmp.ne.s32.totalorder %s212, %s213
      %p222 = scmp.eq.s32.totalorder %s30, 0
      %p223 = por %p221, %p222
      %p224 = scmp.ne.s32.totalorder %s212, %s213
      %p225 = scmp.eq.s32.totalorder %s31, 1
      %p226 = por %p224, %p225
      %p228 = scmp.ne.s32.totalorder %s213, %s227
      %p229 = scmp.eq.s32.totalorder %s31, 0
      %p230 = por %p228, %p229
      %s232 = sadd.s32 %s231, 1
      %p235 = scmp.eq.s32.totalorder %s25, 1
      %p236 = scmp.ne.s32.totalorder %s231, %s233
      %p237 = scmp.eq.s32.totalorder %s25, 0
      %p238 = por %p236, %p237
      %p239 = scmp.ne.s32.totalorder %s231, %s233
      %p240 = scmp.eq.s32.totalorder %s30, 1
      %p241 = por %p239, %p240
      %p242 = scmp.ne.s32.totalorder %s233, %s234
      %p243 = scmp.eq.s32.totalorder %s30, 0
      %p244 = por %p242, %p243
      %p245 = scmp.ne.s32.totalorder %s233, %s234
      %p246 = scmp.eq.s32.totalorder %s31, 1
      %p247 = por %p245, %p246
      %p249 = scmp.ne.s32.totalorder %s234, %s248
      %p250 = scmp.eq.s32.totalorder %s31, 0
      %p251 = por %p249, %p250
      %s253 = sadd.s32 %s252, 1
      %p256 = scmp.eq.s32.totalorder %s25, 1
      %p257 = scmp.ne.s32.totalorder %s252, %s254
      %p258 = scmp.eq.s32.totalorder %s25, 0
      %p259 = por %p257, %p258
      %p260 = scmp.ne.s32.totalorder %s252, %s254
      %p261 = scmp.eq.s32.totalorder %s30, 1
      %p262 = por %p260, %p261
      %p263 = scmp.ne.s32.totalorder %s254, %s255
      %p264 = scmp.eq.s32.totalorder %s30, 0
      %p265 = por %p263, %p264
      %p266 = scmp.ne.s32.totalorder %s254, %s255
      %p267 = scmp.eq.s32.totalorder %s31, 1
      %p268 = por %p266, %p267
      %p270 = scmp.ne.s32.totalorder %s255, %s269
      %p271 = scmp.eq.s32.totalorder %s31, 0
      %p272 = por %p270, %p271
      %s274 = sadd.s32 %s273, 1
      %p277 = scmp.eq.s32.totalorder %s25, 1
      %p278 = scmp.ne.s32.totalorder %s273, %s275
      %p279 = scmp.eq.s32.totalorder %s25, 0
      %p280 = por %p278, %p279
      %p281 = scmp.ne.s32.totalorder %s273, %s275
      %p282 = scmp.eq.s32.totalorder %s30, 1
      %p283 = por %p281, %p282
      %p284 = scmp.ne.s32.totalorder %s275, %s276
      %p285 = scmp.eq.s32.totalorder %s30, 0
      %p286 = por %p284, %p285
      %p287 = scmp.ne.s32.totalorder %s275, %s276
      %p288 = scmp.eq.s32.totalorder %s31, 1
      %p289 = por %p287, %p288
      %p291 = scmp.ne.s32.totalorder %s276, %s290
      %p292 = scmp.eq.s32.totalorder %s31, 0
      %p293 = por %p291, %p292
      %s295 = sadd.s32 %s294, 1
      %p298 = scmp.eq.s32.totalorder %s25, 1
      %p299 = scmp.ne.s32.totalorder %s294, %s296
      %p300 = scmp.eq.s32.totalorder %s25, 0
      %p301 = por %p299, %p300
      %p302 = scmp.ne.s32.totalorder %s294, %s296
      %p303 = scmp.eq.s32.totalorder %s30, 1
      %p304 = por %p302, %p303
      %p305 = scmp.ne.s32.totalorder %s296, %s297
      %p306 = scmp.eq.s32.totalorder %s30, 0
      %p307 = por %p305, %p306
      %p308 = scmp.ne.s32.totalorder %s296, %s297
      %p309 = scmp.eq.s32.totalorder %s31, 1
      %p310 = por %p308, %p309
      %p312 = scmp.ne.s32.totalorder %s297, %s311
      %p313 = scmp.eq.s32.totalorder %s31, 0
      %p314 = por %p312, %p313
      %s316 = sadd.s32 %s315, 1
      %p319 = scmp.eq.s32.totalorder %s25, 1
      %p320 = scmp.ne.s32.totalorder %s315, %s317
      %p321 = scmp.eq.s32.totalorder %s25, 0
      %p322 = por %p320, %p321
      %p323 = scmp.ne.s32.totalorder %s315, %s317
      %p324 = scmp.eq.s32.totalorder %s30, 1
      %p325 = por %p323, %p324
      %p326 = scmp.ne.s32.totalorder %s317, %s318
      %p327 = scmp.eq.s32.totalorder %s30, 0
      %p328 = por %p326, %p327
      %p329 = scmp.ne.s32.totalorder %s317, %s318
      %p330 = scmp.eq.s32.totalorder %s31, 1
      %p331 = por %p329, %p330
      %p333 = scmp.ne.s32.totalorder %s318, %s332
      %p334 = scmp.eq.s32.totalorder %s31, 0
      %p335 = por %p333, %p334
      %s337 = sadd.s32 %s336, 1
      %p340 = scmp.eq.s32.totalorder %s25, 1
      %p341 = scmp.ne.s32.totalorder %s336, %s338
      %p342 = scmp.eq.s32.totalorder %s25, 0
      %p343 = por %p341, %p342
      %p344 = scmp.ne.s32.totalorder %s336, %s338
      %p345 = scmp.eq.s32.totalorder %s30, 1
      %p346 = por %p344, %p345
      %p347 = scmp.ne.s32.totalorder %s338, %s339
      %p348 = scmp.eq.s32.totalorder %s30, 0
      %p349 = por %p347, %p348
      %p350 = scmp.ne.s32.totalorder %s338, %s339
      %p351 = scmp.eq.s32.totalorder %s31, 1
      %p352 = por %p350, %p351
      %p354 = scmp.ne.s32.totalorder %s339, %s353
      %p355 = scmp.eq.s32.totalorder %s31, 0
      %p356 = por %p354, %p355
      %s357 = ssub.s32 %s25, %s32
      %p358 = scmp.eq.s32.totalorder %s357, 0
      %s360 = sadd.s32 %s359, 1
      %s361 = scalar_select %p358, %s359, %s360
      %p364 = pneg %p358
      %p365 = scmp.eq.s32.totalorder %s25, 1
      %p366 = por %p364, %p365
      %p367 = scmp.ne.s32.totalorder %s359, %s362
      %p368 = scmp.eq.s32.totalorder %s25, 0
      %p369 = por %p367, %p368
      %p370 = scmp.ne.s32.totalorder %s359, %s362
      %p371 = scmp.eq.s32.totalorder %s30, 1
      %p372 = por %p370, %p371
      %p373 = scmp.ne.s32.totalorder %s362, %s363
      %p374 = scmp.eq.s32.totalorder %s30, 0
      %p375 = por %p373, %p374
      %p376 = scmp.ne.s32.totalorder %s362, %s363
      %p377 = scmp.eq.s32.totalorder %s31, 1
      %p378 = por %p376, %p377
      %p380 = scmp.ne.s32.totalorder %s363, %s379
      %p381 = scmp.eq.s32.totalorder %s31, 0
      %p382 = por %p380, %p381
      %s383 = ssub.s32 %s25, %s32
      %p384 = scmp.eq.s32.totalorder %s383, 0
      %s386 = sadd.s32 %s385, 1
      %s387 = scalar_select %p384, %s385, %s386
      %p390 = pneg %p384
      %p391 = scmp.eq.s32.totalorder %s25, 1
      %p392 = por %p390, %p391
      %p393 = scmp.ne.s32.totalorder %s385, %s388
      %p394 = scmp.eq.s32.totalorder %s25, 0
      %p395 = por %p393, %p394
      %p396 = scmp.ne.s32.totalorder %s385, %s388
      %p397 = scmp.eq.s32.totalorder %s30, 1
      %p398 = por %p396, %p397
      %p399 = scmp.ne.s32.totalorder %s388, %s389
      %p400 = scmp.eq.s32.totalorder %s30, 0
      %p401 = por %p399, %p400
      %p402 = scmp.ne.s32.totalorder %s388, %s389
      %p403 = scmp.eq.s32.totalorder %s31, 1
      %p404 = por %p402, %p403
      %p406 = scmp.ne.s32.totalorder %s389, %s405
      %p407 = scmp.eq.s32.totalorder %s31, 0
      %p408 = por %p406, %p407
      %p409 = scmp.le.s32.totalorder 1, %s25
      %p410 = scmp.lt.s32.totalorder %s25, 3
      %p411 = pnand %p409, %p410
      %p412 = pneg %p411
      // Predicated region
      $region9: #{graphformer_forward.1} parent=5 // pred_check
        _
      $region10: #{graphformer_forward.1} parent=5 // pred_check_branch
        %414 = sbr.rel (%p411) target = $region12
      $region11: #{graphformer_forward.1} parent=5 // pred_region
        %s415 = ssub.s32 %s25, 1
        // Predicated region
        $region13: #{graphformer_forward.1} parent=11 // pred_check
          %p416 = pneg %p202
        $region14: #{graphformer_forward.1} parent=11 // pred_check_branch
          %418 = sbr.rel (%p416) target = $region16
        $region15: #{graphformer_forward.1} parent=11 // pred_region
          _
        $region16: #{graphformer_forward.1} parent=11 // pred_fallthru
          _
        // Predicated region
        $region17: #{graphformer_forward.1} parent=11 // pred_check
          %p419 = pneg %p223
        $region18: #{graphformer_forward.1} parent=11 // pred_check_branch
          %421 = sbr.rel (%p419) target = $region20
        $region19: #{graphformer_forward.1} parent=11 // pred_region
          _
        $region20: #{graphformer_forward.1} parent=11 // pred_fallthru
          _
        // Predicated region
        $region21: #{graphformer_forward.1} parent=11 // pred_check
          %p422 = pneg %p244
        $region22: #{graphformer_forward.1} parent=11 // pred_check_branch
          %424 = sbr.rel (%p422) target = $region24
        $region23: #{graphformer_forward.1} parent=11 // pred_region
          _
        $region24: #{graphformer_forward.1} parent=11 // pred_fallthru
          _
        // Predicated region
        $region25: #{graphformer_forward.1} parent=11 // pred_check
          %p425 = pneg %p265
        $region26: #{graphformer_forward.1} parent=11 // pred_check_branch
          %427 = sbr.rel (%p425) target = $region28
        $region27: #{graphformer_forward.1} parent=11 // pred_region
          _
        $region28: #{graphformer_forward.1} parent=11 // pred_fallthru
          _
        // Predicated region
        $region29: #{graphformer_forward.1} parent=11 // pred_check
          %p428 = pneg %p286
        $region30: #{graphformer_forward.1} parent=11 // pred_check_branch
          %430 = sbr.rel (%p428) target = $region32
        $region31: #{graphformer_forward.1} parent=11 // pred_region
          _
        $region32: #{graphformer_forward.1} parent=11 // pred_fallthru
          _
        // Predicated region
        $region33: #{graphformer_forward.1} parent=11 // pred_check
          %p431 = pneg %p307
        $region34: #{graphformer_forward.1} parent=11 // pred_check_branch
          %433 = sbr.rel (%p431) target = $region36
        $region35: #{graphformer_forward.1} parent=11 // pred_region
          _
        $region36: #{graphformer_forward.1} parent=11 // pred_fallthru
          _
        // Predicated region
        $region37: #{graphformer_forward.1} parent=11 // pred_check
          %p434 = pneg %p328
        $region38: #{graphformer_forward.1} parent=11 // pred_check_branch
          %436 = sbr.rel (%p434) target = $region40
        $region39: #{graphformer_forward.1} parent=11 // pred_region
          _
        $region40: #{graphformer_forward.1} parent=11 // pred_fallthru
          _
        // Predicated region
        $region41: #{graphformer_forward.1} parent=11 // pred_check
          %p437 = pneg %p349
        $region42: #{graphformer_forward.1} parent=11 // pred_check_branch
          %439 = sbr.rel (%p437) target = $region44
        $region43: #{graphformer_forward.1} parent=11 // pred_region
          _
        $region44: #{graphformer_forward.1} parent=11 // pred_fallthru
          _
      $region12: #{graphformer_forward.1} parent=5 // pred_fallthru
        _
      %p440 = scmp.lt.s32.totalorder %s25, 2
      // Predicated region
      $region45: #{graphformer_forward.1} parent=5 // pred_check
        %p441 = pneg %p440
      $region46: #{graphformer_forward.1} parent=5 // pred_check_branch
        %443 = sbr.rel (%p441) target = $region48
      $region47: #{graphformer_forward.1} parent=5 // pred_region
        // Predicated region
        $region49: #{graphformer_forward.1} parent=47 // pred_check
          %p444 = pneg %p45
        $region50: #{graphformer_forward.1} parent=47 // pred_check_branch
          %446 = sbr.rel (%p444) target = $region52
        $region51: #{graphformer_forward.1} parent=47 // pred_region
          %p447 = scmp.lt.s32.totalorder %s25, 1
          %s448 = scalar_select %p447, %s25, 1
          %s449 = smul.addr %s448, 2
          %s450 = smul.addr %s449, 8
          %s451 = scalar_lea.vmem %s0, %s450
        $region52: #{graphformer_forward.1} parent=47 // pred_fallthru
          _
        // Predicated region
        $region53: #{graphformer_forward.1} parent=47 // pred_check
          %p452 = pneg %p71
        $region54: #{graphformer_forward.1} parent=47 // pred_check_branch
          %454 = sbr.rel (%p452) target = $region56
        $region55: #{graphformer_forward.1} parent=47 // pred_region
          %p455 = scmp.lt.s32.totalorder %s25, 1
          %s456 = scalar_select %p455, %s25, 1
          %s457 = smul.addr %s456, 8
          %s458 = scalar_lea.vmem %s1, %s457
        $region56: #{graphformer_forward.1} parent=47 // pred_fallthru
          _
        // Predicated region
        $region57: #{graphformer_forward.1} parent=47 // pred_check
          %p459 = pneg %p97
        $region58: #{graphformer_forward.1} parent=47 // pred_check_branch
          %461 = sbr.rel (%p459) target = $region60
        $region59: #{graphformer_forward.1} parent=47 // pred_region
          %p462 = scmp.lt.s32.totalorder %s25, 1
          %s463 = scalar_select %p462, %s25, 1
          %s464 = smul.addr %s463, 8
          %s465 = scalar_lea.vmem %s2, %s464
        $region60: #{graphformer_forward.1} parent=47 // pred_fallthru
          _
        // Predicated region
        $region61: #{graphformer_forward.1} parent=47 // pred_check
          %p466 = pneg %p123
        $region62: #{graphformer_forward.1} parent=47 // pred_check_branch
          %468 = sbr.rel (%p466) target = $region64
        $region63: #{graphformer_forward.1} parent=47 // pred_region
          %p469 = scmp.lt.s32.totalorder %s25, 1
          %s470 = scalar_select %p469, %s25, 1
          %s471 = smul.addr %s470, 8
          %s472 = scalar_lea.vmem %s3, %s471
        $region64: #{graphformer_forward.1} parent=47 // pred_fallthru
          _
        // Predicated region
        $region65: #{graphformer_forward.1} parent=47 // pred_check
          %p473 = pneg %p149
        $region66: #{graphformer_forward.1} parent=47 // pred_check_branch
          %475 = sbr.rel (%p473) target = $region68
        $region67: #{graphformer_forward.1} parent=47 // pred_region
          %p476 = scmp.lt.s32.totalorder %s25, 1
          %s477 = scalar_select %p476, %s25, 1
          %s478 = scalar_lea.vmem %s4, %s477
        $region68: #{graphformer_forward.1} parent=47 // pred_fallthru
          _
        // Predicated region
        $region69: #{graphformer_forward.1} parent=47 // pred_check
          %p479 = pneg %p175
        $region70: #{graphformer_forward.1} parent=47 // pred_check_branch
          %481 = sbr.rel (%p479) target = $region72
        $region71: #{graphformer_forward.1} parent=47 // pred_region
          %p482 = scmp.lt.s32.totalorder %s25, 1
          %s483 = scalar_select %p482, %s25, 1
          %s484 = scalar_lea.vmem %s5, %s483
        $region72: #{graphformer_forward.1} parent=47 // pred_fallthru
          _
      $region48: #{graphformer_forward.1} parent=5 // pred_fallthru
        _
      %p485 = scmp.le.s32.totalorder 1, %s25
      %p486 = scmp.lt.s32.totalorder %s25, 3
      %p487 = pnand %p485, %p486
      %p488 = pneg %p487
      // Predicated region
      $region73: #{graphformer_forward.1} parent=5 // pred_check
        _
      $region74: #{graphformer_forward.1} parent=5 // pred_check_branch
        %490 = sbr.rel (%p487) target = $region76
      $region75: #{graphformer_forward.1} parent=5 // pred_region
        %s491 = ssub.s32 %s25, 1
        %p492 = scmp.lt.s32.totalorder %s30, 1
        %s493 = scalar_select %p492, %s30, 1
        %s494 = smul.addr %s493, 2
        %s495 = smul.addr %s494, 8
        %s496 = scalar_lea.vmem %s0, %s495
        %p497 = pneg %p51
        %p498 = pneg %p48
        %p499 = scmp.lt.s32.totalorder %s30, 1
        %s500 = scalar_select %p499, %s30, 1
        %s501 = smul.addr %s500, 8
        %s502 = scalar_lea.vmem %s1, %s501
        %p503 = pneg %p77
        %p504 = pneg %p74
        %p505 = scmp.lt.s32.totalorder %s30, 1
        %s506 = scalar_select %p505, %s30, 1
        %s507 = smul.addr %s506, 8
        %s508 = scalar_lea.vmem %s2, %s507
        %p509 = pneg %p103
        %p510 = pneg %p100
        %p511 = scmp.lt.s32.totalorder %s30, 1
        %s512 = scalar_select %p511, %s30, 1
        %s513 = smul.addr %s512, 8
        %s514 = scalar_lea.vmem %s3, %s513
        %p515 = pneg %p129
        %p516 = pneg %p126
        %p517 = scmp.lt.s32.totalorder %s30, 1
        %s518 = scalar_select %p517, %s30, 1
        %s519 = scalar_lea.vmem %s4, %s518
        %p520 = pneg %p155
        %p521 = pneg %p152
        %p522 = scmp.lt.s32.totalorder %s30, 1
        %s523 = scalar_select %p522, %s30, 1
        %s524 = scalar_lea.vmem %s5, %s523
        %p525 = pneg %p181
        %p526 = pneg %p178
        %p527 = pneg %p202
        %p528 = pneg %p199
        %p529 = pneg %p223
        %p530 = pneg %p220
        %p531 = pneg %p244
        %p532 = pneg %p241
        %p533 = pneg %p265
        %p534 = pneg %p262
        %p535 = pneg %p286
        %p536 = pneg %p283
        %p537 = pneg %p307
        %p538 = pneg %p304
        %p539 = pneg %p328
        %p540 = pneg %p325
        %p541 = pneg %p349
        %p542 = pneg %p346
        %p543 = pneg %p375
        %p544 = pneg %p372
        %s545 = sand.u32 %s362, 1
        %s546 = scalar_lea.sflag [#allocation3], %s545
        %s547 = sand.u32 %s362, 1
        %s548 = smul.addr %s547, 8
        %s549 = scalar_lea.vmem [#allocation2], %s548
        %p550 = pneg %p401
        %p551 = pneg %p398
        %p552 = scmp.lt.s32.totalorder %s30, 1
        %s553 = scalar_select %p552, %s30, 1
        %s554 = smul.addr %s553, 2
        %s555 = smul.addr %s554, 8
        %s556 = scalar_lea.vmem %s15, %s555
        %p557 = scmp.lt.s32.totalorder %s30, 1
        %s558 = scalar_select %p557, %s30, 1
        %s559 = smul.addr %s558, 2
        %s560 = smul.addr %s559, 8
        %s561 = scalar_lea.vmem %s0, %s560
        %p562 = scmp.lt.s32.totalorder %s30, 1
        %s563 = scalar_select %p562, %s30, 1
        %s564 = smul.addr %s563, 8
        %s565 = scalar_lea.vmem %s1, %s564
        %p566 = scmp.lt.s32.totalorder %s30, 1
        %s567 = scalar_select %p566, %s30, 1
        %s568 = smul.addr %s567, 8
        %s569 = scalar_lea.vmem %s2, %s568
        %p570 = scmp.lt.s32.totalorder %s30, 1
        %s571 = scalar_select %p570, %s30, 1
        %s572 = smul.addr %s571, 8
        %s573 = scalar_lea.vmem %s3, %s572
        %p574 = scmp.lt.s32.totalorder %s30, 1
        %s575 = scalar_select %p574, %s30, 1
        %s576 = scalar_lea.vmem %s4, %s575
        %p577 = scmp.lt.s32.totalorder %s30, 1
        %s578 = scalar_select %p577, %s30, 1
        %s579 = scalar_lea.vmem %s5, %s578
        %p580 = scmp.lt.s32.totalorder %s30, 1
        %s581 = scalar_select %p580, %s30, 1
        %s582 = smul.addr %s581, 2
        %s583 = smul.addr %s582, 8
        %s584 = scalar_lea.vmem %s15, %s583
        %v585 = vld [vmem:[%s561] sm:$0xff]
        %v586 = vld [vmem:[%s561 + $0x8] sm:$0x3]
        %v587 = vld [vmem:[%s565] sm:$0xff]
        %v588 = vld [vmem:[%s569] sm:$0xff]
        %v589 = vld [vmem:[%s573] sm:$0xff]
        %v590 = vld [vmem:[%s576] sm:$0x1]
        %v591 = vld [vmem:[%s579] sm:$0x1]
        %v592 = vlaneseq
        %v593 = vshrl.u32 %v592, 7
        %v594 = vadd.s32 %v593, 8
        %v595 = vlaneseq
        %v596 = vand.u32 %v595, 127
        %vm597 = vcmp.le.s32.totalorder %v596, %v593
        %vm598 = vcmp.le.s32.totalorder %v596, %v594
        %vm599 = vcmp.gt.f32.partialorder %v590, 0.5
        %v600 = vsel %vm599, 1, 0
        %v601 = vlaneseq
        %v602 = vshrl.u32 %v601, 7
        %v603 = vsub.s32 0, %v602
        %v604 = vrot.slane %v600, %v603
        %vm605 = vcmp.eq.s32.totalorder %v604, 1
        %vm606 = vmand %vm597, %vm605
        %vm607 = vmand %vm598, %vm605
        %v608 = vadd.s32 %v596, 1
        %vm609 = vcmp.eq.s32.totalorder %v593, %v608
        %vm610 = vcmp.eq.s32.totalorder %v594, %v608
        %v611 = vsel %vm609, 1, 0
        %v612 = vsel %vm610, 1, 0
        %v613 = vcvt.s32.f32 %v611
        %v614 = vcvt.s32.f32 %v612
        %v615 = vld [vmem:[%s6] sm:$0x1]
        %v616 = vlaneseq
        %v617 = vshrl.u32 %v616, 7
        %v618 = vsub.s32 0, %v617
        %v619 = vrot.slane %v615, %v618
        %v620 = vmul.f32 %v588, %v619
        %v621 = vld [vmem:[%s6 + $0x1] sm:$0x1]
        %v622 = vlaneseq
        %v623 = vshrl.u32 %v622, 7
        %v624 = vsub.s32 0, %v623
        %v625 = vrot.slane %v621, %v624
        %v626 = vmul.f32 %v588, %v625
        %v627 = vld [vmem:[%s6 + $0x2] sm:$0x1]
        %v628 = vlaneseq
        %v629 = vshrl.u32 %v628, 7
        %v630 = vsub.s32 0, %v629
        %v631 = vrot.slane %v627, %v630
        %v632 = vmul.f32 %v588, %v631
        %v633 = vld [vmem:[%s6 + $0x3] sm:$0x1]
        %v634 = vlaneseq
        %v635 = vshrl.u32 %v634, 7
        %v636 = vsub.s32 0, %v635
        %v637 = vrot.slane %v633, %v636
        %v638 = vmul.f32 %v588, %v637
        %vm639 = vcmask 261120
        %v641 = vsel %vm639, %v620, 0
        %v644 = vsel %vm639, %v626, 0
        %v647 = vsel %vm639, %v632, 0
        %v650 = vsel %vm639, %v638, 0
        %v653 = vsel %vm639, %v588, 0
        %655 = vmatprep.subr.mxu0 0.0
        %656 = vmatpush1.xpose.msra.mxu0 %v653
        %657 = vmatprep.subr.mxu0 0.0
        %658 = vmatpush1.xpose.msra.mxu0 0.0
        %659 = vmatprep.subr.mxu0 0.0
        %660 = vmatpush1.xpose.msra.mxu0 0.0
        %661 = vmatprep.subr.mxu0 0.0
        %662 = vmatpush1.xpose.msra.mxu0 0.0
        %663 = vmatprep.subr.mxu0 0.0
        %664 = vmatpush1.xpose.msra.mxu0 0.0
        %665 = vmatprep.subr.mxu0 0.0
        %666 = vmatpush1.xpose.msra.mxu0 0.0
        %667 = vmatprep.subr.mxu0 0.0
        %668 = vmatpush1.xpose.msra.mxu0 0.0
        %669 = vmatprep.subr.mxu0 0.0
        %670 = vmatpush1.xpose.msra.mxu0 0.0
        %671 = vmatprep.subr.mxu0 0.0
        %672 = vmatpush1.xpose.msra.mxu0 0.0
        %673 = vmatprep.subr.mxu0 0.0
        %674 = vmatpush1.xpose.msra.mxu0 0.0
        %675 = vmatprep.subr.mxu0 0.0
        %676 = vmatpush1.xpose.msra.mxu0 0.0
        %677 = vmatprep.subr.mxu0 0.0
        %678 = vmatpush1.xpose.msra.mxu0 0.0
        %679 = vmatprep.subr.mxu0 0.0
        %680 = vmatpush1.xpose.msra.mxu0 0.0
        %681 = vmatprep.subr.mxu0 0.0
        %682 = vmatpush1.xpose.msra.mxu0 0.0
        %683 = vmatprep.subr.mxu0 0.0
        %684 = vmatpush1.xpose.msra.mxu0 0.0
        %685 = vmatprep.subr.mxu0 0.0
        %686 = vmatpush1.xpose.msra.mxu0 0.0
        %687 = vmatprep.subr.mxu0 0.0
        %688 = vmatpush1.xpose.msra.mxu0 0.0
        %689 = vmatprep.subr.mxu0 0.0
        %690 = vmatpush1.xpose.msra.mxu0 0.0
        %691 = vmatprep.subr.mxu0 0.0
        %692 = vmatpush1.xpose.msra.mxu0 0.0
        %693 = vmatprep.subr.mxu0 0.0
        %694 = vmatpush1.xpose.msra.mxu0 0.0
        %695 = vmatprep.subr.mxu0 0.0
        %696 = vmatpush1.xpose.msra.mxu0 0.0
        %697 = vmatprep.subr.mxu0 0.0
        %698 = vmatpush1.xpose.msra.mxu0 0.0
        %699 = vmatprep.subr.mxu0 0.0
        %700 = vmatpush1.xpose.msra.mxu0 0.0
        %701 = vmatprep.subr.mxu0 0.0
        %702 = vmatpush1.xpose.msra.mxu0 0.0
        %703 = vmatprep.subr.mxu0 0.0
        %704 = vmatpush1.xpose.msra.mxu0 0.0
        %705 = vmatprep.subr.mxu0 0.0
        %706 = vmatpush1.xpose.msra.mxu0 0.0
        %707 = vmatprep.subr.mxu0 0.0
        %708 = vmatpush1.xpose.msra.mxu0 0.0
        %709 = vmatprep.subr.mxu0 0.0
        %710 = vmatpush1.xpose.msra.mxu0 0.0
        %711 = vmatprep.subr.mxu0 0.0
        %712 = vmatpush1.xpose.msra.mxu0 0.0
        %713 = vmatprep.subr.mxu0 0.0
        %714 = vmatpush1.xpose.msra.mxu0 0.0
        %715 = vmatprep.subr.mxu0 0.0
        %716 = vmatpush1.xpose.msra.mxu0 0.0
        %717 = vmatprep.subr.mxu0 0.0
        %718 = vmatpush1.xpose.msra.mxu0 0.0
        %719 = vmatprep.mubr.f32.mxu0 0.0
        %720 = vmatmul.mubr.f32.gmra.mrb[0].mxu0 %v641
        %v721 = vpop.f32.mrb[0].mxu0
        %v722 = vadd.f32 0.0, %v721
        %v723 = vpop.f32.mrb[0].mxu0
        %724 = vmatprep.mubr.f32.mxu0 0.0
        %725 = vmatmul.mubr.f32.gmra.mrb[0].mxu0 %v644
        %v726 = vpop.f32.mrb[0].mxu0
        %v727 = vadd.f32 0.0, %v726
        %v728 = vpop.f32.mrb[0].mxu0
        %729 = vmatprep.mubr.f32.mxu0 0.0
        %730 = vmatmul.mubr.f32.gmra.mrb[0].mxu0 %v647
        %v731 = vpop.f32.mrb[0].mxu0
        %v732 = vadd.f32 0.0, %v731
        %v733 = vpop.f32.mrb[0].mxu0
        %734 = vmatprep.mubr.f32.mxu0 0.0
        %735 = vmatmul.mubr.f32.gmra.mrb[0].mxu0 %v650
        %v736 = vpop.f32.mrb[0].mxu0
        %v737 = vadd.f32 0.0, %v736
        %v738 = vpop.f32.mrb[0].mxu0
        %739 = vdwg.mxu0
        %vm740 = vcmp.gt.f32.partialorder %v722, 0.0
        %vm741 = vcmp.gt.f32.partialorder %v727, 0.0
        %vm742 = vcmp.gt.f32.partialorder %v732, 0.0
        %vm743 = vcmp.gt.f32.partialorder %v737, 0.0
        %v744 = vmul.f32 %v722, 0.2
        %v745 = vmul.f32 %v727, 0.2
        %v746 = vmul.f32 %v732, 0.2
        %v747 = vmul.f32 %v737, 0.2
        %v748 = vsel %vm740, %v722, %v744
        %v749 = vsel %vm741, %v727, %v745
        %v750 = vsel %vm742, %v732, %v746
        %v751 = vsel %vm743, %v737, %v747
        %vm752 = vcmp.eq.s32.totalorder %v589, 1
        %v753 = vsel %vm752, %v748, -9e+15
        %vm754 = vcmp.eq.s32.totalorder %v589, 2
        %v755 = vsel %vm754, %v749, %v753
        %vm756 = vcmp.eq.s32.totalorder %v589, 3
        %v757 = vsel %vm756, %v750, %v755
        %vm758 = vcmp.eq.s32.totalorder %v589, 4
        %v759 = vsel %vm758, %v751, %v757
        %vm760 = vcmask 64512
        %v761 = vsel %vm760, %v759, -inf
        %762 = vmax.xlane.f32.xlu0 %v761
        %v763 = vpop.xlane.xlu0 %762
        %v764 = vsub.f32 %v759, %v763
        %v765 = vmul.f32 %v764, 1.442695
        %v766 = vpow.pop %v765
        %v767 = vsel %vm760, %v766, 0.0
        %768 = vadd.xlane.f32.xlu0 %v767
        %v769 = vpop.xlane.xlu0 %768
        %v770 = vrcp.pop %v769
        %v771 = vmul.f32 %v766, %v770
        %v773 = vsel %vm760, %v771, 0
        %775 = vmatprep.subr.mxu0 0.0
        %776 = vmatpush1.msra.mxu0 %v588
        %777 = vmatprep.subr.mxu0 0.0
        %778 = vmatpush1.msra.mxu0 0.0
        %779 = vmatprep.subr.mxu0 0.0
        %780 = vmatpush1.msra.mxu0 0.0
        %781 = vmatprep.subr.mxu0 0.0
        %782 = vmatpush1.msra.mxu0 0.0
        %783 = vmatprep.subr.mxu0 0.0
        %784 = vmatpush1.msra.mxu0 0.0
        %785 = vmatprep.subr.mxu0 0.0
        %786 = vmatpush1.msra.mxu0 0.0
        %787 = vmatprep.subr.mxu0 0.0
        %788 = vmatpush1.msra.mxu0 0.0
        %789 = vmatprep.subr.mxu0 0.0
        %790 = vmatpush1.msra.mxu0 0.0
        %791 = vmatprep.subr.mxu0 0.0
        %792 = vmatpush1.msra.mxu0 0.0
        %793 = vmatprep.subr.mxu0 0.0
        %794 = vmatpush1.msra.mxu0 0.0
        %795 = vmatprep.subr.mxu0 0.0
        %796 = vmatpush1.msra.mxu0 0.0
        %797 = vmatprep.subr.mxu0 0.0
        %798 = vmatpush1.msra.mxu0 0.0
        %799 = vmatprep.subr.mxu0 0.0
        %800 = vmatpush1.msra.mxu0 0.0
        %801 = vmatprep.subr.mxu0 0.0
        %802 = vmatpush1.msra.mxu0 0.0
        %803 = vmatprep.subr.mxu0 0.0
        %804 = vmatpush1.msra.mxu0 0.0
        %805 = vmatprep.subr.mxu0 0.0
        %806 = vmatpush1.msra.mxu0 0.0
        %807 = vmatprep.subr.mxu0 0.0
        %808 = vmatpush1.msra.mxu0 0.0
        %809 = vmatprep.subr.mxu0 0.0
        %810 = vmatpush1.msra.mxu0 0.0
        %811 = vmatprep.subr.mxu0 0.0
        %812 = vmatpush1.msra.mxu0 0.0
        %813 = vmatprep.subr.mxu0 0.0
        %814 = vmatpush1.msra.mxu0 0.0
        %815 = vmatprep.subr.mxu0 0.0
        %816 = vmatpush1.msra.mxu0 0.0
        %817 = vmatprep.subr.mxu0 0.0
        %818 = vmatpush1.msra.mxu0 0.0
        %819 = vmatprep.subr.mxu0 0.0
        %820 = vmatpush1.msra.mxu0 0.0
        %821 = vmatprep.subr.mxu0 0.0
        %822 = vmatpush1.msra.mxu0 0.0
        %823 = vmatprep.subr.mxu0 0.0
        %824 = vmatpush1.msra.mxu0 0.0
        %825 = vmatprep.subr.mxu0 0.0
        %826 = vmatpush1.msra.mxu0 0.0
        %827 = vmatprep.subr.mxu0 0.0
        %828 = vmatpush1.msra.mxu0 0.0
        %829 = vmatprep.subr.mxu0 0.0
        %830 = vmatpush1.msra.mxu0 0.0
        %831 = vmatprep.subr.mxu0 0.0
        %832 = vmatpush1.msra.mxu0 0.0
        %833 = vmatprep.subr.mxu0 0.0
        %834 = vmatpush1.msra.mxu0 0.0
        %835 = vmatprep.subr.mxu0 0.0
        %836 = vmatpush1.msra.mxu0 0.0
        %837 = vmatprep.subr.mxu0 0.0
        %838 = vmatpush1.msra.mxu0 0.0
        %839 = vmatprep.mubr.f32.mxu0 0.0
        %840 = vmatmul.mubr.f32.gmra.mrb[0].mxu0 %v773
        %v841 = vpop.f32.mrb[0].mxu0
        %v842 = vadd.f32 0.0, %v841
        %v843 = vpop.f32.mrb[0].mxu0
        %844 = vdwg.mxu0
        %v846 = vsel %vm760, %v613, 0
        %v849 = vsel %vm760, %v614, 0
        %851 = vmatprep.subr.mxu0 0.0
        %852 = vmatpush1.msra.mxu0 %v842
        %853 = vmatprep.subr.mxu0 0.0
        %854 = vmatpush1.msra.mxu0 0.0
        %855 = vmatprep.subr.mxu0 0.0
        %856 = vmatpush1.msra.mxu0 0.0
        %857 = vmatprep.subr.mxu0 0.0
        %858 = vmatpush1.msra.mxu0 0.0
        %859 = vmatprep.subr.mxu0 0.0
        %860 = vmatpush1.msra.mxu0 0.0
        %861 = vmatprep.subr.mxu0 0.0
        %862 = vmatpush1.msra.mxu0 0.0
        %863 = vmatprep.subr.mxu0 0.0
        %864 = vmatpush1.msra.mxu0 0.0
        %865 = vmatprep.subr.mxu0 0.0
        %866 = vmatpush1.msra.mxu0 0.0
        %867 = vmatprep.subr.mxu0 0.0
        %868 = vmatpush1.msra.mxu0 0.0
        %869 = vmatprep.subr.mxu0 0.0
        %870 = vmatpush1.msra.mxu0 0.0
        %871 = vmatprep.subr.mxu0 0.0
        %872 = vmatpush1.msra.mxu0 0.0
        %873 = vmatprep.subr.mxu0 0.0
        %874 = vmatpush1.msra.mxu0 0.0
        %875 = vmatprep.subr.mxu0 0.0
        %876 = vmatpush1.msra.mxu0 0.0
        %877 = vmatprep.subr.mxu0 0.0
        %878 = vmatpush1.msra.mxu0 0.0
        %879 = vmatprep.subr.mxu0 0.0
        %880 = vmatpush1.msra.mxu0 0.0
        %881 = vmatprep.subr.mxu0 0.0
        %882 = vmatpush1.msra.mxu0 0.0
        %883 = vmatprep.subr.mxu0 0.0
        %884 = vmatpush1.msra.mxu0 0.0
        %885 = vmatprep.subr.mxu0 0.0
        %886 = vmatpush1.msra.mxu0 0.0
        %887 = vmatprep.subr.mxu0 0.0
        %888 = vmatpush1.msra.mxu0 0.0
        %889 = vmatprep.subr.mxu0 0.0
        %890 = vmatpush1.msra.mxu0 0.0
        %891 = vmatprep.subr.mxu0 0.0
        %892 = vmatpush1.msra.mxu0 0.0
        %893 = vmatprep.subr.mxu0 0.0
        %894 = vmatpush1.msra.mxu0 0.0
        %895 = vmatprep.subr.mxu0 0.0
        %896 = vmatpush1.msra.mxu0 0.0
        %897 = vmatprep.subr.mxu0 0.0
        %898 = vmatpush1.msra.mxu0 0.0
        %899 = vmatprep.subr.mxu0 0.0
        %900 = vmatpush1.msra.mxu0 0.0
        %901 = vmatprep.subr.mxu0 0.0
        %902 = vmatpush1.msra.mxu0 0.0
        %903 = vmatprep.subr.mxu0 0.0
        %904 = vmatpush1.msra.mxu0 0.0
        %905 = vmatprep.subr.mxu0 0.0
        %906 = vmatpush1.msra.mxu0 0.0
        %907 = vmatprep.subr.mxu0 0.0
        %908 = vmatpush1.msra.mxu0 0.0
        %909 = vmatprep.subr.mxu0 0.0
        %910 = vmatpush1.msra.mxu0 0.0
        %911 = vmatprep.subr.mxu0 0.0
        %912 = vmatpush1.msra.mxu0 0.0
        %913 = vmatprep.subr.mxu0 0.0
        %914 = vmatpush1.msra.mxu0 0.0
        %915 = vmatprep.mubr.f32.mxu0 0.0
        %916 = vmatmul.mubr.f32.gmra.mrb[0].mxu0 %v846
        %v917 = vpop.f32.mrb[0].mxu0
        %v918 = vadd.f32 0.0, %v917
        %v919 = vpop.f32.mrb[0].mxu0
        %920 = vmatprep.mubr.f32.mxu0 0.0
        %921 = vmatmul.mubr.f32.gmra.mrb[0].mxu0 %v849
        %v922 = vpop.f32.mrb[0].mxu0
        %v923 = vadd.f32 0.0, %v922
        %v924 = vpop.f32.mrb[0].mxu0
        %925 = vdwg.mxu0
        %v926 = vadd.f32 %v585, %v918
        %v927 = vadd.f32 %v586, %v923
        %v928 = vld [vmem:[%s7] sm:$0x1]
        %v929 = vld [vmem:[%s7 + $0x1] sm:$0x1]
        %v930 = vsel %vm639, %v926, 0.0
        %931 = vadd.xlane.f32.xlu0 %v930
        %v932 = vpop.xlane.xlu0 %931
        %vm933 = vcmask 254976
        %v934 = vsel %vm933, %v927, 0.0
        %935 = vadd.xlane.f32.xlu0 %v934
        %v936 = vpop.xlane.xlu0 %935
        %v937 = vrcp.pop 32.0
        %v938 = vmul.f32 %v932, %v937
        %v939 = vmul.f32 %v936, %v937
        %v940 = vsub.f32 %v926, %v938
        %v941 = vsub.f32 %v927, %v939
        %v942 = vmul.f32 %v940, %v940
        %v943 = vmul.f32 %v941, %v941
        %v944 = vsel %vm639, %v942, 0.0
        %945 = vadd.xlane.f32.xlu0 %v944
        %v946 = vpop.xlane.xlu0 %945
        %v947 = vsel %vm933, %v943, 0.0
        %948 = vadd.xlane.f32.xlu0 %v947
        %v949 = vpop.xlane.xlu0 %948
        %v950 = vmul.f32 %v946, %v937
        %v951 = vmul.f32 %v949, %v937
        %v952 = vadd.f32 %v950, 1e-05
        %v953 = vadd.f32 %v951, 1e-05
        %v954 = vrsqrt.pop %v952
        %v955 = vrsqrt.pop %v953
        %v956 = vmul.f32 %v940, %v954
        %v957 = vmul.f32 %v941, %v955
        %v958 = vlaneseq
        %v959 = vshrl.u32 %v958, 7
        %v960 = vsub.s32 0, %v959
        %v961 = vrot.slane %v928, %v960
        %v962 = vmul.f32 %v956, %v961
        %v963 = vmul.f32 %v957, %v961
        %v964 = vlaneseq
        %v965 = vshrl.u32 %v964, 7
        %v966 = vsub.s32 0, %v965
        %v967 = vrot.slane %v929, %v966
        %v968 = vadd.f32 %v962, %v967
        %v969 = vadd.f32 %v963, %v967
        %v970 = vld [vmem:[%s8] sm:$0xff]
        %v971 = vld [vmem:[%s8 + $0x8] sm:$0xff]
        %v972 = vld [vmem:[%s8 + $0x10] sm:$0xff]
        %v973 = vld [vmem:[%s8 + $0x18] sm:$0xff]
        %v975 = vsel %vm639, %v968, 0
        %v978 = vsel %vm639, %v969, 0
        %980 = vmatprep.subr.mxu0 0.0
        %981 = vmatpush1.msra.mxu0 %v970
        %982 = vmatprep.subr.mxu0 0.0
        %983 = vmatpush1.msra.mxu0 %v971
        %984 = vmatprep.subr.mxu0 0.0
        %985 = vmatpush1.msra.mxu0 %v972
        %986 = vmatprep.subr.mxu0 0.0
        %987 = vmatpush1.msra.mxu0 %v973
        %988 = vmatprep.subr.mxu0 0.0
        %989 = vmatpush1.msra.mxu0 0.0
        %990 = vmatprep.subr.mxu0 0.0
        %991 = vmatpush1.msra.mxu0 0.0
        %992 = vmatprep.subr.mxu0 0.0
        %993 = vmatpush1.msra.mxu0 0.0
        %994 = vmatprep.subr.mxu0 0.0
        %995 = vmatpush1.msra.mxu0 0.0
        %996 = vmatprep.subr.mxu0 0.0
        %997 = vmatpush1.msra.mxu0 0.0
        %998 = vmatprep.subr.mxu0 0.0
        %999 = vmatpush1.msra.mxu0 0.0
        %1000 = vmatprep.subr.mxu0 0.0
        %1001 = vmatpush1.msra.mxu0 0.0
        %1002 = vmatprep.subr.mxu0 0.0
        %1003 = vmatpush1.msra.mxu0 0.0
        %1004 = vmatprep.subr.mxu0 0.0
        %1005 = vmatpush1.msra.mxu0 0.0
        %1006 = vmatprep.subr.mxu0 0.0
        %1007 = vmatpush1.msra.mxu0 0.0
        %1008 = vmatprep.subr.mxu0 0.0
        %1009 = vmatpush1.msra.mxu0 0.0
        %1010 = vmatprep.subr.mxu0 0.0
        %1011 = vmatpush1.msra.mxu0 0.0
        %1012 = vmatprep.subr.mxu0 0.0
        %1013 = vmatpush1.msra.mxu0 0.0
        %1014 = vmatprep.subr.mxu0 0.0
        %1015 = vmatpush1.msra.mxu0 0.0
        %1016 = vmatprep.subr.mxu0 0.0
        %1017 = vmatpush1.msra.mxu0 0.0
        %1018 = vmatprep.subr.mxu0 0.0
        %1019 = vmatpush1.msra.mxu0 0.0
        %1020 = vmatprep.subr.mxu0 0.0
        %1021 = vmatpush1.msra.mxu0 0.0
        %1022 = vmatprep.subr.mxu0 0.0
        %1023 = vmatpush1.msra.mxu0 0.0
        %1024 = vmatprep.subr.mxu0 0.0
        %1025 = vmatpush1.msra.mxu0 0.0
        %1026 = vmatprep.subr.mxu0 0.0
        %1027 = vmatpush1.msra.mxu0 0.0
        %1028 = vmatprep.subr.mxu0 0.0
        %1029 = vmatpush1.msra.mxu0 0.0
        %1030 = vmatprep.subr.mxu0 0.0
        %1031 = vmatpush1.msra.mxu0 0.0
        %1032 = vmatprep.subr.mxu0 0.0
        %1033 = vmatpush1.msra.mxu0 0.0
        %1034 = vmatprep.subr.mxu0 0.0
        %1035 = vmatpush1.msra.mxu0 0.0
        %1036 = vmatprep.subr.mxu0 0.0
        %1037 = vmatpush1.msra.mxu0 0.0
        %1038 = vmatprep.subr.mxu0 0.0
        %1039 = vmatpush1.msra.mxu0 0.0
        %1040 = vmatprep.subr.mxu0 0.0
        %1041 = vmatpush1.msra.mxu0 0.0
        %1042 = vmatprep.subr.mxu0 0.0
        %1043 = vmatpush1.msra.mxu0 0.0
        %1044 = vmatprep.mubr.f32.mxu0 0.0
        %1045 = vmatmul.mubr.f32.gmra.mrb[0].mxu0 %v975
        %v1046 = vpop.f32.mrb[0].mxu0
        %v1047 = vadd.f32 0.0, %v1046
        %v1048 = vpop.f32.mrb[0].mxu0
        %1049 = vmatprep.mubr.f32.mxu0 0.0
        %1050 = vmatmul.mubr.f32.gmra.mrb[0].mxu0 %v978
        %v1051 = vpop.f32.mrb[0].mxu0
        %v1052 = vadd.f32 0.0, %v1051
        %v1053 = vpop.f32.mrb[0].mxu0
        %1054 = vdwg.mxu0
        %1057 = vrot.lane.b32.xlu0 %v1047, 96
        %v1058 = vpop.permute.xlu0 %1057
        %1059 = vrot.lane.b32.xlu0 %v1052, 96
        %v1060 = vpop.permute.xlu0 %1059
        %vm1061 = vcmask 130048
        %v1062 = vsel %vm1061, %v1047, 0
        %v1064 = vsel %vm1061, %v1052, 0
        %v1066 = vsel %vm1061, %v1058, 0
        %v1068 = vsel %vm1061, %v1060, 0
        %1070 = vmatprep.subr.mxu0 0.0
        %1071 = vmatpush1.xpose.msra.mxu0 %v1066
        %1072 = vmatprep.subr.mxu0 0.0
        %1073 = vmatpush1.xpose.msra.mxu0 %v1068
        %1074 = vmatprep.subr.mxu0 0.0
        %1075 = vmatpush1.xpose.msra.mxu0 0.0
        %1076 = vmatprep.subr.mxu0 0.0
        %1077 = vmatpush1.xpose.msra.mxu0 0.0
        %1078 = vmatprep.subr.mxu0 0.0
        %1079 = vmatpush1.xpose.msra.mxu0 0.0
        %1080 = vmatprep.subr.mxu0 0.0
        %1081 = vmatpush1.xpose.msra.mxu0 0.0
        %1082 = vmatprep.subr.mxu0 0.0
        %1083 = vmatpush1.xpose.msra.mxu0 0.0
        %1084 = vmatprep.subr.mxu0 0.0
        %1085 = vmatpush1.xpose.msra.mxu0 0.0
        %1086 = vmatprep.subr.mxu0 0.0
        %1087 = vmatpush1.xpose.msra.mxu0 0.0
        %1088 = vmatprep.subr.mxu0 0.0
        %1089 = vmatpush1.xpose.msra.mxu0 0.0
        %1090 = vmatprep.subr.mxu0 0.0
        %1091 = vmatpush1.xpose.msra.mxu0 0.0
        %1092 = vmatprep.subr.mxu0 0.0
        %1093 = vmatpush1.xpose.msra.mxu0 0.0
        %1094 = vmatprep.subr.mxu0 0.0
        %1095 = vmatpush1.xpose.msra.mxu0 0.0
        %1096 = vmatprep.subr.mxu0 0.0
        %1097 = vmatpush1.xpose.msra.mxu0 0.0
        %1098 = vmatprep.subr.mxu0 0.0
        %1099 = vmatpush1.xpose.msra.mxu0 0.0
        %1100 = vmatprep.subr.mxu0 0.0
        %1101 = vmatpush1.xpose.msra.mxu0 0.0
        %1102 = vmatprep.subr.mxu0 0.0
        %1103 = vmatpush1.xpose.msra.mxu0 0.0
        %1104 = vmatprep.subr.mxu0 0.0
        %1105 = vmatpush1.xpose.msra.mxu0 0.0
        %1106 = vmatprep.subr.mxu0 0.0
        %1107 = vmatpush1.xpose.msra.mxu0 0.0
        %1108 = vmatprep.subr.mxu0 0.0
        %1109 = vmatpush1.xpose.msra.mxu0 0.0
        %1110 = vmatprep.subr.mxu0 0.0
        %1111 = vmatpush1.xpose.msra.mxu0 0.0
        %1112 = vmatprep.subr.mxu0 0.0
        %1113 = vmatpush1.xpose.msra.mxu0 0.0
        %1114 = vmatprep.subr.mxu0 0.0
        %1115 = vmatpush1.xpose.msra.mxu0 0.0
        %1116 = vmatprep.subr.mxu0 0.0
        %1117 = vmatpush1.xpose.msra.mxu0 0.0
        %1118 = vmatprep.subr.mxu0 0.0
        %1119 = vmatpush1.xpose.msra.mxu0 0.0
        %1120 = vmatprep.subr.mxu0 0.0
        %1121 = vmatpush1.xpose.msra.mxu0 0.0
        %1122 = vmatprep.subr.mxu0 0.0
        %1123 = vmatpush1.xpose.msra.mxu0 0.0
        %1124 = vmatprep.subr.mxu0 0.0
        %1125 = vmatpush1.xpose.msra.mxu0 0.0
        %1126 = vmatprep.subr.mxu0 0.0
        %1127 = vmatpush1.xpose.msra.mxu0 0.0
        %1128 = vmatprep.subr.mxu0 0.0
        %1129 = vmatpush1.xpose.msra.mxu0 0.0
        %1130 = vmatprep.subr.mxu0 0.0
        %1131 = vmatpush1.xpose.msra.mxu0 0.0
        %1132 = vmatprep.subr.mxu0 0.0
        %1133 = vmatpush1.xpose.msra.mxu0 0.0
        %1134 = vmatprep.mubr.f32.mxu0 0.0
        %1135 = vmatmul.mubr.f32.gmra.mrb[0].mxu0 %v1062
        %v1136 = vpop.f32.mrb[0].mxu0
        %v1137 = vadd.f32 0.0, %v1136
        %v1138 = vpop.f32.mrb[0].mxu0
        %1139 = vmatprep.mubr.f32.mxu0 0.0
        %1140 = vmatmul.mubr.f32.gmra.mrb[0].mxu0 %v1064
        %v1141 = vpop.f32.mrb[0].mxu0
        %v1142 = vadd.f32 0.0, %v1141
        %v1143 = vpop.f32.mrb[0].mxu0
        %1144 = vdwg.mxu0
        %v1145 = vmul.f32 %v1137, 0.25
        %v1146 = vmul.f32 %v1142, 0.25
        %v1147 = vsel %vm606, %v1145, -1e+30
        %v1148 = vsel %vm607, %v1146, -1e+30
        %vm1149 = vcmask 80896
        %v1150 = vsel %vm1149, %v1147, -inf
        %1151 = vmax.xlane.f32.xlu0 %v1150
        %v1152 = vpop.xlane.xlu0 %1151
        %vm1153 = vcmask 74752
        %v1154 = vsel %vm1153, %v1148, -inf
        %1155 = vmax.xlane.f32.xlu0 %v1154
        %v1156 = vpop.xlane.xlu0 %1155
        %v1157 = vsub.f32 %v1147, %v1152
        %v1158 = vsub.f32 %v1148, %v1156
        %v1159 = vmul.f32 %v1157, 1.442695
        %v1160 = vpow.pop %v1159
        %v1161 = vmul.f32 %v1158, 1.442695
        %v1162 = vpow.pop %v1161
        %v1163 = vsel %vm1149, %v1160, 0.0
        %1164 = vadd.xlane.f32.xlu0 %v1163
        %v1165 = vpop.xlane.xlu0 %1164
        %v1166 = vsel %vm1153, %v1162, 0.0
        %1167 = vadd.xlane.f32.xlu0 %v1166
        %v1168 = vpop.xlane.xlu0 %1167
        %v1169 = vrcp.pop %v1165
        %v1170 = vrcp.pop %v1168
        %v1171 = vmul.f32 %v1160, %v1169
        %v1172 = vmul.f32 %v1162, %v1170
        %1173 = vrot.lane.b32.xlu0 %v1047, 64
        %v1174 = vpop.permute.xlu0 %1173
        %1175 = vrot.lane.b32.xlu0 %v1052, 64
        %v1176 = vpop.permute.xlu0 %1175
        %v1179 = vsel %vm1149, %v1171, 0
        %v1182 = vsel %vm1149, %v1172, 0
        %vm1184 = vcmask 1041408
        %v1185 = vsel %vm1184, %v1176, 0
        %1187 = vmatprep.subr.mxu0 0.0
        %1188 = vmatpush1.msra.mxu0 %v1174
        %1189 = vmatprep.subr.mxu0 0.0
        %1190 = vmatpush1.msra.mxu0 %v1185
        %1191 = vmatprep.subr.mxu0 0.0
        %1192 = vmatpush1.msra.mxu0 0.0
        %1193 = vmatprep.subr.mxu0 0.0
        %1194 = vmatpush1.msra.mxu0 0.0
        %1195 = vmatprep.subr.mxu0 0.0
        %1196 = vmatpush1.msra.mxu0 0.0
        %1197 = vmatprep.subr.mxu0 0.0
        %1198 = vmatpush1.msra.mxu0 0.0
        %1199 = vmatprep.subr.mxu0 0.0
        %1200 = vmatpush1.msra.mxu0 0.0
        %1201 = vmatprep.subr.mxu0 0.0
        %1202 = vmatpush1.msra.mxu0 0.0
        %1203 = vmatprep.subr.mxu0 0.0
        %1204 = vmatpush1.msra.mxu0 0.0
        %1205 = vmatprep.subr.mxu0 0.0
        %1206 = vmatpush1.msra.mxu0 0.0
        %1207 = vmatprep.subr.mxu0 0.0
        %1208 = vmatpush1.msra.mxu0 0.0
        %1209 = vmatprep.subr.mxu0 0.0
        %1210 = vmatpush1.msra.mxu0 0.0
        %1211 = vmatprep.subr.mxu0 0.0
        %1212 = vmatpush1.msra.mxu0 0.0
        %1213 = vmatprep.subr.mxu0 0.0
        %1214 = vmatpush1.msra.mxu0 0.0
        %1215 = vmatprep.subr.mxu0 0.0
        %1216 = vmatpush1.msra.mxu0 0.0
        %1217 = vmatprep.subr.mxu0 0.0
        %1218 = vmatpush1.msra.mxu0 0.0
        %1219 = vmatprep.subr.mxu0 0.0
        %1220 = vmatpush1.msra.mxu0 0.0
        %1221 = vmatprep.subr.mxu0 0.0
        %1222 = vmatpush1.msra.mxu0 0.0
        %1223 = vmatprep.subr.mxu0 0.0
        %1224 = vmatpush1.msra.mxu0 0.0
        %1225 = vmatprep.subr.mxu0 0.0
        %1226 = vmatpush1.msra.mxu0 0.0
        %1227 = vmatprep.subr.mxu0 0.0
        %1228 = vmatpush1.msra.mxu0 0.0
        %1229 = vmatprep.subr.mxu0 0.0
        %1230 = vmatpush1.msra.mxu0 0.0
        %1231 = vmatprep.subr.mxu0 0.0
        %1232 = vmatpush1.msra.mxu0 0.0
        %1233 = vmatprep.subr.mxu0 0.0
        %1234 = vmatpush1.msra.mxu0 0.0
        %1235 = vmatprep.subr.mxu0 0.0
        %1236 = vmatpush1.msra.mxu0 0.0
        %1237 = vmatprep.subr.mxu0 0.0
        %1238 = vmatpush1.msra.mxu0 0.0
        %1239 = vmatprep.subr.mxu0 0.0
        %1240 = vmatpush1.msra.mxu0 0.0
        %1241 = vmatprep.subr.mxu0 0.0
        %1242 = vmatpush1.msra.mxu0 0.0
        %1243 = vmatprep.subr.mxu0 0.0
        %1244 = vmatpush1.msra.mxu0 0.0
        %1245 = vmatprep.subr.mxu0 0.0
        %1246 = vmatpush1.msra.mxu0 0.0
        %1247 = vmatprep.subr.mxu0 0.0
        %1248 = vmatpush1.msra.mxu0 0.0
        %1249 = vmatprep.subr.mxu0 0.0
        %1250 = vmatpush1.msra.mxu0 0.0
        %1251 = vmatprep.mubr.f32.mxu0 0.0
        %1252 = vmatmul.mubr.f32.gmra.mrb[0].mxu0 %v1179
        %v1253 = vpop.f32.mrb[0].mxu0
        %v1254 = vadd.f32 0.0, %v1253
        %v1255 = vpop.f32.mrb[0].mxu0
        %1256 = vmatprep.mubr.f32.mxu0 0.0
        %1257 = vmatmul.mubr.f32.gmra.mrb[0].mxu0 %v1182
        %v1258 = vpop.f32.mrb[0].mxu0
        %v1259 = vadd.f32 0.0, %v1258
        %v1260 = vpop.f32.mrb[0].mxu0
        %1261 = vdwg.mxu0
        %v1262 = vld [vmem:[%s9] sm:$0xff]
        %v1263 = vld [vmem:[%s9 + $0x8] sm:$0xff]
        %1264 = vrot.lane.b32.xlu0 %v1047, 112
        %v1265 = vpop.permute.xlu0 %1264
        %1266 = vrot.lane.b32.xlu0 %v1052, 112
        %v1267 = vpop.permute.xlu0 %1266
        %1268 = vrot.lane.b32.xlu0 %v1047, 80
        %v1269 = vpop.permute.xlu0 %1268
        %1270 = vrot.lane.b32.xlu0 %v1052, 80
        %v1271 = vpop.permute.xlu0 %1270
        %v1272 = vsel %vm1061, %v1265, 0
        %v1274 = vsel %vm1061, %v1267, 0
        %v1276 = vsel %vm1061, %v1269, 0
        %v1278 = vsel %vm1061, %v1271, 0
        %1280 = vmatprep.subr.mxu0 0.0
        %1281 = vmatpush1.xpose.msra.mxu0 %v1276
        %1282 = vmatprep.subr.mxu0 0.0
        %1283 = vmatpush1.xpose.msra.mxu0 %v1278
        %1284 = vmatprep.subr.mxu0 0.0
        %1285 = vmatpush1.xpose.msra.mxu0 0.0
        %1286 = vmatprep.subr.mxu0 0.0
        %1287 = vmatpush1.xpose.msra.mxu0 0.0
        %1288 = vmatprep.subr.mxu0 0.0
        %1289 = vmatpush1.xpose.msra.mxu0 0.0
        %1290 = vmatprep.subr.mxu0 0.0
        %1291 = vmatpush1.xpose.msra.mxu0 0.0
        %1292 = vmatprep.subr.mxu0 0.0
        %1293 = vmatpush1.xpose.msra.mxu0 0.0
        %1294 = vmatprep.subr.mxu0 0.0
        %1295 = vmatpush1.xpose.msra.mxu0 0.0
        %1296 = vmatprep.subr.mxu0 0.0
        %1297 = vmatpush1.xpose.msra.mxu0 0.0
        %1298 = vmatprep.subr.mxu0 0.0
        %1299 = vmatpush1.xpose.msra.mxu0 0.0
        %1300 = vmatprep.subr.mxu0 0.0
        %1301 = vmatpush1.xpose.msra.mxu0 0.0
        %1302 = vmatprep.subr.mxu0 0.0
        %1303 = vmatpush1.xpose.msra.mxu0 0.0
        %1304 = vmatprep.subr.mxu0 0.0
        %1305 = vmatpush1.xpose.msra.mxu0 0.0
        %1306 = vmatprep.subr.mxu0 0.0
        %1307 = vmatpush1.xpose.msra.mxu0 0.0
        %1308 = vmatprep.subr.mxu0 0.0
        %1309 = vmatpush1.xpose.msra.mxu0 0.0
        %1310 = vmatprep.subr.mxu0 0.0
        %1311 = vmatpush1.xpose.msra.mxu0 0.0
        %1312 = vmatprep.subr.mxu0 0.0
        %1313 = vmatpush1.xpose.msra.mxu0 0.0
        %1314 = vmatprep.subr.mxu0 0.0
        %1315 = vmatpush1.xpose.msra.mxu0 0.0
        %1316 = vmatprep.subr.mxu0 0.0
        %1317 = vmatpush1.xpose.msra.mxu0 0.0
        %1318 = vmatprep.subr.mxu0 0.0
        %1319 = vmatpush1.xpose.msra.mxu0 0.0
        %1320 = vmatprep.subr.mxu0 0.0
        %1321 = vmatpush1.xpose.msra.mxu0 0.0
        %1322 = vmatprep.subr.mxu0 0.0
        %1323 = vmatpush1.xpose.msra.mxu0 0.0
        %1324 = vmatprep.subr.mxu0 0.0
        %1325 = vmatpush1.xpose.msra.mxu0 0.0
        %1326 = vmatprep.subr.mxu0 0.0
        %1327 = vmatpush1.xpose.msra.mxu0 0.0
        %1328 = vmatprep.subr.mxu0 0.0
        %1329 = vmatpush1.xpose.msra.mxu0 0.0
        %1330 = vmatprep.subr.mxu0 0.0
        %1331 = vmatpush1.xpose.msra.mxu0 0.0
        %1332 = vmatprep.subr.mxu0 0.0
        %1333 = vmatpush1.xpose.msra.mxu0 0.0
        %1334 = vmatprep.subr.mxu0 0.0
        %1335 = vmatpush1.xpose.msra.mxu0 0.0
        %1336 = vmatprep.subr.mxu0 0.0
        %1337 = vmatpush1.xpose.msra.mxu0 0.0
        %1338 = vmatprep.subr.mxu0 0.0
        %1339 = vmatpush1.xpose.msra.mxu0 0.0
        %1340 = vmatprep.subr.mxu0 0.0
        %1341 = vmatpush1.xpose.msra.mxu0 0.0
        %1342 = vmatprep.subr.mxu0 0.0
        %1343 = vmatpush1.xpose.msra.mxu0 0.0
        %1344 = vmatprep.mubr.f32.mxu0 0.0
        %1345 = vmatmul.mubr.f32.gmra.mrb[0].mxu0 %v1272
        %v1346 = vpop.f32.mrb[0].mxu0
        %v1347 = vadd.f32 0.0, %v1346
        %v1348 = vpop.f32.mrb[0].mxu0
        %1349 = vmatprep.mubr.f32.mxu0 0.0
        %1350 = vmatmul.mubr.f32.gmra.mrb[0].mxu0 %v1274
        %v1351 = vpop.f32.mrb[0].mxu0
        %v1352 = vadd.f32 0.0, %v1351
        %v1353 = vpop.f32.mrb[0].mxu0
        %1354 = vdwg.mxu0
        %v1355 = vmul.f32 %v1347, 0.25
        %v1356 = vmul.f32 %v1352, 0.25
        %v1357 = vsel %vm606, %v1355, -1e+30
        %v1358 = vsel %vm607, %v1356, -1e+30
        %v1359 = vsel %vm1149, %v1357, -inf
        %1360 = vmax.xlane.f32.xlu0 %v1359
        %v1361 = vpop.xlane.xlu0 %1360
        %v1362 = vsel %vm1153, %v1358, -inf
        %1363 = vmax.xlane.f32.xlu0 %v1362
        %v1364 = vpop.xlane.xlu0 %1363
        %v1365 = vsub.f32 %v1357, %v1361
        %v1366 = vsub.f32 %v1358, %v1364
        %v1367 = vmul.f32 %v1365, 1.442695
        %v1368 = vpow.pop %v1367
        %v1369 = vmul.f32 %v1366, 1.442695
        %v1370 = vpow.pop %v1369
        %v1371 = vsel %vm1149, %v1368, 0.0
        %1372 = vadd.xlane.f32.xlu0 %v1371
        %v1373 = vpop.xlane.xlu0 %1372
        %v1374 = vsel %vm1153, %v1370, 0.0
        %1375 = vadd.xlane.f32.xlu0 %v1374
        %v1376 = vpop.xlane.xlu0 %1375
        %v1377 = vrcp.pop %v1373
        %v1378 = vrcp.pop %v1376
        %v1379 = vmul.f32 %v1368, %v1377
        %v1380 = vmul.f32 %v1370, %v1378
        %1381 = vrot.lane.b32.xlu0 %v1047, 48
        %v1382 = vpop.permute.xlu0 %1381
        %1383 = vrot.lane.b32.xlu0 %v1052, 48
        %v1384 = vpop.permute.xlu0 %1383
        %v1387 = vsel %vm1149, %v1379, 0
        %v1390 = vsel %vm1149, %v1380, 0
        %v1392 = vsel %vm1184, %v1384, 0
        %1394 = vmatprep.subr.mxu0 0.0
        %1395 = vmatpush1.msra.mxu0 %v1382
        %1396 = vmatprep.subr.mxu0 0.0
        %1397 = vmatpush1.msra.mxu0 %v1392
        %1398 = vmatprep.subr.mxu0 0.0
        %1399 = vmatpush1.msra.mxu0 0.0
        %1400 = vmatprep.subr.mxu0 0.0
        %1401 = vmatpush1.msra.mxu0 0.0
        %1402 = vmatprep.subr.mxu0 0.0
        %1403 = vmatpush1.msra.mxu0 0.0
        %1404 = vmatprep.subr.mxu0 0.0
        %1405 = vmatpush1.msra.mxu0 0.0
        %1406 = vmatprep.subr.mxu0 0.0
        %1407 = vmatpush1.msra.mxu0 0.0
        %1408 = vmatprep.subr.mxu0 0.0
        %1409 = vmatpush1.msra.mxu0 0.0
        %1410 = vmatprep.subr.mxu0 0.0
        %1411 = vmatpush1.msra.mxu0 0.0
        %1412 = vmatprep.subr.mxu0 0.0
        %1413 = vmatpush1.msra.mxu0 0.0
        %1414 = vmatprep.subr.mxu0 0.0
        %1415 = vmatpush1.msra.mxu0 0.0
        %1416 = vmatprep.subr.mxu0 0.0
        %1417 = vmatpush1.msra.mxu0 0.0
        %1418 = vmatprep.subr.mxu0 0.0
        %1419 = vmatpush1.msra.mxu0 0.0
        %1420 = vmatprep.subr.mxu0 0.0
        %1421 = vmatpush1.msra.mxu0 0.0
        %1422 = vmatprep.subr.mxu0 0.0
        %1423 = vmatpush1.msra.mxu0 0.0
        %1424 = vmatprep.subr.mxu0 0.0
        %1425 = vmatpush1.msra.mxu0 0.0
        %1426 = vmatprep.subr.mxu0 0.0
        %1427 = vmatpush1.msra.mxu0 0.0
        %1428 = vmatprep.subr.mxu0 0.0
        %1429 = vmatpush1.msra.mxu0 0.0
        %1430 = vmatprep.subr.mxu0 0.0
        %1431 = vmatpush1.msra.mxu0 0.0
        %1432 = vmatprep.subr.mxu0 0.0
        %1433 = vmatpush1.msra.mxu0 0.0
        %1434 = vmatprep.subr.mxu0 0.0
        %1435 = vmatpush1.msra.mxu0 0.0
        %1436 = vmatprep.subr.mxu0 0.0
        %1437 = vmatpush1.msra.mxu0 0.0
        %1438 = vmatprep.subr.mxu0 0.0
        %1439 = vmatpush1.msra.mxu0 0.0
        %1440 = vmatprep.subr.mxu0 0.0
        %1441 = vmatpush1.msra.mxu0 0.0
        %1442 = vmatprep.subr.mxu0 0.0
        %1443 = vmatpush1.msra.mxu0 0.0
        %1444 = vmatprep.subr.mxu0 0.0
        %1445 = vmatpush1.msra.mxu0 0.0
        %1446 = vmatprep.subr.mxu0 0.0
        %1447 = vmatpush1.msra.mxu0 0.0
        %1448 = vmatprep.subr.mxu0 0.0
        %1449 = vmatpush1.msra.mxu0 0.0
        %1450 = vmatprep.subr.mxu0 0.0
        %1451 = vmatpush1.msra.mxu0 0.0
        %1452 = vmatprep.subr.mxu0 0.0
        %1453 = vmatpush1.msra.mxu0 0.0
        %1454 = vmatprep.subr.mxu0 0.0
        %1455 = vmatpush1.msra.mxu0 0.0
        %1456 = vmatprep.subr.mxu0 0.0
        %1457 = vmatpush1.msra.mxu0 0.0
        %1458 = vmatprep.mubr.f32.mxu0 0.0
        %1459 = vmatmul.mubr.f32.gmra.mrb[0].mxu0 %v1387
        %v1460 = vpop.f32.mrb[0].mxu0
        %v1461 = vadd.f32 0.0, %v1460
        %v1462 = vpop.f32.mrb[0].mxu0
        %1463 = vmatprep.mubr.f32.mxu0 0.0
        %1464 = vmatmul.mubr.f32.gmra.mrb[0].mxu0 %v1390
        %v1465 = vpop.f32.mrb[0].mxu0
        %v1466 = vadd.f32 0.0, %v1465
        %v1467 = vpop.f32.mrb[0].mxu0
        %1468 = vdwg.mxu0
        %v1469 = vld [vmem:[%s9 + $0x10] sm:$0xff]
        %v1470 = vld [vmem:[%s9 + $0x18] sm:$0xff]
        %v1472 = vsel %vm1061, %v1461, 0
        %v1475 = vsel %vm1061, %v1466, 0
        %1477 = vmatprep.subr.mxu0 0.0
        %1478 = vmatpush1.msra.mxu0 %v1469
        %1479 = vmatprep.subr.mxu0 0.0
        %1480 = vmatpush1.msra.mxu0 %v1470
        %1481 = vmatprep.subr.mxu0 0.0
        %1482 = vmatpush1.msra.mxu0 0.0
        %1483 = vmatprep.subr.mxu0 0.0
        %1484 = vmatpush1.msra.mxu0 0.0
        %1485 = vmatprep.subr.mxu0 0.0
        %1486 = vmatpush1.msra.mxu0 0.0
        %1487 = vmatprep.subr.mxu0 0.0
        %1488 = vmatpush1.msra.mxu0 0.0
        %1489 = vmatprep.subr.mxu0 0.0
        %1490 = vmatpush1.msra.mxu0 0.0
        %1491 = vmatprep.subr.mxu0 0.0
        %1492 = vmatpush1.msra.mxu0 0.0
        %1493 = vmatprep.subr.mxu0 0.0
        %1494 = vmatpush1.msra.mxu0 0.0
        %1495 = vmatprep.subr.mxu0 0.0
        %1496 = vmatpush1.msra.mxu0 0.0
        %1497 = vmatprep.subr.mxu0 0.0
        %1498 = vmatpush1.msra.mxu0 0.0
        %1499 = vmatprep.subr.mxu0 0.0
        %1500 = vmatpush1.msra.mxu0 0.0
        %1501 = vmatprep.subr.mxu0 0.0
        %1502 = vmatpush1.msra.mxu0 0.0
        %1503 = vmatprep.subr.mxu0 0.0
        %1504 = vmatpush1.msra.mxu0 0.0
        %1505 = vmatprep.subr.mxu0 0.0
        %1506 = vmatpush1.msra.mxu0 0.0
        %1507 = vmatprep.subr.mxu0 0.0
        %1508 = vmatpush1.msra.mxu0 0.0
        %1509 = vmatprep.subr.mxu0 0.0
        %1510 = vmatpush1.msra.mxu0 0.0
        %1511 = vmatprep.subr.mxu0 0.0
        %1512 = vmatpush1.msra.mxu0 0.0
        %1513 = vmatprep.subr.mxu0 0.0
        %1514 = vmatpush1.msra.mxu0 0.0
        %1515 = vmatprep.subr.mxu0 0.0
        %1516 = vmatpush1.msra.mxu0 0.0
        %1517 = vmatprep.subr.mxu0 0.0
        %1518 = vmatpush1.msra.mxu0 0.0
        %1519 = vmatprep.subr.mxu0 0.0
        %1520 = vmatpush1.msra.mxu0 0.0
        %1521 = vmatprep.subr.mxu0 0.0
        %1522 = vmatpush1.msra.mxu0 0.0
        %1523 = vmatprep.subr.mxu0 0.0
        %1524 = vmatpush1.msra.mxu0 0.0
        %1525 = vmatprep.subr.mxu0 0.0
        %1526 = vmatpush1.msra.mxu0 0.0
        %1527 = vmatprep.subr.mxu0 0.0
        %1528 = vmatpush1.msra.mxu0 0.0
        %1529 = vmatprep.subr.mxu0 0.0
        %1530 = vmatpush1.msra.mxu0 0.0
        %1531 = vmatprep.subr.mxu0 0.0
        %1532 = vmatpush1.msra.mxu0 0.0
        %1533 = vmatprep.subr.mxu0 0.0
        %1534 = vmatpush1.msra.mxu0 0.0
        %1535 = vmatprep.subr.mxu0 0.0
        %1536 = vmatpush1.msra.mxu0 0.0
        %1537 = vmatprep.subr.mxu0 0.0
        %1538 = vmatpush1.msra.mxu0 0.0
        %1539 = vmatprep.subr.mxu0 0.0
        %1540 = vmatpush1.msra.mxu0 0.0
        %1541 = vmatprep.mubr.f32.mxu0 0.0
        %1542 = vmatmul.mubr.f32.gmra.mrb[0].mxu0 %v1472
        %v1543 = vpop.f32.mrb[0].mxu0
        %v1544 = vadd.f32 0.0, %v1543
        %v1545 = vpop.f32.mrb[0].mxu0
        %1546 = vmatprep.mubr.f32.mxu0 0.0
        %1547 = vmatmul.mubr.f32.gmra.mrb[0].mxu0 %v1475
        %v1548 = vpop.f32.mrb[0].mxu0
        %v1549 = vadd.f32 0.0, %v1548
        %v1550 = vpop.f32.mrb[0].mxu0
        %1551 = vdwg.mxu0
        %v1553 = vsel %vm1061, %v1254, 0
        %v1556 = vsel %vm1061, %v1259, 0
        %1558 = vmatprep.subr.mxu0 0.0
        %1559 = vmatpush1.msra.mxu0 %v1262
        %1560 = vmatprep.subr.mxu0 0.0
        %1561 = vmatpush1.msra.mxu0 %v1263
        %1562 = vmatprep.subr.mxu0 0.0
        %1563 = vmatpush1.msra.mxu0 0.0
        %1564 = vmatprep.subr.mxu0 0.0
        %1565 = vmatpush1.msra.mxu0 0.0
        %1566 = vmatprep.subr.mxu0 0.0
        %1567 = vmatpush1.msra.mxu0 0.0
        %1568 = vmatprep.subr.mxu0 0.0
        %1569 = vmatpush1.msra.mxu0 0.0
        %1570 = vmatprep.subr.mxu0 0.0
        %1571 = vmatpush1.msra.mxu0 0.0
        %1572 = vmatprep.subr.mxu0 0.0
        %1573 = vmatpush1.msra.mxu0 0.0
        %1574 = vmatprep.subr.mxu0 0.0
        %1575 = vmatpush1.msra.mxu0 0.0
        %1576 = vmatprep.subr.mxu0 0.0
        %1577 = vmatpush1.msra.mxu0 0.0
        %1578 = vmatprep.subr.mxu0 0.0
        %1579 = vmatpush1.msra.mxu0 0.0
        %1580 = vmatprep.subr.mxu0 0.0
        %1581 = vmatpush1.msra.mxu0 0.0
        %1582 = vmatprep.subr.mxu0 0.0
        %1583 = vmatpush1.msra.mxu0 0.0
        %1584 = vmatprep.subr.mxu0 0.0
        %1585 = vmatpush1.msra.mxu0 0.0
        %1586 = vmatprep.subr.mxu0 0.0
        %1587 = vmatpush1.msra.mxu0 0.0
        %1588 = vmatprep.subr.mxu0 0.0
        %1589 = vmatpush1.msra.mxu0 0.0
        %1590 = vmatprep.subr.mxu0 0.0
        %1591 = vmatpush1.msra.mxu0 0.0
        %1592 = vmatprep.subr.mxu0 0.0
        %1593 = vmatpush1.msra.mxu0 0.0
        %1594 = vmatprep.subr.mxu0 0.0
        %1595 = vmatpush1.msra.mxu0 0.0
        %1596 = vmatprep.subr.mxu0 0.0
        %1597 = vmatpush1.msra.mxu0 0.0
        %1598 = vmatprep.subr.mxu0 0.0
        %1599 = vmatpush1.msra.mxu0 0.0
        %1600 = vmatprep.subr.mxu0 0.0
        %1601 = vmatpush1.msra.mxu0 0.0
        %1602 = vmatprep.subr.mxu0 0.0
        %1603 = vmatpush1.msra.mxu0 0.0
        %1604 = vmatprep.subr.mxu0 0.0
        %1605 = vmatpush1.msra.mxu0 0.0
        %1606 = vmatprep.subr.mxu0 0.0
        %1607 = vmatpush1.msra.mxu0 0.0
        %1608 = vmatprep.subr.mxu0 0.0
        %1609 = vmatpush1.msra.mxu0 0.0
        %1610 = vmatprep.subr.mxu0 0.0
        %1611 = vmatpush1.msra.mxu0 0.0
        %1612 = vmatprep.subr.mxu0 0.0
        %1613 = vmatpush1.msra.mxu0 0.0
        %1614 = vmatprep.subr.mxu0 0.0
        %1615 = vmatpush1.msra.mxu0 0.0
        %1616 = vmatprep.subr.mxu0 0.0
        %1617 = vmatpush1.msra.mxu0 0.0
        %1618 = vmatprep.subr.mxu0 0.0
        %1619 = vmatpush1.msra.mxu0 0.0
        %1620 = vmatprep.subr.mxu0 0.0
        %1621 = vmatpush1.msra.mxu0 0.0
        %1622 = vmatprep.mubr.f32.mxu0 0.0
        %1623 = vmatmul.mubr.f32.gmra.mrb[0].mxu0 %v1553
        %v1624 = vpop.f32.mrb[0].mxu0
        %v1625 = vadd.f32 %v1544, %v1624
        %v1626 = vpop.f32.mrb[0].mxu0
        %1627 = vmatprep.mubr.f32.mxu0 0.0
        %1628 = vmatmul.mubr.f32.gmra.mrb[0].mxu0 %v1556
        %v1629 = vpop.f32.mrb[0].mxu0
        %v1630 = vadd.f32 %v1549, %v1629
        %v1631 = vpop.f32.mrb[0].mxu0
        %1632 = vdwg.mxu0
        %v1633 = vadd.f32 %v926, %v1625
        %v1634 = vadd.f32 %v927, %v1630
        %v1635 = vld [vmem:[%s7 + $0x2] sm:$0x1]
        %v1636 = vld [vmem:[%s7 + $0x3] sm:$0x1]
        %v1637 = vsel %vm639, %v1633, 0.0
        %1638 = vadd.xlane.f32.xlu0 %v1637
        %v1639 = vpop.xlane.xlu0 %1638
        %v1640 = vsel %vm933, %v1634, 0.0
        %1641 = vadd.xlane.f32.xlu0 %v1640
        %v1642 = vpop.xlane.xlu0 %1641
        %v1643 = vmul.f32 %v1639, %v937
        %v1644 = vmul.f32 %v1642, %v937
        %v1645 = vsub.f32 %v1633, %v1643
        %v1646 = vsub.f32 %v1634, %v1644
        %v1647 = vmul.f32 %v1645, %v1645
        %v1648 = vmul.f32 %v1646, %v1646
        %v1649 = vsel %vm639, %v1647, 0.0
        %1650 = vadd.xlane.f32.xlu0 %v1649
        %v1651 = vpop.xlane.xlu0 %1650
        %v1652 = vsel %vm933, %v1648, 0.0
        %1653 = vadd.xlane.f32.xlu0 %v1652
        %v1654 = vpop.xlane.xlu0 %1653
        %v1655 = vmul.f32 %v1651, %v937
        %v1656 = vmul.f32 %v1654, %v937
        %v1657 = vadd.f32 %v1655, 1e-05
        %v1658 = vadd.f32 %v1656, 1e-05
        %v1659 = vrsqrt.pop %v1657
        %v1660 = vrsqrt.pop %v1658
        %v1661 = vmul.f32 %v1645, %v1659
        %v1662 = vmul.f32 %v1646, %v1660
        %v1663 = vlaneseq
        %v1664 = vshrl.u32 %v1663, 7
        %v1665 = vsub.s32 0, %v1664
        %v1666 = vrot.slane %v1635, %v1665
        %v1667 = vmul.f32 %v1661, %v1666
        %v1668 = vmul.f32 %v1662, %v1666
        %v1669 = vlaneseq
        %v1670 = vshrl.u32 %v1669, 7
        %v1671 = vsub.s32 0, %v1670
        %v1672 = vrot.slane %v1636, %v1671
        %v1673 = vadd.f32 %v1667, %v1672
        %v1674 = vadd.f32 %v1668, %v1672
        %v1675 = vld [vmem:[%s10] sm:$0xff]
        %v1676 = vld [vmem:[%s10 + $0x8] sm:$0xff]
        %v1677 = vld [vmem:[%s10 + $0x10] sm:$0xff]
        %v1678 = vld [vmem:[%s10 + $0x18] sm:$0xff]
        %v1680 = vsel %vm639, %v1673, 0
        %v1683 = vsel %vm639, %v1674, 0
        %1685 = vmatprep.subr.mxu0 0.0
        %1686 = vmatpush1.msra.mxu0 %v1675
        %1687 = vmatprep.subr.mxu0 0.0
        %1688 = vmatpush1.msra.mxu0 %v1676
        %1689 = vmatprep.subr.mxu0 0.0
        %1690 = vmatpush1.msra.mxu0 %v1677
        %1691 = vmatprep.subr.mxu0 0.0
        %1692 = vmatpush1.msra.mxu0 %v1678
        %1693 = vmatprep.subr.mxu0 0.0
        %1694 = vmatpush1.msra.mxu0 0.0
        %1695 = vmatprep.subr.mxu0 0.0
        %1696 = vmatpush1.msra.mxu0 0.0
        %1697 = vmatprep.subr.mxu0 0.0
        %1698 = vmatpush1.msra.mxu0 0.0
        %1699 = vmatprep.subr.mxu0 0.0
        %1700 = vmatpush1.msra.mxu0 0.0
        %1701 = vmatprep.subr.mxu0 0.0
        %1702 = vmatpush1.msra.mxu0 0.0
        %1703 = vmatprep.subr.mxu0 0.0
        %1704 = vmatpush1.msra.mxu0 0.0
        %1705 = vmatprep.subr.mxu0 0.0
        %1706 = vmatpush1.msra.mxu0 0.0
        %1707 = vmatprep.subr.mxu0 0.0
        %1708 = vmatpush1.msra.mxu0 0.0
        %1709 = vmatprep.subr.mxu0 0.0
        %1710 = vmatpush1.msra.mxu0 0.0
        %1711 = vmatprep.subr.mxu0 0.0
        %1712 = vmatpush1.msra.mxu0 0.0
        %1713 = vmatprep.subr.mxu0 0.0
        %1714 = vmatpush1.msra.mxu0 0.0
        %1715 = vmatprep.subr.mxu0 0.0
        %1716 = vmatpush1.msra.mxu0 0.0
        %1717 = vmatprep.subr.mxu0 0.0
        %1718 = vmatpush1.msra.mxu0 0.0
        %1719 = vmatprep.subr.mxu0 0.0
        %1720 = vmatpush1.msra.mxu0 0.0
        %1721 = vmatprep.subr.mxu0 0.0
        %1722 = vmatpush1.msra.mxu0 0.0
        %1723 = vmatprep.subr.mxu0 0.0
        %1724 = vmatpush1.msra.mxu0 0.0
        %1725 = vmatprep.subr.mxu0 0.0
        %1726 = vmatpush1.msra.mxu0 0.0
        %1727 = vmatprep.subr.mxu0 0.0
        %1728 = vmatpush1.msra.mxu0 0.0
        %1729 = vmatprep.subr.mxu0 0.0
        %1730 = vmatpush1.msra.mxu0 0.0
        %1731 = vmatprep.subr.mxu0 0.0
        %1732 = vmatpush1.msra.mxu0 0.0
        %1733 = vmatprep.subr.mxu0 0.0
        %1734 = vmatpush1.msra.mxu0 0.0
        %1735 = vmatprep.subr.mxu0 0.0
        %1736 = vmatpush1.msra.mxu0 0.0
        %1737 = vmatprep.subr.mxu0 0.0
        %1738 = vmatpush1.msra.mxu0 0.0
        %1739 = vmatprep.subr.mxu0 0.0
        %1740 = vmatpush1.msra.mxu0 0.0
        %1741 = vmatprep.subr.mxu0 0.0
        %1742 = vmatpush1.msra.mxu0 0.0
        %1743 = vmatprep.subr.mxu0 0.0
        %1744 = vmatpush1.msra.mxu0 0.0
        %1745 = vmatprep.subr.mxu0 0.0
        %1746 = vmatpush1.msra.mxu0 0.0
        %1747 = vmatprep.subr.mxu0 0.0
        %1748 = vmatpush1.msra.mxu0 0.0
        %1749 = vmatprep.mubr.f32.mxu0 0.0
        %1750 = vmatmul.mubr.f32.gmra.mrb[0].mxu0 %v1680
        %v1751 = vpop.f32.mrb[0].mxu0
        %v1752 = vadd.f32 0.0, %v1751
        %v1753 = vpop.f32.mrb[0].mxu0
        %1754 = vmatprep.mubr.f32.mxu0 0.0
        %1755 = vmatmul.mubr.f32.gmra.mrb[0].mxu0 %v1683
        %v1756 = vpop.f32.mrb[0].mxu0
        %v1757 = vadd.f32 0.0, %v1756
        %v1758 = vpop.f32.mrb[0].mxu0
        %1759 = vdwg.mxu0
        %v1760 = vmul.f32 %v1752, %v1752
        %v1761 = vmul.f32 %v1757, %v1757
        %v1762 = vmul.f32 %v1752, %v1760
        %v1763 = vmul.f32 %v1757, %v1761
        %v1764 = vmul.f32 %v1762, 0.044715
        %v1765 = vmul.f32 %v1763, 0.044715
        %v1766 = vadd.f32 %v1752, %v1764
        %v1767 = vadd.f32 %v1757, %v1765
        %v1768 = vmul.f32 %v1766, 0.7978846
        %v1769 = vmul.f32 %v1767, 0.7978846
        %v1770 = vtanh.pop %v1768
        %v1771 = vtanh.pop %v1769
        %v1772 = vadd.f32 %v1770, 1.0
        %v1773 = vadd.f32 %v1771, 1.0
        %v1774 = vmul.f32 %v1772, 0.5
        %v1775 = vmul.f32 %v1773, 0.5
        %v1776 = vmul.f32 %v1752, %v1774
        %v1777 = vmul.f32 %v1757, %v1775
        %v1778 = vld [vmem:[%s11] sm:$0xff]
        %v1779 = vld [vmem:[%s11 + $0x8] sm:$0xff]
        %v1780 = vld [vmem:[%s11 + $0x10] sm:$0xff]
        %v1781 = vld [vmem:[%s11 + $0x18] sm:$0xff]
        %v1782 = vld [vmem:[%s11 + $0x20] sm:$0xff]
        %v1783 = vld [vmem:[%s11 + $0x28] sm:$0xff]
        %v1784 = vld [vmem:[%s11 + $0x30] sm:$0xff]
        %v1785 = vld [vmem:[%s11 + $0x38] sm:$0xff]
        %v1786 = vld [vmem:[%s11 + $0x40] sm:$0xff]
        %v1787 = vld [vmem:[%s11 + $0x48] sm:$0xff]
        %v1788 = vld [vmem:[%s11 + $0x50] sm:$0xff]
        %v1789 = vld [vmem:[%s11 + $0x58] sm:$0xff]
        %v1790 = vld [vmem:[%s11 + $0x60] sm:$0xff]
        %v1791 = vld [vmem:[%s11 + $0x68] sm:$0xff]
        %v1792 = vld [vmem:[%s11 + $0x70] sm:$0xff]
        %v1793 = vld [vmem:[%s11 + $0x78] sm:$0xff]
        %1794 = vmatprep.subr.mxu0 0.0
        %1795 = vmatpush1.msra.mxu0 %v1778
        %1796 = vmatprep.subr.mxu0 0.0
        %1797 = vmatpush1.msra.mxu0 %v1779
        %1798 = vmatprep.subr.mxu0 0.0
        %1799 = vmatpush1.msra.mxu0 %v1780
        %1800 = vmatprep.subr.mxu0 0.0
        %1801 = vmatpush1.msra.mxu0 %v1781
        %1802 = vmatprep.subr.mxu0 0.0
        %1803 = vmatpush1.msra.mxu0 %v1782
        %1804 = vmatprep.subr.mxu0 0.0
        %1805 = vmatpush1.msra.mxu0 %v1783
        %1806 = vmatprep.subr.mxu0 0.0
        %1807 = vmatpush1.msra.mxu0 %v1784
        %1808 = vmatprep.subr.mxu0 0.0
        %1809 = vmatpush1.msra.mxu0 %v1785
        %1810 = vmatprep.subr.mxu0 0.0
        %1811 = vmatpush1.msra.mxu0 %v1786
        %1812 = vmatprep.subr.mxu0 0.0
        %1813 = vmatpush1.msra.mxu0 %v1787
        %1814 = vmatprep.subr.mxu0 0.0
        %1815 = vmatpush1.msra.mxu0 %v1788
        %1816 = vmatprep.subr.mxu0 0.0
        %1817 = vmatpush1.msra.mxu0 %v1789
        %1818 = vmatprep.subr.mxu0 0.0
        %1819 = vmatpush1.msra.mxu0 %v1790
        %1820 = vmatprep.subr.mxu0 0.0
        %1821 = vmatpush1.msra.mxu0 %v1791
        %1822 = vmatprep.subr.mxu0 0.0
        %1823 = vmatpush1.msra.mxu0 %v1792
        %1824 = vmatprep.subr.mxu0 0.0
        %1825 = vmatpush1.msra.mxu0 %v1793
        %1826 = vmatprep.subr.mxu0 0.0
        %1827 = vmatpush1.msra.mxu0 0.0
        %1828 = vmatprep.subr.mxu0 0.0
        %1829 = vmatpush1.msra.mxu0 0.0
        %1830 = vmatprep.subr.mxu0 0.0
        %1831 = vmatpush1.msra.mxu0 0.0
        %1832 = vmatprep.subr.mxu0 0.0
        %1833 = vmatpush1.msra.mxu0 0.0
        %1834 = vmatprep.subr.mxu0 0.0
        %1835 = vmatpush1.msra.mxu0 0.0
        %1836 = vmatprep.subr.mxu0 0.0
        %1837 = vmatpush1.msra.mxu0 0.0
        %1838 = vmatprep.subr.mxu0 0.0
        %1839 = vmatpush1.msra.mxu0 0.0
        %1840 = vmatprep.subr.mxu0 0.0
        %1841 = vmatpush1.msra.mxu0 0.0
        %1842 = vmatprep.subr.mxu0 0.0
        %1843 = vmatpush1.msra.mxu0 0.0
        %1844 = vmatprep.subr.mxu0 0.0
        %1845 = vmatpush1.msra.mxu0 0.0
        %1846 = vmatprep.subr.mxu0 0.0
        %1847 = vmatpush1.msra.mxu0 0.0
        %1848 = vmatprep.subr.mxu0 0.0
        %1849 = vmatpush1.msra.mxu0 0.0
        %1850 = vmatprep.subr.mxu0 0.0
        %1851 = vmatpush1.msra.mxu0 0.0
        %1852 = vmatprep.subr.mxu0 0.0
        %1853 = vmatpush1.msra.mxu0 0.0
        %1854 = vmatprep.subr.mxu0 0.0
        %1855 = vmatpush1.msra.mxu0 0.0
        %1856 = vmatprep.subr.mxu0 0.0
        %1857 = vmatpush1.msra.mxu0 0.0
        %1858 = vmatprep.mubr.f32.mxu0 0.0
        %1859 = vmatmul.mubr.f32.gmra.mrb[0].mxu0 %v1776
        %v1860 = vpop.f32.mrb[0].mxu0
        %v1861 = vadd.f32 0.0, %v1860
        %v1862 = vpop.f32.mrb[0].mxu0
        %1863 = vmatprep.mubr.f32.mxu0 0.0
        %1864 = vmatmul.mubr.f32.gmra.mrb[0].mxu0 %v1777
        %v1865 = vpop.f32.mrb[0].mxu0
        %v1866 = vadd.f32 0.0, %v1865
        %v1867 = vpop.f32.mrb[0].mxu0
        %1868 = vdwg.mxu0
        %v1869 = vadd.f32 %v1633, %v1861
        %v1870 = vadd.f32 %v1634, %v1866
        %v1871 = vld [vmem:[%s6 + $0x4] sm:$0x1]
        %v1872 = vlaneseq
        %v1873 = vshrl.u32 %v1872, 7
        %v1874 = vsub.s32 0, %v1873
        %v1875 = vrot.slane %v1871, %v1874
        %v1876 = vmul.f32 %v842, %v1875
        %v1877 = vld [vmem:[%s6 + $0x5] sm:$0x1]
        %v1878 = vlaneseq
        %v1879 = vshrl.u32 %v1878, 7
        %v1880 = vsub.s32 0, %v1879
        %v1881 = vrot.slane %v1877, %v1880
        %v1882 = vmul.f32 %v842, %v1881
        %v1883 = vld [vmem:[%s6 + $0x6] sm:$0x1]
        %v1884 = vlaneseq
        %v1885 = vshrl.u32 %v1884, 7
        %v1886 = vsub.s32 0, %v1885
        %v1887 = vrot.slane %v1883, %v1886
        %v1888 = vmul.f32 %v842, %v1887
        %v1889 = vld [vmem:[%s6 + $0x7] sm:$0x1]
        %v1890 = vlaneseq
        %v1891 = vshrl.u32 %v1890, 7
        %v1892 = vsub.s32 0, %v1891
        %v1893 = vrot.slane %v1889, %v1892
        %v1894 = vmul.f32 %v842, %v1893
        %v1896 = vsel %vm639, %v1876, 0
        %v1899 = vsel %vm639, %v1882, 0
        %v1902 = vsel %vm639, %v1888, 0
        %v1905 = vsel %vm639, %v1894, 0
        %v1908 = vsel %vm639, %v842, 0
        %1910 = vmatprep.subr.mxu0 0.0
        %1911 = vmatpush1.xpose.msra.mxu0 %v1908
        %1912 = vmatprep.subr.mxu0 0.0
        %1913 = vmatpush1.xpose.msra.mxu0 0.0
        %1914 = vmatprep.subr.mxu0 0.0
        %1915 = vmatpush1.xpose.msra.mxu0 0.0
        %1916 = vmatprep.subr.mxu0 0.0
        %1917 = vmatpush1.xpose.msra.mxu0 0.0
        %1918 = vmatprep.subr.mxu0 0.0
        %1919 = vmatpush1.xpose.msra.mxu0 0.0
        %1920 = vmatprep.subr.mxu0 0.0
        %1921 = vmatpush1.xpose.msra.mxu0 0.0
        %1922 = vmatprep.subr.mxu0 0.0
        %1923 = vmatpush1.xpose.msra.mxu0 0.0
        %1924 = vmatprep.subr.mxu0 0.0
        %1925 = vmatpush1.xpose.msra.mxu0 0.0
        %1926 = vmatprep.subr.mxu0 0.0
        %1927 = vmatpush1.xpose.msra.mxu0 0.0
        %1928 = vmatprep.subr.mxu0 0.0
        %1929 = vmatpush1.xpose.msra.mxu0 0.0
        %1930 = vmatprep.subr.mxu0 0.0
        %1931 = vmatpush1.xpose.msra.mxu0 0.0
        %1932 = vmatprep.subr.mxu0 0.0
        %1933 = vmatpush1.xpose.msra.mxu0 0.0
        %1934 = vmatprep.subr.mxu0 0.0
        %1935 = vmatpush1.xpose.msra.mxu0 0.0
        %1936 = vmatprep.subr.mxu0 0.0
        %1937 = vmatpush1.xpose.msra.mxu0 0.0
        %1938 = vmatprep.subr.mxu0 0.0
        %1939 = vmatpush1.xpose.msra.mxu0 0.0
        %1940 = vmatprep.subr.mxu0 0.0
        %1941 = vmatpush1.xpose.msra.mxu0 0.0
        %1942 = vmatprep.subr.mxu0 0.0
        %1943 = vmatpush1.xpose.msra.mxu0 0.0
        %1944 = vmatprep.subr.mxu0 0.0
        %1945 = vmatpush1.xpose.msra.mxu0 0.0
        %1946 = vmatprep.subr.mxu0 0.0
        %1947 = vmatpush1.xpose.msra.mxu0 0.0
        %1948 = vmatprep.subr.mxu0 0.0
        %1949 = vmatpush1.xpose.msra.mxu0 0.0
        %1950 = vmatprep.subr.mxu0 0.0
        %1951 = vmatpush1.xpose.msra.mxu0 0.0
        %1952 = vmatprep.subr.mxu0 0.0
        %1953 = vmatpush1.xpose.msra.mxu0 0.0
        %1954 = vmatprep.subr.mxu0 0.0
        %1955 = vmatpush1.xpose.msra.mxu0 0.0
        %1956 = vmatprep.subr.mxu0 0.0
        %1957 = vmatpush1.xpose.msra.mxu0 0.0
        %1958 = vmatprep.subr.mxu0 0.0
        %1959 = vmatpush1.xpose.msra.mxu0 0.0
        %1960 = vmatprep.subr.mxu0 0.0
        %1961 = vmatpush1.xpose.msra.mxu0 0.0
        %1962 = vmatprep.subr.mxu0 0.0
        %1963 = vmatpush1.xpose.msra.mxu0 0.0
        %1964 = vmatprep.subr.mxu0 0.0
        %1965 = vmatpush1.xpose.msra.mxu0 0.0
        %1966 = vmatprep.subr.mxu0 0.0
        %1967 = vmatpush1.xpose.msra.mxu0 0.0
        %1968 = vmatprep.subr.mxu0 0.0
        %1969 = vmatpush1.xpose.msra.mxu0 0.0
        %1970 = vmatprep.subr.mxu0 0.0
        %1971 = vmatpush1.xpose.msra.mxu0 0.0
        %1972 = vmatprep.subr.mxu0 0.0
        %1973 = vmatpush1.xpose.msra.mxu0 0.0
        %1974 = vmatprep.mubr.f32.mxu0 0.0
        %1975 = vmatmul.mubr.f32.gmra.mrb[0].mxu0 %v1896
        %v1976 = vpop.f32.mrb[0].mxu0
        %v1977 = vadd.f32 0.0, %v1976
        %v1978 = vpop.f32.mrb[0].mxu0
        %1979 = vmatprep.mubr.f32.mxu0 0.0
        %1980 = vmatmul.mubr.f32.gmra.mrb[0].mxu0 %v1899
        %v1981 = vpop.f32.mrb[0].mxu0
        %v1982 = vadd.f32 0.0, %v1981
        %v1983 = vpop.f32.mrb[0].mxu0
        %1984 = vmatprep.mubr.f32.mxu0 0.0
        %1985 = vmatmul.mubr.f32.gmra.mrb[0].mxu0 %v1902
        %v1986 = vpop.f32.mrb[0].mxu0
        %v1987 = vadd.f32 0.0, %v1986
        %v1988 = vpop.f32.mrb[0].mxu0
        %1989 = vmatprep.mubr.f32.mxu0 0.0
        %1990 = vmatmul.mubr.f32.gmra.mrb[0].mxu0 %v1905
        %v1991 = vpop.f32.mrb[0].mxu0
        %v1992 = vadd.f32 0.0, %v1991
        %v1993 = vpop.f32.mrb[0].mxu0
        %1994 = vdwg.mxu0
        %vm1995 = vcmp.gt.f32.partialorder %v1977, 0.0
        %vm1996 = vcmp.gt.f32.partialorder %v1982, 0.0
        %vm1997 = vcmp.gt.f32.partialorder %v1987, 0.0
        %vm1998 = vcmp.gt.f32.partialorder %v1992, 0.0
        %v1999 = vmul.f32 %v1977, 0.2
        %v2000 = vmul.f32 %v1982, 0.2
        %v2001 = vmul.f32 %v1987, 0.2
        %v2002 = vmul.f32 %v1992, 0.2
        %v2003 = vsel %vm1995, %v1977, %v1999
        %v2004 = vsel %vm1996, %v1982, %v2000
        %v2005 = vsel %vm1997, %v1987, %v2001
        %v2006 = vsel %vm1998, %v1992, %v2002
        %v2007 = vsel %vm752, %v2003, -9e+15
        %v2008 = vsel %vm754, %v2004, %v2007
        %v2009 = vsel %vm756, %v2005, %v2008
        %v2010 = vsel %vm758, %v2006, %v2009
        %v2011 = vsel %vm760, %v2010, -inf
        %2012 = vmax.xlane.f32.xlu0 %v2011
        %v2013 = vpop.xlane.xlu0 %2012
        %v2014 = vsub.f32 %v2010, %v2013
        %v2015 = vmul.f32 %v2014, 1.442695
        %v2016 = vpow.pop %v2015
        %v2017 = vsel %vm760, %v2016, 0.0
        %2018 = vadd.xlane.f32.xlu0 %v2017
        %v2019 = vpop.xlane.xlu0 %2018
        %v2020 = vrcp.pop %v2019
        %v2021 = vmul.f32 %v2016, %v2020
        %v2023 = vsel %vm760, %v2021, 0
        %2025 = vmatprep.subr.mxu0 0.0
        %2026 = vmatpush1.msra.mxu0 %v842
        %2027 = vmatprep.subr.mxu0 0.0
        %2028 = vmatpush1.msra.mxu0 0.0
        %2029 = vmatprep.subr.mxu0 0.0
        %2030 = vmatpush1.msra.mxu0 0.0
        %2031 = vmatprep.subr.mxu0 0.0
        %2032 = vmatpush1.msra.mxu0 0.0
        %2033 = vmatprep.subr.mxu0 0.0
        %2034 = vmatpush1.msra.mxu0 0.0
        %2035 = vmatprep.subr.mxu0 0.0
        %2036 = vmatpush1.msra.mxu0 0.0
        %2037 = vmatprep.subr.mxu0 0.0
        %2038 = vmatpush1.msra.mxu0 0.0
        %2039 = vmatprep.subr.mxu0 0.0
        %2040 = vmatpush1.msra.mxu0 0.0
        %2041 = vmatprep.subr.mxu0 0.0
        %2042 = vmatpush1.msra.mxu0 0.0
        %2043 = vmatprep.subr.mxu0 0.0
        %2044 = vmatpush1.msra.mxu0 0.0
        %2045 = vmatprep.subr.mxu0 0.0
        %2046 = vmatpush1.msra.mxu0 0.0
        %2047 = vmatprep.subr.mxu0 0.0
        %2048 = vmatpush1.msra.mxu0 0.0
        %2049 = vmatprep.subr.mxu0 0.0
        %2050 = vmatpush1.msra.mxu0 0.0
        %2051 = vmatprep.subr.mxu0 0.0
        %2052 = vmatpush1.msra.mxu0 0.0
        %2053 = vmatprep.subr.mxu0 0.0
        %2054 = vmatpush1.msra.mxu0 0.0
        %2055 = vmatprep.subr.mxu0 0.0
        %2056 = vmatpush1.msra.mxu0 0.0
        %2057 = vmatprep.subr.mxu0 0.0
        %2058 = vmatpush1.msra.mxu0 0.0
        %2059 = vmatprep.subr.mxu0 0.0
        %2060 = vmatpush1.msra.mxu0 0.0
        %2061 = vmatprep.subr.mxu0 0.0
        %2062 = vmatpush1.msra.mxu0 0.0
        %2063 = vmatprep.subr.mxu0 0.0
        %2064 = vmatpush1.msra.mxu0 0.0
        %2065 = vmatprep.subr.mxu0 0.0
        %2066 = vmatpush1.msra.mxu0 0.0
        %2067 = vmatprep.subr.mxu0 0.0
        %2068 = vmatpush1.msra.mxu0 0.0
        %2069 = vmatprep.subr.mxu0 0.0
        %2070 = vmatpush1.msra.mxu0 0.0
        %2071 = vmatprep.subr.mxu0 0.0
        %2072 = vmatpush1.msra.mxu0 0.0
        %2073 = vmatprep.subr.mxu0 0.0
        %2074 = vmatpush1.msra.mxu0 0.0
        %2075 = vmatprep.subr.mxu0 0.0
        %2076 = vmatpush1.msra.mxu0 0.0
        %2077 = vmatprep.subr.mxu0 0.0
        %2078 = vmatpush1.msra.mxu0 0.0
        %2079 = vmatprep.subr.mxu0 0.0
        %2080 = vmatpush1.msra.mxu0 0.0
        %2081 = vmatprep.subr.mxu0 0.0
        %2082 = vmatpush1.msra.mxu0 0.0
        %2083 = vmatprep.subr.mxu0 0.0
        %2084 = vmatpush1.msra.mxu0 0.0
        %2085 = vmatprep.subr.mxu0 0.0
        %2086 = vmatpush1.msra.mxu0 0.0
        %2087 = vmatprep.subr.mxu0 0.0
        %2088 = vmatpush1.msra.mxu0 0.0
        %2089 = vmatprep.mubr.f32.mxu0 0.0
        %2090 = vmatmul.mubr.f32.gmra.mrb[0].mxu0 %v2023
        %v2091 = vpop.f32.mrb[0].mxu0
        %v2092 = vadd.f32 0.0, %v2091
        %v2093 = vpop.f32.mrb[0].mxu0
        %2094 = vdwg.mxu0
        %2095 = vmatprep.subr.mxu0 0.0
        %2096 = vmatpush1.msra.mxu0 %v2092
        %2097 = vmatprep.subr.mxu0 0.0
        %2098 = vmatpush1.msra.mxu0 0.0
        %2099 = vmatprep.subr.mxu0 0.0
        %2100 = vmatpush1.msra.mxu0 0.0
        %2101 = vmatprep.subr.mxu0 0.0
        %2102 = vmatpush1.msra.mxu0 0.0
        %2103 = vmatprep.subr.mxu0 0.0
        %2104 = vmatpush1.msra.mxu0 0.0
        %2105 = vmatprep.subr.mxu0 0.0
        %2106 = vmatpush1.msra.mxu0 0.0
        %2107 = vmatprep.subr.mxu0 0.0
        %2108 = vmatpush1.msra.mxu0 0.0
        %2109 = vmatprep.subr.mxu0 0.0
        %2110 = vmatpush1.msra.mxu0 0.0
        %2111 = vmatprep.subr.mxu0 0.0
        %2112 = vmatpush1.msra.mxu0 0.0
        %2113 = vmatprep.subr.mxu0 0.0
        %2114 = vmatpush1.msra.mxu0 0.0
        %2115 = vmatprep.subr.mxu0 0.0
        %2116 = vmatpush1.msra.mxu0 0.0
        %2117 = vmatprep.subr.mxu0 0.0
        %2118 = vmatpush1.msra.mxu0 0.0
        %2119 = vmatprep.subr.mxu0 0.0
        %2120 = vmatpush1.msra.mxu0 0.0
        %2121 = vmatprep.subr.mxu0 0.0
        %2122 = vmatpush1.msra.mxu0 0.0
        %2123 = vmatprep.subr.mxu0 0.0
        %2124 = vmatpush1.msra.mxu0 0.0
        %2125 = vmatprep.subr.mxu0 0.0
        %2126 = vmatpush1.msra.mxu0 0.0
        %2127 = vmatprep.subr.mxu0 0.0
        %2128 = vmatpush1.msra.mxu0 0.0
        %2129 = vmatprep.subr.mxu0 0.0
        %2130 = vmatpush1.msra.mxu0 0.0
        %2131 = vmatprep.subr.mxu0 0.0
        %2132 = vmatpush1.msra.mxu0 0.0
        %2133 = vmatprep.subr.mxu0 0.0
        %2134 = vmatpush1.msra.mxu0 0.0
        %2135 = vmatprep.subr.mxu0 0.0
        %2136 = vmatpush1.msra.mxu0 0.0
        %2137 = vmatprep.subr.mxu0 0.0
        %2138 = vmatpush1.msra.mxu0 0.0
        %2139 = vmatprep.subr.mxu0 0.0
        %2140 = vmatpush1.msra.mxu0 0.0
        %2141 = vmatprep.subr.mxu0 0.0
        %2142 = vmatpush1.msra.mxu0 0.0
        %2143 = vmatprep.subr.mxu0 0.0
        %2144 = vmatpush1.msra.mxu0 0.0
        %2145 = vmatprep.subr.mxu0 0.0
        %2146 = vmatpush1.msra.mxu0 0.0
        %2147 = vmatprep.subr.mxu0 0.0
        %2148 = vmatpush1.msra.mxu0 0.0
        %2149 = vmatprep.subr.mxu0 0.0
        %2150 = vmatpush1.msra.mxu0 0.0
        %2151 = vmatprep.subr.mxu0 0.0
        %2152 = vmatpush1.msra.mxu0 0.0
        %2153 = vmatprep.subr.mxu0 0.0
        %2154 = vmatpush1.msra.mxu0 0.0
        %2155 = vmatprep.subr.mxu0 0.0
        %2156 = vmatpush1.msra.mxu0 0.0
        %2157 = vmatprep.subr.mxu0 0.0
        %2158 = vmatpush1.msra.mxu0 0.0
        %2159 = vmatprep.mubr.f32.mxu0 0.0
        %2160 = vmatmul.mubr.f32.gmra.mrb[0].mxu0 %v846
        %v2161 = vpop.f32.mrb[0].mxu0
        %v2162 = vadd.f32 0.0, %v2161
        %v2163 = vpop.f32.mrb[0].mxu0
        %2164 = vmatprep.mubr.f32.mxu0 0.0
        %2165 = vmatmul.mubr.f32.gmra.mrb[0].mxu0 %v849
        %v2166 = vpop.f32.mrb[0].mxu0
        %v2167 = vadd.f32 0.0, %v2166
        %v2168 = vpop.f32.mrb[0].mxu0
        %2169 = vdwg.mxu0
        %v2170 = vadd.f32 %v1869, %v2162
        %v2171 = vadd.f32 %v1870, %v2167
        %v2172 = vld [vmem:[%s7 + $0x4] sm:$0x1]
        %v2173 = vld [vmem:[%s7 + $0x5] sm:$0x1]
        %v2174 = vsel %vm639, %v2170, 0.0
        %2175 = vadd.xlane.f32.xlu0 %v2174
        %v2176 = vpop.xlane.xlu0 %2175
        %v2177 = vsel %vm933, %v2171, 0.0
        %2178 = vadd.xlane.f32.xlu0 %v2177
        %v2179 = vpop.xlane.xlu0 %2178
        %v2180 = vmul.f32 %v2176, %v937
        %v2181 = vmul.f32 %v2179, %v937
        %v2182 = vsub.f32 %v2170, %v2180
        %v2183 = vsub.f32 %v2171, %v2181
        %v2184 = vmul.f32 %v2182, %v2182
        %v2185 = vmul.f32 %v2183, %v2183
        %v2186 = vsel %vm639, %v2184, 0.0
        %2187 = vadd.xlane.f32.xlu0 %v2186
        %v2188 = vpop.xlane.xlu0 %2187
        %v2189 = vsel %vm933, %v2185, 0.0
        %2190 = vadd.xlane.f32.xlu0 %v2189
        %v2191 = vpop.xlane.xlu0 %2190
        %v2192 = vmul.f32 %v2188, %v937
        %v2193 = vmul.f32 %v2191, %v937
        %v2194 = vadd.f32 %v2192, 1e-05
        %v2195 = vadd.f32 %v2193, 1e-05
        %v2196 = vrsqrt.pop %v2194
        %v2197 = vrsqrt.pop %v2195
        %v2198 = vmul.f32 %v2182, %v2196
        %v2199 = vmul.f32 %v2183, %v2197
        %v2200 = vlaneseq
        %v2201 = vshrl.u32 %v2200, 7
        %v2202 = vsub.s32 0, %v2201
        %v2203 = vrot.slane %v2172, %v2202
        %v2204 = vmul.f32 %v2198, %v2203
        %v2205 = vmul.f32 %v2199, %v2203
        %v2206 = vlaneseq
        %v2207 = vshrl.u32 %v2206, 7
        %v2208 = vsub.s32 0, %v2207
        %v2209 = vrot.slane %v2173, %v2208
        %v2210 = vadd.f32 %v2204, %v2209
        %v2211 = vadd.f32 %v2205, %v2209
        %v2212 = vld [vmem:[%s8 + $0x20] sm:$0xff]
        %v2213 = vld [vmem:[%s8 + $0x28] sm:$0xff]
        %v2214 = vld [vmem:[%s8 + $0x30] sm:$0xff]
        %v2215 = vld [vmem:[%s8 + $0x38] sm:$0xff]
        %v2217 = vsel %vm639, %v2210, 0
        %v2220 = vsel %vm639, %v2211, 0
        %2222 = vmatprep.subr.mxu0 0.0
        %2223 = vmatpush1.msra.mxu0 %v2212
        %2224 = vmatprep.subr.mxu0 0.0
        %2225 = vmatpush1.msra.mxu0 %v2213
        %2226 = vmatprep.subr.mxu0 0.0
        %2227 = vmatpush1.msra.mxu0 %v2214
        %2228 = vmatprep.subr.mxu0 0.0
        %2229 = vmatpush1.msra.mxu0 %v2215
        %2230 = vmatprep.subr.mxu0 0.0
        %2231 = vmatpush1.msra.mxu0 0.0
        %2232 = vmatprep.subr.mxu0 0.0
        %2233 = vmatpush1.msra.mxu0 0.0
        %2234 = vmatprep.subr.mxu0 0.0
        %2235 = vmatpush1.msra.mxu0 0.0
        %2236 = vmatprep.subr.mxu0 0.0
        %2237 = vmatpush1.msra.mxu0 0.0
        %2238 = vmatprep.subr.mxu0 0.0
        %2239 = vmatpush1.msra.mxu0 0.0
        %2240 = vmatprep.subr.mxu0 0.0
        %2241 = vmatpush1.msra.mxu0 0.0
        %2242 = vmatprep.subr.mxu0 0.0
        %2243 = vmatpush1.msra.mxu0 0.0
        %2244 = vmatprep.subr.mxu0 0.0
        %2245 = vmatpush1.msra.mxu0 0.0
        %2246 = vmatprep.subr.mxu0 0.0
        %2247 = vmatpush1.msra.mxu0 0.0
        %2248 = vmatprep.subr.mxu0 0.0
        %2249 = vmatpush1.msra.mxu0 0.0
        %2250 = vmatprep.subr.mxu0 0.0
        %2251 = vmatpush1.msra.mxu0 0.0
        %2252 = vmatprep.subr.mxu0 0.0
        %2253 = vmatpush1.msra.mxu0 0.0
        %2254 = vmatprep.subr.mxu0 0.0
        %2255 = vmatpush1.msra.mxu0 0.0
        %2256 = vmatprep.subr.mxu0 0.0
        %2257 = vmatpush1.msra.mxu0 0.0
        %2258 = vmatprep.subr.mxu0 0.0
        %2259 = vmatpush1.msra.mxu0 0.0
        %2260 = vmatprep.subr.mxu0 0.0
        %2261 = vmatpush1.msra.mxu0 0.0
        %2262 = vmatprep.subr.mxu0 0.0
        %2263 = vmatpush1.msra.mxu0 0.0
        %2264 = vmatprep.subr.mxu0 0.0
        %2265 = vmatpush1.msra.mxu0 0.0
        %2266 = vmatprep.subr.mxu0 0.0
        %2267 = vmatpush1.msra.mxu0 0.0
        %2268 = vmatprep.subr.mxu0 0.0
        %2269 = vmatpush1.msra.mxu0 0.0
        %2270 = vmatprep.subr.mxu0 0.0
        %2271 = vmatpush1.msra.mxu0 0.0
        %2272 = vmatprep.subr.mxu0 0.0
        %2273 = vmatpush1.msra.mxu0 0.0
        %2274 = vmatprep.subr.mxu0 0.0
        %2275 = vmatpush1.msra.mxu0 0.0
        %2276 = vmatprep.subr.mxu0 0.0
        %2277 = vmatpush1.msra.mxu0 0.0
        %2278 = vmatprep.subr.mxu0 0.0
        %2279 = vmatpush1.msra.mxu0 0.0
        %2280 = vmatprep.subr.mxu0 0.0
        %2281 = vmatpush1.msra.mxu0 0.0
        %2282 = vmatprep.subr.mxu0 0.0
        %2283 = vmatpush1.msra.mxu0 0.0
        %2284 = vmatprep.subr.mxu0 0.0
        %2285 = vmatpush1.msra.mxu0 0.0
        %2286 = vmatprep.mubr.f32.mxu0 0.0
        %2287 = vmatmul.mubr.f32.gmra.mrb[0].mxu0 %v2217
        %v2288 = vpop.f32.mrb[0].mxu0
        %v2289 = vadd.f32 0.0, %v2288
        %v2290 = vpop.f32.mrb[0].mxu0
        %2291 = vmatprep.mubr.f32.mxu0 0.0
        %2292 = vmatmul.mubr.f32.gmra.mrb[0].mxu0 %v2220
        %v2293 = vpop.f32.mrb[0].mxu0
        %v2294 = vadd.f32 0.0, %v2293
        %v2295 = vpop.f32.mrb[0].mxu0
        %2296 = vdwg.mxu0
        %2299 = vrot.lane.b32.xlu0 %v2289, 96
        %v2300 = vpop.permute.xlu0 %2299
        %2301 = vrot.lane.b32.xlu0 %v2294, 96
        %v2302 = vpop.permute.xlu0 %2301
        %v2303 = vsel %vm1061, %v2289, 0
        %v2305 = vsel %vm1061, %v2294, 0
        %v2307 = vsel %vm1061, %v2300, 0
        %v2309 = vsel %vm1061, %v2302, 0
        %2311 = vmatprep.subr.mxu0 0.0
        %2312 = vmatpush1.xpose.msra.mxu0 %v2307
        %2313 = vmatprep.subr.mxu0 0.0
        %2314 = vmatpush1.xpose.msra.mxu0 %v2309
        %2315 = vmatprep.subr.mxu0 0.0
        %2316 = vmatpush1.xpose.msra.mxu0 0.0
        %2317 = vmatprep.subr.mxu0 0.0
        %2318 = vmatpush1.xpose.msra.mxu0 0.0
        %2319 = vmatprep.subr.mxu0 0.0
        %2320 = vmatpush1.xpose.msra.mxu0 0.0
        %2321 = vmatprep.subr.mxu0 0.0
        %2322 = vmatpush1.xpose.msra.mxu0 0.0
        %2323 = vmatprep.subr.mxu0 0.0
        %2324 = vmatpush1.xpose.msra.mxu0 0.0
        %2325 = vmatprep.subr.mxu0 0.0
        %2326 = vmatpush1.xpose.msra.mxu0 0.0
        %2327 = vmatprep.subr.mxu0 0.0
        %2328 = vmatpush1.xpose.msra.mxu0 0.0
        %2329 = vmatprep.subr.mxu0 0.0
        %2330 = vmatpush1.xpose.msra.mxu0 0.0
        %2331 = vmatprep.subr.mxu0 0.0
        %2332 = vmatpush1.xpose.msra.mxu0 0.0
        %2333 = vmatprep.subr.mxu0 0.0
        %2334 = vmatpush1.xpose.msra.mxu0 0.0
        %2335 = vmatprep.subr.mxu0 0.0
        %2336 = vmatpush1.xpose.msra.mxu0 0.0
        %2337 = vmatprep.subr.mxu0 0.0
        %2338 = vmatpush1.xpose.msra.mxu0 0.0
        %2339 = vmatprep.subr.mxu0 0.0
        %2340 = vmatpush1.xpose.msra.mxu0 0.0
        %2341 = vmatprep.subr.mxu0 0.0
        %2342 = vmatpush1.xpose.msra.mxu0 0.0
        %2343 = vmatprep.subr.mxu0 0.0
        %2344 = vmatpush1.xpose.msra.mxu0 0.0
        %2345 = vmatprep.subr.mxu0 0.0
        %2346 = vmatpush1.xpose.msra.mxu0 0.0
        %2347 = vmatprep.subr.mxu0 0.0
        %2348 = vmatpush1.xpose.msra.mxu0 0.0
        %2349 = vmatprep.subr.mxu0 0.0
        %2350 = vmatpush1.xpose.msra.mxu0 0.0
        %2351 = vmatprep.subr.mxu0 0.0
        %2352 = vmatpush1.xpose.msra.mxu0 0.0
        %2353 = vmatprep.subr.mxu0 0.0
        %2354 = vmatpush1.xpose.msra.mxu0 0.0
        %2355 = vmatprep.subr.mxu0 0.0
        %2356 = vmatpush1.xpose.msra.mxu0 0.0
        %2357 = vmatprep.subr.mxu0 0.0
        %2358 = vmatpush1.xpose.msra.mxu0 0.0
        %2359 = vmatprep.subr.mxu0 0.0
        %2360 = vmatpush1.xpose.msra.mxu0 0.0
        %2361 = vmatprep.subr.mxu0 0.0
        %2362 = vmatpush1.xpose.msra.mxu0 0.0
        %2363 = vmatprep.subr.mxu0 0.0
        %2364 = vmatpush1.xpose.msra.mxu0 0.0
        %2365 = vmatprep.subr.mxu0 0.0
        %2366 = vmatpush1.xpose.msra.mxu0 0.0
        %2367 = vmatprep.subr.mxu0 0.0
        %2368 = vmatpush1.xpose.msra.mxu0 0.0
        %2369 = vmatprep.subr.mxu0 0.0
        %2370 = vmatpush1.xpose.msra.mxu0 0.0
        %2371 = vmatprep.subr.mxu0 0.0
        %2372 = vmatpush1.xpose.msra.mxu0 0.0
        %2373 = vmatprep.subr.mxu0 0.0
        %2374 = vmatpush1.xpose.msra.mxu0 0.0
        %2375 = vmatprep.mubr.f32.mxu0 0.0
        %2376 = vmatmul.mubr.f32.gmra.mrb[0].mxu0 %v2303
        %v2377 = vpop.f32.mrb[0].mxu0
        %v2378 = vadd.f32 0.0, %v2377
        %v2379 = vpop.f32.mrb[0].mxu0
        %2380 = vmatprep.mubr.f32.mxu0 0.0
        %2381 = vmatmul.mubr.f32.gmra.mrb[0].mxu0 %v2305
        %v2382 = vpop.f32.mrb[0].mxu0
        %v2383 = vadd.f32 0.0, %v2382
        %v2384 = vpop.f32.mrb[0].mxu0
        %2385 = vdwg.mxu0
        %v2386 = vmul.f32 %v2378, 0.25
        %v2387 = vmul.f32 %v2383, 0.25
        %v2388 = vsel %vm606, %v2386, -1e+30
        %v2389 = vsel %vm607, %v2387, -1e+30
        %v2390 = vsel %vm1149, %v2388, -inf
        %2391 = vmax.xlane.f32.xlu0 %v2390
        %v2392 = vpop.xlane.xlu0 %2391
        %v2393 = vsel %vm1153, %v2389, -inf
        %2394 = vmax.xlane.f32.xlu0 %v2393
        %v2395 = vpop.xlane.xlu0 %2394
        %v2396 = vsub.f32 %v2388, %v2392
        %v2397 = vsub.f32 %v2389, %v2395
        %v2398 = vmul.f32 %v2396, 1.442695
        %v2399 = vpow.pop %v2398
        %v2400 = vmul.f32 %v2397, 1.442695
        %v2401 = vpow.pop %v2400
        %v2402 = vsel %vm1149, %v2399, 0.0
        %2403 = vadd.xlane.f32.xlu0 %v2402
        %v2404 = vpop.xlane.xlu0 %2403
        %v2405 = vsel %vm1153, %v2401, 0.0
        %2406 = vadd.xlane.f32.xlu0 %v2405
        %v2407 = vpop.xlane.xlu0 %2406
        %v2408 = vrcp.pop %v2404
        %v2409 = vrcp.pop %v2407
        %v2410 = vmul.f32 %v2399, %v2408
        %v2411 = vmul.f32 %v2401, %v2409
        %2412 = vrot.lane.b32.xlu0 %v2289, 64
        %v2413 = vpop.permute.xlu0 %2412
        %2414 = vrot.lane.b32.xlu0 %v2294, 64
        %v2415 = vpop.permute.xlu0 %2414
        %v2418 = vsel %vm1149, %v2410, 0
        %v2421 = vsel %vm1149, %v2411, 0
        %v2423 = vsel %vm1184, %v2415, 0
        %2425 = vmatprep.subr.mxu0 0.0
        %2426 = vmatpush1.msra.mxu0 %v2413
        %2427 = vmatprep.subr.mxu0 0.0
        %2428 = vmatpush1.msra.mxu0 %v2423
        %2429 = vmatprep.subr.mxu0 0.0
        %2430 = vmatpush1.msra.mxu0 0.0
        %2431 = vmatprep.subr.mxu0 0.0
        %2432 = vmatpush1.msra.mxu0 0.0
        %2433 = vmatprep.subr.mxu0 0.0
        %2434 = vmatpush1.msra.mxu0 0.0
        %2435 = vmatprep.subr.mxu0 0.0
        %2436 = vmatpush1.msra.mxu0 0.0
        %2437 = vmatprep.subr.mxu0 0.0
        %2438 = vmatpush1.msra.mxu0 0.0
        %2439 = vmatprep.subr.mxu0 0.0
        %2440 = vmatpush1.msra.mxu0 0.0
        %2441 = vmatprep.subr.mxu0 0.0
        %2442 = vmatpush1.msra.mxu0 0.0
        %2443 = vmatprep.subr.mxu0 0.0
        %2444 = vmatpush1.msra.mxu0 0.0
        %2445 = vmatprep.subr.mxu0 0.0
        %2446 = vmatpush1.msra.mxu0 0.0
        %2447 = vmatprep.subr.mxu0 0.0
        %2448 = vmatpush1.msra.mxu0 0.0
        %2449 = vmatprep.subr.mxu0 0.0
        %2450 = vmatpush1.msra.mxu0 0.0
        %2451 = vmatprep.subr.mxu0 0.0
        %2452 = vmatpush1.msra.mxu0 0.0
        %2453 = vmatprep.subr.mxu0 0.0
        %2454 = vmatpush1.msra.mxu0 0.0
        %2455 = vmatprep.subr.mxu0 0.0
        %2456 = vmatpush1.msra.mxu0 0.0
        %2457 = vmatprep.subr.mxu0 0.0
        %2458 = vmatpush1.msra.mxu0 0.0
        %2459 = vmatprep.subr.mxu0 0.0
        %2460 = vmatpush1.msra.mxu0 0.0
        %2461 = vmatprep.subr.mxu0 0.0
        %2462 = vmatpush1.msra.mxu0 0.0
        %2463 = vmatprep.subr.mxu0 0.0
        %2464 = vmatpush1.msra.mxu0 0.0
        %2465 = vmatprep.subr.mxu0 0.0
        %2466 = vmatpush1.msra.mxu0 0.0
        %2467 = vmatprep.subr.mxu0 0.0
        %2468 = vmatpush1.msra.mxu0 0.0
        %2469 = vmatprep.subr.mxu0 0.0
        %2470 = vmatpush1.msra.mxu0 0.0
        %2471 = vmatprep.subr.mxu0 0.0
        %2472 = vmatpush1.msra.mxu0 0.0
        %2473 = vmatprep.subr.mxu0 0.0
        %2474 = vmatpush1.msra.mxu0 0.0
        %2475 = vmatprep.subr.mxu0 0.0
        %2476 = vmatpush1.msra.mxu0 0.0
        %2477 = vmatprep.subr.mxu0 0.0
        %2478 = vmatpush1.msra.mxu0 0.0
        %2479 = vmatprep.subr.mxu0 0.0
        %2480 = vmatpush1.msra.mxu0 0.0
        %2481 = vmatprep.subr.mxu0 0.0
        %2482 = vmatpush1.msra.mxu0 0.0
        %2483 = vmatprep.subr.mxu0 0.0
        %2484 = vmatpush1.msra.mxu0 0.0
        %2485 = vmatprep.subr.mxu0 0.0
        %2486 = vmatpush1.msra.mxu0 0.0
        %2487 = vmatprep.subr.mxu0 0.0
        %2488 = vmatpush1.msra.mxu0 0.0
        %2489 = vmatprep.mubr.f32.mxu0 0.0
        %2490 = vmatmul.mubr.f32.gmra.mrb[0].mxu0 %v2418
        %v2491 = vpop.f32.mrb[0].mxu0
        %v2492 = vadd.f32 0.0, %v2491
        %v2493 = vpop.f32.mrb[0].mxu0
        %2494 = vmatprep.mubr.f32.mxu0 0.0
        %2495 = vmatmul.mubr.f32.gmra.mrb[0].mxu0 %v2421
        %v2496 = vpop.f32.mrb[0].mxu0
        %v2497 = vadd.f32 0.0, %v2496
        %v2498 = vpop.f32.mrb[0].mxu0
        %2499 = vdwg.mxu0
        %v2500 = vld [vmem:[%s9 + $0x20] sm:$0xff]
        %v2501 = vld [vmem:[%s9 + $0x28] sm:$0xff]
        %2502 = vrot.lane.b32.xlu0 %v2289, 112
        %v2503 = vpop.permute.xlu0 %2502
        %2504 = vrot.lane.b32.xlu0 %v2294, 112
        %v2505 = vpop.permute.xlu0 %2504
        %2506 = vrot.lane.b32.xlu0 %v2289, 80
        %v2507 = vpop.permute.xlu0 %2506
        %2508 = vrot.lane.b32.xlu0 %v2294, 80
        %v2509 = vpop.permute.xlu0 %2508
        %v2510 = vsel %vm1061, %v2503, 0
        %v2512 = vsel %vm1061, %v2505, 0
        %v2514 = vsel %vm1061, %v2507, 0
        %v2516 = vsel %vm1061, %v2509, 0
        %2518 = vmatprep.subr.mxu0 0.0
        %2519 = vmatpush1.xpose.msra.mxu0 %v2514
        %2520 = vmatprep.subr.mxu0 0.0
        %2521 = vmatpush1.xpose.msra.mxu0 %v2516
        %2522 = vmatprep.subr.mxu0 0.0
        %2523 = vmatpush1.xpose.msra.mxu0 0.0
        %2524 = vmatprep.subr.mxu0 0.0
        %2525 = vmatpush1.xpose.msra.mxu0 0.0
        %2526 = vmatprep.subr.mxu0 0.0
        %2527 = vmatpush1.xpose.msra.mxu0 0.0
        %2528 = vmatprep.subr.mxu0 0.0
        %2529 = vmatpush1.xpose.msra.mxu0 0.0
        %2530 = vmatprep.subr.mxu0 0.0
        %2531 = vmatpush1.xpose.msra.mxu0 0.0
        %2532 = vmatprep.subr.mxu0 0.0
        %2533 = vmatpush1.xpose.msra.mxu0 0.0
        %2534 = vmatprep.subr.mxu0 0.0
        %2535 = vmatpush1.xpose.msra.mxu0 0.0
        %2536 = vmatprep.subr.mxu0 0.0
        %2537 = vmatpush1.xpose.msra.mxu0 0.0
        %2538 = vmatprep.subr.mxu0 0.0
        %2539 = vmatpush1.xpose.msra.mxu0 0.0
        %2540 = vmatprep.subr.mxu0 0.0
        %2541 = vmatpush1.xpose.msra.mxu0 0.0
        %2542 = vmatprep.subr.mxu0 0.0
        %2543 = vmatpush1.xpose.msra.mxu0 0.0
        %2544 = vmatprep.subr.mxu0 0.0
        %2545 = vmatpush1.xpose.msra.mxu0 0.0
        %2546 = vmatprep.subr.mxu0 0.0
        %2547 = vmatpush1.xpose.msra.mxu0 0.0
        %2548 = vmatprep.subr.mxu0 0.0
        %2549 = vmatpush1.xpose.msra.mxu0 0.0
        %2550 = vmatprep.subr.mxu0 0.0
        %2551 = vmatpush1.xpose.msra.mxu0 0.0
        %2552 = vmatprep.subr.mxu0 0.0
        %2553 = vmatpush1.xpose.msra.mxu0 0.0
        %2554 = vmatprep.subr.mxu0 0.0
        %2555 = vmatpush1.xpose.msra.mxu0 0.0
        %2556 = vmatprep.subr.mxu0 0.0
        %2557 = vmatpush1.xpose.msra.mxu0 0.0
        %2558 = vmatprep.subr.mxu0 0.0
        %2559 = vmatpush1.xpose.msra.mxu0 0.0
        %2560 = vmatprep.subr.mxu0 0.0
        %2561 = vmatpush1.xpose.msra.mxu0 0.0
        %2562 = vmatprep.subr.mxu0 0.0
        %2563 = vmatpush1.xpose.msra.mxu0 0.0
        %2564 = vmatprep.subr.mxu0 0.0
        %2565 = vmatpush1.xpose.msra.mxu0 0.0
        %2566 = vmatprep.subr.mxu0 0.0
        %2567 = vmatpush1.xpose.msra.mxu0 0.0
        %2568 = vmatprep.subr.mxu0 0.0
        %2569 = vmatpush1.xpose.msra.mxu0 0.0
        %2570 = vmatprep.subr.mxu0 0.0
        %2571 = vmatpush1.xpose.msra.mxu0 0.0
        %2572 = vmatprep.subr.mxu0 0.0
        %2573 = vmatpush1.xpose.msra.mxu0 0.0
        %2574 = vmatprep.subr.mxu0 0.0
        %2575 = vmatpush1.xpose.msra.mxu0 0.0
        %2576 = vmatprep.subr.mxu0 0.0
        %2577 = vmatpush1.xpose.msra.mxu0 0.0
        %2578 = vmatprep.subr.mxu0 0.0
        %2579 = vmatpush1.xpose.msra.mxu0 0.0
        %2580 = vmatprep.subr.mxu0 0.0
        %2581 = vmatpush1.xpose.msra.mxu0 0.0
        %2582 = vmatprep.mubr.f32.mxu0 0.0
        %2583 = vmatmul.mubr.f32.gmra.mrb[0].mxu0 %v2510
        %v2584 = vpop.f32.mrb[0].mxu0
        %v2585 = vadd.f32 0.0, %v2584
        %v2586 = vpop.f32.mrb[0].mxu0
        %2587 = vmatprep.mubr.f32.mxu0 0.0
        %2588 = vmatmul.mubr.f32.gmra.mrb[0].mxu0 %v2512
        %v2589 = vpop.f32.mrb[0].mxu0
        %v2590 = vadd.f32 0.0, %v2589
        %v2591 = vpop.f32.mrb[0].mxu0
        %2592 = vdwg.mxu0
        %v2593 = vmul.f32 %v2585, 0.25
        %v2594 = vmul.f32 %v2590, 0.25
        %v2595 = vsel %vm606, %v2593, -1e+30
        %v2596 = vsel %vm607, %v2594, -1e+30
        %v2597 = vsel %vm1149, %v2595, -inf
        %2598 = vmax.xlane.f32.xlu0 %v2597
        %v2599 = vpop.xlane.xlu0 %2598
        %v2600 = vsel %vm1153, %v2596, -inf
        %2601 = vmax.xlane.f32.xlu0 %v2600
        %v2602 = vpop.xlane.xlu0 %2601
        %v2603 = vsub.f32 %v2595, %v2599
        %v2604 = vsub.f32 %v2596, %v2602
        %v2605 = vmul.f32 %v2603, 1.442695
        %v2606 = vpow.pop %v2605
        %v2607 = vmul.f32 %v2604, 1.442695
        %v2608 = vpow.pop %v2607
        %v2609 = vsel %vm1149, %v2606, 0.0
        %2610 = vadd.xlane.f32.xlu0 %v2609
        %v2611 = vpop.xlane.xlu0 %2610
        %v2612 = vsel %vm1153, %v2608, 0.0
        %2613 = vadd.xlane.f32.xlu0 %v2612
        %v2614 = vpop.xlane.xlu0 %2613
        %v2615 = vrcp.pop %v2611
        %v2616 = vrcp.pop %v2614
        %v2617 = vmul.f32 %v2606, %v2615
        %v2618 = vmul.f32 %v2608, %v2616
        %2619 = vrot.lane.b32.xlu0 %v2289, 48
        %v2620 = vpop.permute.xlu0 %2619
        %2621 = vrot.lane.b32.xlu0 %v2294, 48
        %v2622 = vpop.permute.xlu0 %2621
        %v2625 = vsel %vm1149, %v2617, 0
        %v2628 = vsel %vm1149, %v2618, 0
        %v2630 = vsel %vm1184, %v2622, 0
        %2632 = vmatprep.subr.mxu0 0.0
        %2633 = vmatpush1.msra.mxu0 %v2620
        %2634 = vmatprep.subr.mxu0 0.0
        %2635 = vmatpush1.msra.mxu0 %v2630
        %2636 = vmatprep.subr.mxu0 0.0
        %2637 = vmatpush1.msra.mxu0 0.0
        %2638 = vmatprep.subr.mxu0 0.0
        %2639 = vmatpush1.msra.mxu0 0.0
        %2640 = vmatprep.subr.mxu0 0.0
        %2641 = vmatpush1.msra.mxu0 0.0
        %2642 = vmatprep.subr.mxu0 0.0
        %2643 = vmatpush1.msra.mxu0 0.0
        %2644 = vmatprep.subr.mxu0 0.0
        %2645 = vmatpush1.msra.mxu0 0.0
        %2646 = vmatprep.subr.mxu0 0.0
        %2647 = vmatpush1.msra.mxu0 0.0
        %2648 = vmatprep.subr.mxu0 0.0
        %2649 = vmatpush1.msra.mxu0 0.0
        %2650 = vmatprep.subr.mxu0 0.0
        %2651 = vmatpush1.msra.mxu0 0.0
        %2652 = vmatprep.subr.mxu0 0.0
        %2653 = vmatpush1.msra.mxu0 0.0
        %2654 = vmatprep.subr.mxu0 0.0
        %2655 = vmatpush1.msra.mxu0 0.0
        %2656 = vmatprep.subr.mxu0 0.0
        %2657 = vmatpush1.msra.mxu0 0.0
        %2658 = vmatprep.subr.mxu0 0.0
        %2659 = vmatpush1.msra.mxu0 0.0
        %2660 = vmatprep.subr.mxu0 0.0
        %2661 = vmatpush1.msra.mxu0 0.0
        %2662 = vmatprep.subr.mxu0 0.0
        %2663 = vmatpush1.msra.mxu0 0.0
        %2664 = vmatprep.subr.mxu0 0.0
        %2665 = vmatpush1.msra.mxu0 0.0
        %2666 = vmatprep.subr.mxu0 0.0
        %2667 = vmatpush1.msra.mxu0 0.0
        %2668 = vmatprep.subr.mxu0 0.0
        %2669 = vmatpush1.msra.mxu0 0.0
        %2670 = vmatprep.subr.mxu0 0.0
        %2671 = vmatpush1.msra.mxu0 0.0
        %2672 = vmatprep.subr.mxu0 0.0
        %2673 = vmatpush1.msra.mxu0 0.0
        %2674 = vmatprep.subr.mxu0 0.0
        %2675 = vmatpush1.msra.mxu0 0.0
        %2676 = vmatprep.subr.mxu0 0.0
        %2677 = vmatpush1.msra.mxu0 0.0
        %2678 = vmatprep.subr.mxu0 0.0
        %2679 = vmatpush1.msra.mxu0 0.0
        %2680 = vmatprep.subr.mxu0 0.0
        %2681 = vmatpush1.msra.mxu0 0.0
        %2682 = vmatprep.subr.mxu0 0.0
        %2683 = vmatpush1.msra.mxu0 0.0
        %2684 = vmatprep.subr.mxu0 0.0
        %2685 = vmatpush1.msra.mxu0 0.0
        %2686 = vmatprep.subr.mxu0 0.0
        %2687 = vmatpush1.msra.mxu0 0.0
        %2688 = vmatprep.subr.mxu0 0.0
        %2689 = vmatpush1.msra.mxu0 0.0
        %2690 = vmatprep.subr.mxu0 0.0
        %2691 = vmatpush1.msra.mxu0 0.0
        %2692 = vmatprep.subr.mxu0 0.0
        %2693 = vmatpush1.msra.mxu0 0.0
        %2694 = vmatprep.subr.mxu0 0.0
        %2695 = vmatpush1.msra.mxu0 0.0
        %2696 = vmatprep.mubr.f32.mxu0 0.0
        %2697 = vmatmul.mubr.f32.gmra.mrb[0].mxu0 %v2625
        %v2698 = vpop.f32.mrb[0].mxu0
        %v2699 = vadd.f32 0.0, %v2698
        %v2700 = vpop.f32.mrb[0].mxu0
        %2701 = vmatprep.mubr.f32.mxu0 0.0
        %2702 = vmatmul.mubr.f32.gmra.mrb[0].mxu0 %v2628
        %v2703 = vpop.f32.mrb[0].mxu0
        %v2704 = vadd.f32 0.0, %v2703
        %v2705 = vpop.f32.mrb[0].mxu0
        %2706 = vdwg.mxu0
        %v2707 = vld [vmem:[%s9 + $0x30] sm:$0xff]
        %v2708 = vld [vmem:[%s9 + $0x38] sm:$0xff]
        %v2710 = vsel %vm1061, %v2699, 0
        %v2713 = vsel %vm1061, %v2704, 0
        %2715 = vmatprep.subr.mxu0 0.0
        %2716 = vmatpush1.msra.mxu0 %v2707
        %2717 = vmatprep.subr.mxu0 0.0
        %2718 = vmatpush1.msra.mxu0 %v2708
        %2719 = vmatprep.subr.mxu0 0.0
        %2720 = vmatpush1.msra.mxu0 0.0
        %2721 = vmatprep.subr.mxu0 0.0
        %2722 = vmatpush1.msra.mxu0 0.0
        %2723 = vmatprep.subr.mxu0 0.0
        %2724 = vmatpush1.msra.mxu0 0.0
        %2725 = vmatprep.subr.mxu0 0.0
        %2726 = vmatpush1.msra.mxu0 0.0
        %2727 = vmatprep.subr.mxu0 0.0
        %2728 = vmatpush1.msra.mxu0 0.0
        %2729 = vmatprep.subr.mxu0 0.0
        %2730 = vmatpush1.msra.mxu0 0.0
        %2731 = vmatprep.subr.mxu0 0.0
        %2732 = vmatpush1.msra.mxu0 0.0
        %2733 = vmatprep.subr.mxu0 0.0
        %2734 = vmatpush1.msra.mxu0 0.0
        %2735 = vmatprep.subr.mxu0 0.0
        %2736 = vmatpush1.msra.mxu0 0.0
        %2737 = vmatprep.subr.mxu0 0.0
        %2738 = vmatpush1.msra.mxu0 0.0
        %2739 = vmatprep.subr.mxu0 0.0
        %2740 = vmatpush1.msra.mxu0 0.0
        %2741 = vmatprep.subr.mxu0 0.0
        %2742 = vmatpush1.msra.mxu0 0.0
        %2743 = vmatprep.subr.mxu0 0.0
        %2744 = vmatpush1.msra.mxu0 0.0
        %2745 = vmatprep.subr.mxu0 0.0
        %2746 = vmatpush1.msra.mxu0 0.0
        %2747 = vmatprep.subr.mxu0 0.0
        %2748 = vmatpush1.msra.mxu0 0.0
        %2749 = vmatprep.subr.mxu0 0.0
        %2750 = vmatpush1.msra.mxu0 0.0
        %2751 = vmatprep.subr.mxu0 0.0
        %2752 = vmatpush1.msra.mxu0 0.0
        %2753 = vmatprep.subr.mxu0 0.0
        %2754 = vmatpush1.msra.mxu0 0.0
        %2755 = vmatprep.subr.mxu0 0.0
        %2756 = vmatpush1.msra.mxu0 0.0
        %2757 = vmatprep.subr.mxu0 0.0
        %2758 = vmatpush1.msra.mxu0 0.0
        %2759 = vmatprep.subr.mxu0 0.0
        %2760 = vmatpush1.msra.mxu0 0.0
        %2761 = vmatprep.subr.mxu0 0.0
        %2762 = vmatpush1.msra.mxu0 0.0
        %2763 = vmatprep.subr.mxu0 0.0
        %2764 = vmatpush1.msra.mxu0 0.0
        %2765 = vmatprep.subr.mxu0 0.0
        %2766 = vmatpush1.msra.mxu0 0.0
        %2767 = vmatprep.subr.mxu0 0.0
        %2768 = vmatpush1.msra.mxu0 0.0
        %2769 = vmatprep.subr.mxu0 0.0
        %2770 = vmatpush1.msra.mxu0 0.0
        %2771 = vmatprep.subr.mxu0 0.0
        %2772 = vmatpush1.msra.mxu0 0.0
        %2773 = vmatprep.subr.mxu0 0.0
        %2774 = vmatpush1.msra.mxu0 0.0
        %2775 = vmatprep.subr.mxu0 0.0
        %2776 = vmatpush1.msra.mxu0 0.0
        %2777 = vmatprep.subr.mxu0 0.0
        %2778 = vmatpush1.msra.mxu0 0.0
        %2779 = vmatprep.mubr.f32.mxu0 0.0
        %2780 = vmatmul.mubr.f32.gmra.mrb[0].mxu0 %v2710
        %v2781 = vpop.f32.mrb[0].mxu0
        %v2782 = vadd.f32 0.0, %v2781
        %v2783 = vpop.f32.mrb[0].mxu0
        %2784 = vmatprep.mubr.f32.mxu0 0.0
        %2785 = vmatmul.mubr.f32.gmra.mrb[0].mxu0 %v2713
        %v2786 = vpop.f32.mrb[0].mxu0
        %v2787 = vadd.f32 0.0, %v2786
        %v2788 = vpop.f32.mrb[0].mxu0
        %2789 = vdwg.mxu0
        %v2791 = vsel %vm1061, %v2492, 0
        %v2794 = vsel %vm1061, %v2497, 0
        %2796 = vmatprep.subr.mxu0 0.0
        %2797 = vmatpush1.msra.mxu0 %v2500
        %2798 = vmatprep.subr.mxu0 0.0
        %2799 = vmatpush1.msra.mxu0 %v2501
        %2800 = vmatprep.subr.mxu0 0.0
        %2801 = vmatpush1.msra.mxu0 0.0
        %2802 = vmatprep.subr.mxu0 0.0
        %2803 = vmatpush1.msra.mxu0 0.0
        %2804 = vmatprep.subr.mxu0 0.0
        %2805 = vmatpush1.msra.mxu0 0.0
        %2806 = vmatprep.subr.mxu0 0.0
        %2807 = vmatpush1.msra.mxu0 0.0
        %2808 = vmatprep.subr.mxu0 0.0
        %2809 = vmatpush1.msra.mxu0 0.0
        %2810 = vmatprep.subr.mxu0 0.0
        %2811 = vmatpush1.msra.mxu0 0.0
        %2812 = vmatprep.subr.mxu0 0.0
        %2813 = vmatpush1.msra.mxu0 0.0
        %2814 = vmatprep.subr.mxu0 0.0
        %2815 = vmatpush1.msra.mxu0 0.0
        %2816 = vmatprep.subr.mxu0 0.0
        %2817 = vmatpush1.msra.mxu0 0.0
        %2818 = vmatprep.subr.mxu0 0.0
        %2819 = vmatpush1.msra.mxu0 0.0
        %2820 = vmatprep.subr.mxu0 0.0
        %2821 = vmatpush1.msra.mxu0 0.0
        %2822 = vmatprep.subr.mxu0 0.0
        %2823 = vmatpush1.msra.mxu0 0.0
        %2824 = vmatprep.subr.mxu0 0.0
        %2825 = vmatpush1.msra.mxu0 0.0
        %2826 = vmatprep.subr.mxu0 0.0
        %2827 = vmatpush1.msra.mxu0 0.0
        %2828 = vmatprep.subr.mxu0 0.0
        %2829 = vmatpush1.msra.mxu0 0.0
        %2830 = vmatprep.subr.mxu0 0.0
        %2831 = vmatpush1.msra.mxu0 0.0
        %2832 = vmatprep.subr.mxu0 0.0
        %2833 = vmatpush1.msra.mxu0 0.0
        %2834 = vmatprep.subr.mxu0 0.0
        %2835 = vmatpush1.msra.mxu0 0.0
        %2836 = vmatprep.subr.mxu0 0.0
        %2837 = vmatpush1.msra.mxu0 0.0
        %2838 = vmatprep.subr.mxu0 0.0
        %2839 = vmatpush1.msra.mxu0 0.0
        %2840 = vmatprep.subr.mxu0 0.0
        %2841 = vmatpush1.msra.mxu0 0.0
        %2842 = vmatprep.subr.mxu0 0.0
        %2843 = vmatpush1.msra.mxu0 0.0
        %2844 = vmatprep.subr.mxu0 0.0
        %2845 = vmatpush1.msra.mxu0 0.0
        %2846 = vmatprep.subr.mxu0 0.0
        %2847 = vmatpush1.msra.mxu0 0.0
        %2848 = vmatprep.subr.mxu0 0.0
        %2849 = vmatpush1.msra.mxu0 0.0
        %2850 = vmatprep.subr.mxu0 0.0
        %2851 = vmatpush1.msra.mxu0 0.0
        %2852 = vmatprep.subr.mxu0 0.0
        %2853 = vmatpush1.msra.mxu0 0.0
        %2854 = vmatprep.subr.mxu0 0.0
        %2855 = vmatpush1.msra.mxu0 0.0
        %2856 = vmatprep.subr.mxu0 0.0
        %2857 = vmatpush1.msra.mxu0 0.0
        %2858 = vmatprep.subr.mxu0 0.0
        %2859 = vmatpush1.msra.mxu0 0.0
        %2860 = vmatprep.mubr.f32.mxu0 0.0
        %2861 = vmatmul.mubr.f32.gmra.mrb[0].mxu0 %v2791
        %v2862 = vpop.f32.mrb[0].mxu0
        %v2863 = vadd.f32 %v2782, %v2862
        %v2864 = vpop.f32.mrb[0].mxu0
        %2865 = vmatprep.mubr.f32.mxu0 0.0
        %2866 = vmatmul.mubr.f32.gmra.mrb[0].mxu0 %v2794
        %v2867 = vpop.f32.mrb[0].mxu0
        %v2868 = vadd.f32 %v2787, %v2867
        %v2869 = vpop.f32.mrb[0].mxu0
        %2870 = vdwg.mxu0
        %v2871 = vadd.f32 %v2170, %v2863
        %v2872 = vadd.f32 %v2171, %v2868
        %v2873 = vld [vmem:[%s7 + $0x6] sm:$0x1]
        %v2874 = vld [vmem:[%s7 + $0x7] sm:$0x1]
        %v2875 = vsel %vm639, %v2871, 0.0
        %2876 = vadd.xlane.f32.xlu0 %v2875
        %v2877 = vpop.xlane.xlu0 %2876
        %v2878 = vsel %vm933, %v2872, 0.0
        %2879 = vadd.xlane.f32.xlu0 %v2878
        %v2880 = vpop.xlane.xlu0 %2879
        %v2881 = vmul.f32 %v2877, %v937
        %v2882 = vmul.f32 %v2880, %v937
        %v2883 = vsub.f32 %v2871, %v2881
        %v2884 = vsub.f32 %v2872, %v2882
        %v2885 = vmul.f32 %v2883, %v2883
        %v2886 = vmul.f32 %v2884, %v2884
        %v2887 = vsel %vm639, %v2885, 0.0
        %2888 = vadd.xlane.f32.xlu0 %v2887
        %v2889 = vpop.xlane.xlu0 %2888
        %v2890 = vsel %vm933, %v2886, 0.0
        %2891 = vadd.xlane.f32.xlu0 %v2890
        %v2892 = vpop.xlane.xlu0 %2891
        %v2893 = vmul.f32 %v2889, %v937
        %v2894 = vmul.f32 %v2892, %v937
        %v2895 = vadd.f32 %v2893, 1e-05
        %v2896 = vadd.f32 %v2894, 1e-05
        %v2897 = vrsqrt.pop %v2895
        %v2898 = vrsqrt.pop %v2896
        %v2899 = vmul.f32 %v2883, %v2897
        %v2900 = vmul.f32 %v2884, %v2898
        %v2901 = vlaneseq
        %v2902 = vshrl.u32 %v2901, 7
        %v2903 = vsub.s32 0, %v2902
        %v2904 = vrot.slane %v2873, %v2903
        %v2905 = vmul.f32 %v2899, %v2904
        %v2906 = vmul.f32 %v2900, %v2904
        %v2907 = vlaneseq
        %v2908 = vshrl.u32 %v2907, 7
        %v2909 = vsub.s32 0, %v2908
        %v2910 = vrot.slane %v2874, %v2909
        %v2911 = vadd.f32 %v2905, %v2910
        %v2912 = vadd.f32 %v2906, %v2910
        %v2913 = vld [vmem:[%s10 + $0x20] sm:$0xff]
        %v2914 = vld [vmem:[%s10 + $0x28] sm:$0xff]
        %v2915 = vld [vmem:[%s10 + $0x30] sm:$0xff]
        %v2916 = vld [vmem:[%s10 + $0x38] sm:$0xff]
        %v2918 = vsel %vm639, %v2911, 0
        %v2921 = vsel %vm639, %v2912, 0
        %2923 = vmatprep.subr.mxu0 0.0
        %2924 = vmatpush1.msra.mxu0 %v2913
        %2925 = vmatprep.subr.mxu0 0.0
        %2926 = vmatpush1.msra.mxu0 %v2914
        %2927 = vmatprep.subr.mxu0 0.0
        %2928 = vmatpush1.msra.mxu0 %v2915
        %2929 = vmatprep.subr.mxu0 0.0
        %2930 = vmatpush1.msra.mxu0 %v2916
        %2931 = vmatprep.subr.mxu0 0.0
        %2932 = vmatpush1.msra.mxu0 0.0
        %2933 = vmatprep.subr.mxu0 0.0
        %2934 = vmatpush1.msra.mxu0 0.0
        %2935 = vmatprep.subr.mxu0 0.0
        %2936 = vmatpush1.msra.mxu0 0.0
        %2937 = vmatprep.subr.mxu0 0.0
        %2938 = vmatpush1.msra.mxu0 0.0
        %2939 = vmatprep.subr.mxu0 0.0
        %2940 = vmatpush1.msra.mxu0 0.0
        %2941 = vmatprep.subr.mxu0 0.0
        %2942 = vmatpush1.msra.mxu0 0.0
        %2943 = vmatprep.subr.mxu0 0.0
        %2944 = vmatpush1.msra.mxu0 0.0
        %2945 = vmatprep.subr.mxu0 0.0
        %2946 = vmatpush1.msra.mxu0 0.0
        %2947 = vmatprep.subr.mxu0 0.0
        %2948 = vmatpush1.msra.mxu0 0.0
        %2949 = vmatprep.subr.mxu0 0.0
        %2950 = vmatpush1.msra.mxu0 0.0
        %2951 = vmatprep.subr.mxu0 0.0
        %2952 = vmatpush1.msra.mxu0 0.0
        %2953 = vmatprep.subr.mxu0 0.0
        %2954 = vmatpush1.msra.mxu0 0.0
        %2955 = vmatprep.subr.mxu0 0.0
        %2956 = vmatpush1.msra.mxu0 0.0
        %2957 = vmatprep.subr.mxu0 0.0
        %2958 = vmatpush1.msra.mxu0 0.0
        %2959 = vmatprep.subr.mxu0 0.0
        %2960 = vmatpush1.msra.mxu0 0.0
        %2961 = vmatprep.subr.mxu0 0.0
        %2962 = vmatpush1.msra.mxu0 0.0
        %2963 = vmatprep.subr.mxu0 0.0
        %2964 = vmatpush1.msra.mxu0 0.0
        %2965 = vmatprep.subr.mxu0 0.0
        %2966 = vmatpush1.msra.mxu0 0.0
        %2967 = vmatprep.subr.mxu0 0.0
        %2968 = vmatpush1.msra.mxu0 0.0
        %2969 = vmatprep.subr.mxu0 0.0
        %2970 = vmatpush1.msra.mxu0 0.0
        %2971 = vmatprep.subr.mxu0 0.0
        %2972 = vmatpush1.msra.mxu0 0.0
        %2973 = vmatprep.subr.mxu0 0.0
        %2974 = vmatpush1.msra.mxu0 0.0
        %2975 = vmatprep.subr.mxu0 0.0
        %2976 = vmatpush1.msra.mxu0 0.0
        %2977 = vmatprep.subr.mxu0 0.0
        %2978 = vmatpush1.msra.mxu0 0.0
        %2979 = vmatprep.subr.mxu0 0.0
        %2980 = vmatpush1.msra.mxu0 0.0
        %2981 = vmatprep.subr.mxu0 0.0
        %2982 = vmatpush1.msra.mxu0 0.0
        %2983 = vmatprep.subr.mxu0 0.0
        %2984 = vmatpush1.msra.mxu0 0.0
        %2985 = vmatprep.subr.mxu0 0.0
        %2986 = vmatpush1.msra.mxu0 0.0
        %2987 = vmatprep.mubr.f32.mxu0 0.0
        %2988 = vmatmul.mubr.f32.gmra.mrb[0].mxu0 %v2918
        %v2989 = vpop.f32.mrb[0].mxu0
        %v2990 = vadd.f32 0.0, %v2989
        %v2991 = vpop.f32.mrb[0].mxu0
        %2992 = vmatprep.mubr.f32.mxu0 0.0
        %2993 = vmatmul.mubr.f32.gmra.mrb[0].mxu0 %v2921
        %v2994 = vpop.f32.mrb[0].mxu0
        %v2995 = vadd.f32 0.0, %v2994
        %v2996 = vpop.f32.mrb[0].mxu0
        %2997 = vdwg.mxu0
        %v2998 = vmul.f32 %v2990, %v2990
        %v2999 = vmul.f32 %v2995, %v2995
        %v3000 = vmul.f32 %v2990, %v2998
        %v3001 = vmul.f32 %v2995, %v2999
        %v3002 = vmul.f32 %v3000, 0.044715
        %v3003 = vmul.f32 %v3001, 0.044715
        %v3004 = vadd.f32 %v2990, %v3002
        %v3005 = vadd.f32 %v2995, %v3003
        %v3006 = vmul.f32 %v3004, 0.7978846
        %v3007 = vmul.f32 %v3005, 0.7978846
        %v3008 = vtanh.pop %v3006
        %v3009 = vtanh.pop %v3007
        %v3010 = vadd.f32 %v3008, 1.0
        %v3011 = vadd.f32 %v3009, 1.0
        %v3012 = vmul.f32 %v3010, 0.5
        %v3013 = vmul.f32 %v3011, 0.5
        %v3014 = vmul.f32 %v2990, %v3012
        %v3015 = vmul.f32 %v2995, %v3013
        %v3016 = vld [vmem:[%s11 + $0x80] sm:$0xff]
        %v3017 = vld [vmem:[%s11 + $0x88] sm:$0xff]
        %v3018 = vld [vmem:[%s11 + $0x90] sm:$0xff]
        %v3019 = vld [vmem:[%s11 + $0x98] sm:$0xff]
        %v3020 = vld [vmem:[%s11 + $0xa0] sm:$0xff]
        %v3021 = vld [vmem:[%s11 + $0xa8] sm:$0xff]
        %v3022 = vld [vmem:[%s11 + $0xb0] sm:$0xff]
        %v3023 = vld [vmem:[%s11 + $0xb8] sm:$0xff]
        %v3024 = vld [vmem:[%s11 + $0xc0] sm:$0xff]
        %v3025 = vld [vmem:[%s11 + $0xc8] sm:$0xff]
        %v3026 = vld [vmem:[%s11 + $0xd0] sm:$0xff]
        %v3027 = vld [vmem:[%s11 + $0xd8] sm:$0xff]
        %v3028 = vld [vmem:[%s11 + $0xe0] sm:$0xff]
        %v3029 = vld [vmem:[%s11 + $0xe8] sm:$0xff]
        %v3030 = vld [vmem:[%s11 + $0xf0] sm:$0xff]
        %v3031 = vld [vmem:[%s11 + $0xf8] sm:$0xff]
        %3032 = vmatprep.subr.mxu0 0.0
        %3033 = vmatpush1.msra.mxu0 %v3016
        %3034 = vmatprep.subr.mxu0 0.0
        %3035 = vmatpush1.msra.mxu0 %v3017
        %3036 = vmatprep.subr.mxu0 0.0
        %3037 = vmatpush1.msra.mxu0 %v3018
        %3038 = vmatprep.subr.mxu0 0.0
        %3039 = vmatpush1.msra.mxu0 %v3019
        %3040 = vmatprep.subr.mxu0 0.0
        %3041 = vmatpush1.msra.mxu0 %v3020
        %3042 = vmatprep.subr.mxu0 0.0
        %3043 = vmatpush1.msra.mxu0 %v3021
        %3044 = vmatprep.subr.mxu0 0.0
        %3045 = vmatpush1.msra.mxu0 %v3022
        %3046 = vmatprep.subr.mxu0 0.0
        %3047 = vmatpush1.msra.mxu0 %v3023
        %3048 = vmatprep.subr.mxu0 0.0
        %3049 = vmatpush1.msra.mxu0 %v3024
        %3050 = vmatprep.subr.mxu0 0.0
        %3051 = vmatpush1.msra.mxu0 %v3025
        %3052 = vmatprep.subr.mxu0 0.0
        %3053 = vmatpush1.msra.mxu0 %v3026
        %3054 = vmatprep.subr.mxu0 0.0
        %3055 = vmatpush1.msra.mxu0 %v3027
        %3056 = vmatprep.subr.mxu0 0.0
        %3057 = vmatpush1.msra.mxu0 %v3028
        %3058 = vmatprep.subr.mxu0 0.0
        %3059 = vmatpush1.msra.mxu0 %v3029
        %3060 = vmatprep.subr.mxu0 0.0
        %3061 = vmatpush1.msra.mxu0 %v3030
        %3062 = vmatprep.subr.mxu0 0.0
        %3063 = vmatpush1.msra.mxu0 %v3031
        %3064 = vmatprep.subr.mxu0 0.0
        %3065 = vmatpush1.msra.mxu0 0.0
        %3066 = vmatprep.subr.mxu0 0.0
        %3067 = vmatpush1.msra.mxu0 0.0
        %3068 = vmatprep.subr.mxu0 0.0
        %3069 = vmatpush1.msra.mxu0 0.0
        %3070 = vmatprep.subr.mxu0 0.0
        %3071 = vmatpush1.msra.mxu0 0.0
        %3072 = vmatprep.subr.mxu0 0.0
        %3073 = vmatpush1.msra.mxu0 0.0
        %3074 = vmatprep.subr.mxu0 0.0
        %3075 = vmatpush1.msra.mxu0 0.0
        %3076 = vmatprep.subr.mxu0 0.0
        %3077 = vmatpush1.msra.mxu0 0.0
        %3078 = vmatprep.subr.mxu0 0.0
        %3079 = vmatpush1.msra.mxu0 0.0
        %3080 = vmatprep.subr.mxu0 0.0
        %3081 = vmatpush1.msra.mxu0 0.0
        %3082 = vmatprep.subr.mxu0 0.0
        %3083 = vmatpush1.msra.mxu0 0.0
        %3084 = vmatprep.subr.mxu0 0.0
        %3085 = vmatpush1.msra.mxu0 0.0
        %3086 = vmatprep.subr.mxu0 0.0
        %3087 = vmatpush1.msra.mxu0 0.0
        %3088 = vmatprep.subr.mxu0 0.0
        %3089 = vmatpush1.msra.mxu0 0.0
        %3090 = vmatprep.subr.mxu0 0.0
        %3091 = vmatpush1.msra.mxu0 0.0
        %3092 = vmatprep.subr.mxu0 0.0
        %3093 = vmatpush1.msra.mxu0 0.0
        %3094 = vmatprep.subr.mxu0 0.0
        %3095 = vmatpush1.msra.mxu0 0.0
        %3096 = vmatprep.mubr.f32.mxu0 0.0
        %3097 = vmatmul.mubr.f32.gmra.mrb[0].mxu0 %v3014
        %v3098 = vpop.f32.mrb[0].mxu0
        %v3099 = vadd.f32 0.0, %v3098
        %v3100 = vpop.f32.mrb[0].mxu0
        %3101 = vmatprep.mubr.f32.mxu0 0.0
        %3102 = vmatmul.mubr.f32.gmra.mrb[0].mxu0 %v3015
        %v3103 = vpop.f32.mrb[0].mxu0
        %v3104 = vadd.f32 0.0, %v3103
        %v3105 = vpop.f32.mrb[0].mxu0
        %3106 = vdwg.mxu0
        %v3107 = vadd.f32 %v2871, %v3099
        %v3108 = vadd.f32 %v2872, %v3104
        %v3109 = vld [vmem:[%s12] sm:$0xff]
        %v3110 = vld [vmem:[%s12 + $0x8] sm:$0xff]
        %v3111 = vld [vmem:[%s12 + $0x10] sm:$0xff]
        %v3112 = vld [vmem:[%s12 + $0x18] sm:$0xff]
        %v3114 = vsel %vm639, %v3107, 0
        %v3117 = vsel %vm639, %v3108, 0
        %3119 = vmatprep.subr.mxu0 0.0
        %3120 = vmatpush1.msra.mxu0 %v3109
        %3121 = vmatprep.subr.mxu0 0.0
        %3122 = vmatpush1.msra.mxu0 %v3110
        %3123 = vmatprep.subr.mxu0 0.0
        %3124 = vmatpush1.msra.mxu0 %v3111
        %3125 = vmatprep.subr.mxu0 0.0
        %3126 = vmatpush1.msra.mxu0 %v3112
        %3127 = vmatprep.subr.mxu0 0.0
        %3128 = vmatpush1.msra.mxu0 0.0
        %3129 = vmatprep.subr.mxu0 0.0
        %3130 = vmatpush1.msra.mxu0 0.0
        %3131 = vmatprep.subr.mxu0 0.0
        %3132 = vmatpush1.msra.mxu0 0.0
        %3133 = vmatprep.subr.mxu0 0.0
        %3134 = vmatpush1.msra.mxu0 0.0
        %3135 = vmatprep.subr.mxu0 0.0
        %3136 = vmatpush1.msra.mxu0 0.0
        %3137 = vmatprep.subr.mxu0 0.0
        %3138 = vmatpush1.msra.mxu0 0.0
        %3139 = vmatprep.subr.mxu0 0.0
        %3140 = vmatpush1.msra.mxu0 0.0
        %3141 = vmatprep.subr.mxu0 0.0
        %3142 = vmatpush1.msra.mxu0 0.0
        %3143 = vmatprep.subr.mxu0 0.0
        %3144 = vmatpush1.msra.mxu0 0.0
        %3145 = vmatprep.subr.mxu0 0.0
        %3146 = vmatpush1.msra.mxu0 0.0
        %3147 = vmatprep.subr.mxu0 0.0
        %3148 = vmatpush1.msra.mxu0 0.0
        %3149 = vmatprep.subr.mxu0 0.0
        %3150 = vmatpush1.msra.mxu0 0.0
        %3151 = vmatprep.subr.mxu0 0.0
        %3152 = vmatpush1.msra.mxu0 0.0
        %3153 = vmatprep.subr.mxu0 0.0
        %3154 = vmatpush1.msra.mxu0 0.0
        %3155 = vmatprep.subr.mxu0 0.0
        %3156 = vmatpush1.msra.mxu0 0.0
        %3157 = vmatprep.subr.mxu0 0.0
        %3158 = vmatpush1.msra.mxu0 0.0
        %3159 = vmatprep.subr.mxu0 0.0
        %3160 = vmatpush1.msra.mxu0 0.0
        %3161 = vmatprep.subr.mxu0 0.0
        %3162 = vmatpush1.msra.mxu0 0.0
        %3163 = vmatprep.subr.mxu0 0.0
        %3164 = vmatpush1.msra.mxu0 0.0
        %3165 = vmatprep.subr.mxu0 0.0
        %3166 = vmatpush1.msra.mxu0 0.0
        %3167 = vmatprep.subr.mxu0 0.0
        %3168 = vmatpush1.msra.mxu0 0.0
        %3169 = vmatprep.subr.mxu0 0.0
        %3170 = vmatpush1.msra.mxu0 0.0
        %3171 = vmatprep.subr.mxu0 0.0
        %3172 = vmatpush1.msra.mxu0 0.0
        %3173 = vmatprep.subr.mxu0 0.0
        %3174 = vmatpush1.msra.mxu0 0.0
        %3175 = vmatprep.subr.mxu0 0.0
        %3176 = vmatpush1.msra.mxu0 0.0
        %3177 = vmatprep.subr.mxu0 0.0
        %3178 = vmatpush1.msra.mxu0 0.0
        %3179 = vmatprep.subr.mxu0 0.0
        %3180 = vmatpush1.msra.mxu0 0.0
        %3181 = vmatprep.subr.mxu0 0.0
        %3182 = vmatpush1.msra.mxu0 0.0
        %3183 = vmatprep.mubr.f32.mxu0 0.0
        %3184 = vmatmul.mubr.f32.gmra.mrb[0].mxu0 %v3114
        %v3185 = vpop.f32.mrb[0].mxu0
        %v3186 = vadd.f32 0.0, %v3185
        %v3187 = vpop.f32.mrb[0].mxu0
        %3188 = vmatprep.mubr.f32.mxu0 0.0
        %3189 = vmatmul.mubr.f32.gmra.mrb[0].mxu0 %v3117
        %v3190 = vpop.f32.mrb[0].mxu0
        %v3191 = vadd.f32 0.0, %v3190
        %v3192 = vpop.f32.mrb[0].mxu0
        %3193 = vdwg.mxu0
        %v3194 = vld [vmem:[%s13] sm:$0xff]
        %v3195 = vld [vmem:[%s13 + $0x8] sm:$0xff]
        %v3196 = vld [vmem:[%s13 + $0x10] sm:$0xff]
        %v3197 = vld [vmem:[%s13 + $0x18] sm:$0xff]
        %v3199 = vsel %vm639, %v587, 0
        %3201 = vmatprep.subr.mxu0 0.0
        %3202 = vmatpush1.msra.mxu0 %v3194
        %3203 = vmatprep.subr.mxu0 0.0
        %3204 = vmatpush1.msra.mxu0 %v3195
        %3205 = vmatprep.subr.mxu0 0.0
        %3206 = vmatpush1.msra.mxu0 %v3196
        %3207 = vmatprep.subr.mxu0 0.0
        %3208 = vmatpush1.msra.mxu0 %v3197
        %3209 = vmatprep.subr.mxu0 0.0
        %3210 = vmatpush1.msra.mxu0 0.0
        %3211 = vmatprep.subr.mxu0 0.0
        %3212 = vmatpush1.msra.mxu0 0.0
        %3213 = vmatprep.subr.mxu0 0.0
        %3214 = vmatpush1.msra.mxu0 0.0
        %3215 = vmatprep.subr.mxu0 0.0
        %3216 = vmatpush1.msra.mxu0 0.0
        %3217 = vmatprep.subr.mxu0 0.0
        %3218 = vmatpush1.msra.mxu0 0.0
        %3219 = vmatprep.subr.mxu0 0.0
        %3220 = vmatpush1.msra.mxu0 0.0
        %3221 = vmatprep.subr.mxu0 0.0
        %3222 = vmatpush1.msra.mxu0 0.0
        %3223 = vmatprep.subr.mxu0 0.0
        %3224 = vmatpush1.msra.mxu0 0.0
        %3225 = vmatprep.subr.mxu0 0.0
        %3226 = vmatpush1.msra.mxu0 0.0
        %3227 = vmatprep.subr.mxu0 0.0
        %3228 = vmatpush1.msra.mxu0 0.0
        %3229 = vmatprep.subr.mxu0 0.0
        %3230 = vmatpush1.msra.mxu0 0.0
        %3231 = vmatprep.subr.mxu0 0.0
        %3232 = vmatpush1.msra.mxu0 0.0
        %3233 = vmatprep.subr.mxu0 0.0
        %3234 = vmatpush1.msra.mxu0 0.0
        %3235 = vmatprep.subr.mxu0 0.0
        %3236 = vmatpush1.msra.mxu0 0.0
        %3237 = vmatprep.subr.mxu0 0.0
        %3238 = vmatpush1.msra.mxu0 0.0
        %3239 = vmatprep.subr.mxu0 0.0
        %3240 = vmatpush1.msra.mxu0 0.0
        %3241 = vmatprep.subr.mxu0 0.0
        %3242 = vmatpush1.msra.mxu0 0.0
        %3243 = vmatprep.subr.mxu0 0.0
        %3244 = vmatpush1.msra.mxu0 0.0
        %3245 = vmatprep.subr.mxu0 0.0
        %3246 = vmatpush1.msra.mxu0 0.0
        %3247 = vmatprep.subr.mxu0 0.0
        %3248 = vmatpush1.msra.mxu0 0.0
        %3249 = vmatprep.subr.mxu0 0.0
        %3250 = vmatpush1.msra.mxu0 0.0
        %3251 = vmatprep.subr.mxu0 0.0
        %3252 = vmatpush1.msra.mxu0 0.0
        %3253 = vmatprep.subr.mxu0 0.0
        %3254 = vmatpush1.msra.mxu0 0.0
        %3255 = vmatprep.subr.mxu0 0.0
        %3256 = vmatpush1.msra.mxu0 0.0
        %3257 = vmatprep.subr.mxu0 0.0
        %3258 = vmatpush1.msra.mxu0 0.0
        %3259 = vmatprep.subr.mxu0 0.0
        %3260 = vmatpush1.msra.mxu0 0.0
        %3261 = vmatprep.subr.mxu0 0.0
        %3262 = vmatpush1.msra.mxu0 0.0
        %3263 = vmatprep.subr.mxu0 0.0
        %3264 = vmatpush1.msra.mxu0 0.0
        %3265 = vmatprep.mubr.f32.mxu0 0.0
        %3266 = vmatmul.mubr.f32.gmra.mrb[0].mxu0 %v3199
        %v3267 = vpop.f32.mrb[0].mxu0
        %v3268 = vadd.f32 0.0, %v3267
        %v3269 = vpop.f32.mrb[0].mxu0
        %3270 = vdwg.mxu0
        %vm3271 = vcmp.gt.f32.partialorder %v591, 0.5
        %v3273 = vsel %vm1061, %v3186, 0
        %v3276 = vsel %vm1061, %v3191, 0
        %v3279 = vsel %vm1061, %v3268, 0
        %3281 = vmatprep.subr.mxu0 0.0
        %3282 = vmatpush1.xpose.msra.mxu0 %v3279
        %3283 = vmatprep.subr.mxu0 0.0
        %3284 = vmatpush1.xpose.msra.mxu0 0.0
        %3285 = vmatprep.subr.mxu0 0.0
        %3286 = vmatpush1.xpose.msra.mxu0 0.0
        %3287 = vmatprep.subr.mxu0 0.0
        %3288 = vmatpush1.xpose.msra.mxu0 0.0
        %3289 = vmatprep.subr.mxu0 0.0
        %3290 = vmatpush1.xpose.msra.mxu0 0.0
        %3291 = vmatprep.subr.mxu0 0.0
        %3292 = vmatpush1.xpose.msra.mxu0 0.0
        %3293 = vmatprep.subr.mxu0 0.0
        %3294 = vmatpush1.xpose.msra.mxu0 0.0
        %3295 = vmatprep.subr.mxu0 0.0
        %3296 = vmatpush1.xpose.msra.mxu0 0.0
        %3297 = vmatprep.subr.mxu0 0.0
        %3298 = vmatpush1.xpose.msra.mxu0 0.0
        %3299 = vmatprep.subr.mxu0 0.0
        %3300 = vmatpush1.xpose.msra.mxu0 0.0
        %3301 = vmatprep.subr.mxu0 0.0
        %3302 = vmatpush1.xpose.msra.mxu0 0.0
        %3303 = vmatprep.subr.mxu0 0.0
        %3304 = vmatpush1.xpose.msra.mxu0 0.0
        %3305 = vmatprep.subr.mxu0 0.0
        %3306 = vmatpush1.xpose.msra.mxu0 0.0
        %3307 = vmatprep.subr.mxu0 0.0
        %3308 = vmatpush1.xpose.msra.mxu0 0.0
        %3309 = vmatprep.subr.mxu0 0.0
        %3310 = vmatpush1.xpose.msra.mxu0 0.0
        %3311 = vmatprep.subr.mxu0 0.0
        %3312 = vmatpush1.xpose.msra.mxu0 0.0
        %3313 = vmatprep.subr.mxu0 0.0
        %3314 = vmatpush1.xpose.msra.mxu0 0.0
        %3315 = vmatprep.subr.mxu0 0.0
        %3316 = vmatpush1.xpose.msra.mxu0 0.0
        %3317 = vmatprep.subr.mxu0 0.0
        %3318 = vmatpush1.xpose.msra.mxu0 0.0
        %3319 = vmatprep.subr.mxu0 0.0
        %3320 = vmatpush1.xpose.msra.mxu0 0.0
        %3321 = vmatprep.subr.mxu0 0.0
        %3322 = vmatpush1.xpose.msra.mxu0 0.0
        %3323 = vmatprep.subr.mxu0 0.0
        %3324 = vmatpush1.xpose.msra.mxu0 0.0
        %3325 = vmatprep.subr.mxu0 0.0
        %3326 = vmatpush1.xpose.msra.mxu0 0.0
        %3327 = vmatprep.subr.mxu0 0.0
        %3328 = vmatpush1.xpose.msra.mxu0 0.0
        %3329 = vmatprep.subr.mxu0 0.0
        %3330 = vmatpush1.xpose.msra.mxu0 0.0
        %3331 = vmatprep.subr.mxu0 0.0
        %3332 = vmatpush1.xpose.msra.mxu0 0.0
        %3333 = vmatprep.subr.mxu0 0.0
        %3334 = vmatpush1.xpose.msra.mxu0 0.0
        %3335 = vmatprep.subr.mxu0 0.0
        %3336 = vmatpush1.xpose.msra.mxu0 0.0
        %3337 = vmatprep.subr.mxu0 0.0
        %3338 = vmatpush1.xpose.msra.mxu0 0.0
        %3339 = vmatprep.subr.mxu0 0.0
        %3340 = vmatpush1.xpose.msra.mxu0 0.0
        %3341 = vmatprep.subr.mxu0 0.0
        %3342 = vmatpush1.xpose.msra.mxu0 0.0
        %3343 = vmatprep.subr.mxu0 0.0
        %3344 = vmatpush1.xpose.msra.mxu0 0.0
        %3345 = vmatprep.mubr.f32.mxu0 0.0
        %3346 = vmatmul.mubr.f32.gmra.mrb[0].mxu0 %v3273
        %v3347 = vpop.f32.mrb[0].mxu0
        %v3348 = vadd.f32 0.0, %v3347
        %v3349 = vpop.f32.mrb[0].mxu0
        %3350 = vmatprep.mubr.f32.mxu0 0.0
        %3351 = vmatmul.mubr.f32.gmra.mrb[0].mxu0 %v3276
        %v3352 = vpop.f32.mrb[0].mxu0
        %v3353 = vadd.f32 0.0, %v3352
        %v3354 = vpop.f32.mrb[0].mxu0
        %3355 = vdwg.mxu0
        %v3356 = vsel %vm3271, 1, 0
        %v3357 = vlaneseq
        %v3358 = vshrl.u32 %v3357, 7
        %v3359 = vsub.s32 0, %v3358
        %v3360 = vrot.slane %v3356, %v3359
        %vm3361 = vcmp.eq.s32.totalorder %v3360, 1
        %v3362 = vsel %vm3361, %v3348, -1e+30
        %v3363 = vsel %vm3361, %v3353, -1e+30
        %v3364 = vsel %vm760, %v3362, -inf
        %3365 = vmax.xlane.f32.xlu0 %v3364
        %v3366 = vpop.xlane.xlu0 %3365
        %vm3367 = vcmask 58368
        %v3368 = vsel %vm3367, %v3363, -inf
        %3369 = vmax.xlane.f32.xlu0 %v3368
        %v3370 = vpop.xlane.xlu0 %3369
        %v3371 = vsub.f32 %v3362, %v3366
        %v3372 = vsub.f32 %v3363, %v3370
        %v3373 = vmul.f32 %v3371, 1.442695
        %v3374 = vpow.pop %v3373
        %v3375 = vmul.f32 %v3372, 1.442695
        %v3376 = vpow.pop %v3375
        %v3377 = vsel %vm760, %v3374, 0.0
        %3378 = vadd.xlane.f32.xlu0 %v3377
        %v3379 = vpop.xlane.xlu0 %3378
        %v3380 = vsel %vm3367, %v3376, 0.0
        %3381 = vadd.xlane.f32.xlu0 %v3380
        %v3382 = vpop.xlane.xlu0 %3381
        %v3383 = vrcp.pop %v3379
        %v3384 = vrcp.pop %v3382
        %v3385 = vmul.f32 %v3374, %v3383
        %v3386 = vmul.f32 %v3376, %v3384
        %3387 = vrot.lane.b32.xlu0 %v3186, 112
        %v3388 = vpop.permute.xlu0 %3387
        %3389 = vrot.lane.b32.xlu0 %v3191, 112
        %v3390 = vpop.permute.xlu0 %3389
        %v3391 = vsel %vm1061, %v3388, 0
        %v3393 = vsel %vm1061, %v3390, 0
        %3395 = vmatprep.subr.mxu0 0.0
        %3396 = vmatpush1.xpose.msra.mxu0 %v3279
        %3397 = vmatprep.subr.mxu0 0.0
        %3398 = vmatpush1.xpose.msra.mxu0 0.0
        %3399 = vmatprep.subr.mxu0 0.0
        %3400 = vmatpush1.xpose.msra.mxu0 0.0
        %3401 = vmatprep.subr.mxu0 0.0
        %3402 = vmatpush1.xpose.msra.mxu0 0.0
        %3403 = vmatprep.subr.mxu0 0.0
        %3404 = vmatpush1.xpose.msra.mxu0 0.0
        %3405 = vmatprep.subr.mxu0 0.0
        %3406 = vmatpush1.xpose.msra.mxu0 0.0
        %3407 = vmatprep.subr.mxu0 0.0
        %3408 = vmatpush1.xpose.msra.mxu0 0.0
        %3409 = vmatprep.subr.mxu0 0.0
        %3410 = vmatpush1.xpose.msra.mxu0 0.0
        %3411 = vmatprep.subr.mxu0 0.0
        %3412 = vmatpush1.xpose.msra.mxu0 0.0
        %3413 = vmatprep.subr.mxu0 0.0
        %3414 = vmatpush1.xpose.msra.mxu0 0.0
        %3415 = vmatprep.subr.mxu0 0.0
        %3416 = vmatpush1.xpose.msra.mxu0 0.0
        %3417 = vmatprep.subr.mxu0 0.0
        %3418 = vmatpush1.xpose.msra.mxu0 0.0
        %3419 = vmatprep.subr.mxu0 0.0
        %3420 = vmatpush1.xpose.msra.mxu0 0.0
        %3421 = vmatprep.subr.mxu0 0.0
        %3422 = vmatpush1.xpose.msra.mxu0 0.0
        %3423 = vmatprep.subr.mxu0 0.0
        %3424 = vmatpush1.xpose.msra.mxu0 0.0
        %3425 = vmatprep.subr.mxu0 0.0
        %3426 = vmatpush1.xpose.msra.mxu0 0.0
        %3427 = vmatprep.subr.mxu0 0.0
        %3428 = vmatpush1.xpose.msra.mxu0 0.0
        %3429 = vmatprep.subr.mxu0 0.0
        %3430 = vmatpush1.xpose.msra.mxu0 0.0
        %3431 = vmatprep.subr.mxu0 0.0
        %3432 = vmatpush1.xpose.msra.mxu0 0.0
        %3433 = vmatprep.subr.mxu0 0.0
        %3434 = vmatpush1.xpose.msra.mxu0 0.0
        %3435 = vmatprep.subr.mxu0 0.0
        %3436 = vmatpush1.xpose.msra.mxu0 0.0
        %3437 = vmatprep.subr.mxu0 0.0
        %3438 = vmatpush1.xpose.msra.mxu0 0.0
        %3439 = vmatprep.subr.mxu0 0.0
        %3440 = vmatpush1.xpose.msra.mxu0 0.0
        %3441 = vmatprep.subr.mxu0 0.0
        %3442 = vmatpush1.xpose.msra.mxu0 0.0
        %3443 = vmatprep.subr.mxu0 0.0
        %3444 = vmatpush1.xpose.msra.mxu0 0.0
        %3445 = vmatprep.subr.mxu0 0.0
        %3446 = vmatpush1.xpose.msra.mxu0 0.0
        %3447 = vmatprep.subr.mxu0 0.0
        %3448 = vmatpush1.xpose.msra.mxu0 0.0
        %3449 = vmatprep.subr.mxu0 0.0
        %3450 = vmatpush1.xpose.msra.mxu0 0.0
        %3451 = vmatprep.subr.mxu0 0.0
        %3452 = vmatpush1.xpose.msra.mxu0 0.0
        %3453 = vmatprep.subr.mxu0 0.0
        %3454 = vmatpush1.xpose.msra.mxu0 0.0
        %3455 = vmatprep.subr.mxu0 0.0
        %3456 = vmatpush1.xpose.msra.mxu0 0.0
        %3457 = vmatprep.subr.mxu0 0.0
        %3458 = vmatpush1.xpose.msra.mxu0 0.0
        %3459 = vmatprep.mubr.f32.mxu0 0.0
        %3460 = vmatmul.mubr.f32.gmra.mrb[0].mxu0 %v3391
        %v3461 = vpop.f32.mrb[0].mxu0
        %v3462 = vadd.f32 0.0, %v3461
        %v3463 = vpop.f32.mrb[0].mxu0
        %3464 = vmatprep.mubr.f32.mxu0 0.0
        %3465 = vmatmul.mubr.f32.gmra.mrb[0].mxu0 %v3393
        %v3466 = vpop.f32.mrb[0].mxu0
        %v3467 = vadd.f32 0.0, %v3466
        %v3468 = vpop.f32.mrb[0].mxu0
        %3469 = vdwg.mxu0
        %v3470 = vsel %vm3361, %v3462, -1e+30
        %v3471 = vsel %vm3361, %v3467, -1e+30
        %v3472 = vsel %vm760, %v3470, -inf
        %3473 = vmax.xlane.f32.xlu0 %v3472
        %v3474 = vpop.xlane.xlu0 %3473
        %v3475 = vsel %vm3367, %v3471, -inf
        %3476 = vmax.xlane.f32.xlu0 %v3475
        %v3477 = vpop.xlane.xlu0 %3476
        %v3478 = vsub.f32 %v3470, %v3474
        %v3479 = vsub.f32 %v3471, %v3477
        %v3480 = vmul.f32 %v3478, 1.442695
        %v3481 = vpow.pop %v3480
        %v3482 = vmul.f32 %v3479, 1.442695
        %v3483 = vpow.pop %v3482
        %v3484 = vsel %vm760, %v3481, 0.0
        %3485 = vadd.xlane.f32.xlu0 %v3484
        %v3486 = vpop.xlane.xlu0 %3485
        %v3487 = vsel %vm3367, %v3483, 0.0
        %3488 = vadd.xlane.f32.xlu0 %v3487
        %v3489 = vpop.xlane.xlu0 %3488
        %v3490 = vrcp.pop %v3486
        %v3491 = vrcp.pop %v3489
        %v3492 = vmul.f32 %v3481, %v3490
        %v3493 = vmul.f32 %v3483, %v3491
        %v3495 = vsel %vm760, %v3492, 0
        %v3498 = vsel %vm760, %v3493, 0
        %3500 = vmatprep.subr.mxu0 0.0
        %3501 = vmatpush1.msra.mxu0 %v587
        %3502 = vmatprep.subr.mxu0 0.0
        %3503 = vmatpush1.msra.mxu0 0.0
        %3504 = vmatprep.subr.mxu0 0.0
        %3505 = vmatpush1.msra.mxu0 0.0
        %3506 = vmatprep.subr.mxu0 0.0
        %3507 = vmatpush1.msra.mxu0 0.0
        %3508 = vmatprep.subr.mxu0 0.0
        %3509 = vmatpush1.msra.mxu0 0.0
        %3510 = vmatprep.subr.mxu0 0.0
        %3511 = vmatpush1.msra.mxu0 0.0
        %3512 = vmatprep.subr.mxu0 0.0
        %3513 = vmatpush1.msra.mxu0 0.0
        %3514 = vmatprep.subr.mxu0 0.0
        %3515 = vmatpush1.msra.mxu0 0.0
        %3516 = vmatprep.subr.mxu0 0.0
        %3517 = vmatpush1.msra.mxu0 0.0
        %3518 = vmatprep.subr.mxu0 0.0
        %3519 = vmatpush1.msra.mxu0 0.0
        %3520 = vmatprep.subr.mxu0 0.0
        %3521 = vmatpush1.msra.mxu0 0.0
        %3522 = vmatprep.subr.mxu0 0.0
        %3523 = vmatpush1.msra.mxu0 0.0
        %3524 = vmatprep.subr.mxu0 0.0
        %3525 = vmatpush1.msra.mxu0 0.0
        %3526 = vmatprep.subr.mxu0 0.0
        %3527 = vmatpush1.msra.mxu0 0.0
        %3528 = vmatprep.subr.mxu0 0.0
        %3529 = vmatpush1.msra.mxu0 0.0
        %3530 = vmatprep.subr.mxu0 0.0
        %3531 = vmatpush1.msra.mxu0 0.0
        %3532 = vmatprep.subr.mxu0 0.0
        %3533 = vmatpush1.msra.mxu0 0.0
        %3534 = vmatprep.subr.mxu0 0.0
        %3535 = vmatpush1.msra.mxu0 0.0
        %3536 = vmatprep.subr.mxu0 0.0
        %3537 = vmatpush1.msra.mxu0 0.0
        %3538 = vmatprep.subr.mxu0 0.0
        %3539 = vmatpush1.msra.mxu0 0.0
        %3540 = vmatprep.subr.mxu0 0.0
        %3541 = vmatpush1.msra.mxu0 0.0
        %3542 = vmatprep.subr.mxu0 0.0
        %3543 = vmatpush1.msra.mxu0 0.0
        %3544 = vmatprep.subr.mxu0 0.0
        %3545 = vmatpush1.msra.mxu0 0.0
        %3546 = vmatprep.subr.mxu0 0.0
        %3547 = vmatpush1.msra.mxu0 0.0
        %3548 = vmatprep.subr.mxu0 0.0
        %3549 = vmatpush1.msra.mxu0 0.0
        %3550 = vmatprep.subr.mxu0 0.0
        %3551 = vmatpush1.msra.mxu0 0.0
        %3552 = vmatprep.subr.mxu0 0.0
        %3553 = vmatpush1.msra.mxu0 0.0
        %3554 = vmatprep.subr.mxu0 0.0
        %3555 = vmatpush1.msra.mxu0 0.0
        %3556 = vmatprep.subr.mxu0 0.0
        %3557 = vmatpush1.msra.mxu0 0.0
        %3558 = vmatprep.subr.mxu0 0.0
        %3559 = vmatpush1.msra.mxu0 0.0
        %3560 = vmatprep.subr.mxu0 0.0
        %3561 = vmatpush1.msra.mxu0 0.0
        %3562 = vmatprep.subr.mxu0 0.0
        %3563 = vmatpush1.msra.mxu0 0.0
        %3564 = vmatprep.mubr.f32.mxu0 0.0
        %3565 = vmatmul.mubr.f32.gmra.mrb[0].mxu0 %v3495
        %v3566 = vpop.f32.mrb[0].mxu0
        %v3567 = vadd.f32 0.0, %v3566
        %v3568 = vpop.f32.mrb[0].mxu0
        %3569 = vmatprep.mubr.f32.mxu0 0.0
        %3570 = vmatmul.mubr.f32.gmra.mrb[0].mxu0 %v3498
        %v3571 = vpop.f32.mrb[0].mxu0
        %v3572 = vadd.f32 0.0, %v3571
        %v3573 = vpop.f32.mrb[0].mxu0
        %3574 = vdwg.mxu0
        %v3576 = vsel %vm760, %v3385, 0
        %v3579 = vsel %vm760, %v3386, 0
        %3581 = vmatprep.subr.mxu0 0.0
        %3582 = vmatpush1.msra.mxu0 %v587
        %3583 = vmatprep.subr.mxu0 0.0
        %3584 = vmatpush1.msra.mxu0 0.0
        %3585 = vmatprep.subr.mxu0 0.0
        %3586 = vmatpush1.msra.mxu0 0.0
        %3587 = vmatprep.subr.mxu0 0.0
        %3588 = vmatpush1.msra.mxu0 0.0
        %3589 = vmatprep.subr.mxu0 0.0
        %3590 = vmatpush1.msra.mxu0 0.0
        %3591 = vmatprep.subr.mxu0 0.0
        %3592 = vmatpush1.msra.mxu0 0.0
        %3593 = vmatprep.subr.mxu0 0.0
        %3594 = vmatpush1.msra.mxu0 0.0
        %3595 = vmatprep.subr.mxu0 0.0
        %3596 = vmatpush1.msra.mxu0 0.0
        %3597 = vmatprep.subr.mxu0 0.0
        %3598 = vmatpush1.msra.mxu0 0.0
        %3599 = vmatprep.subr.mxu0 0.0
        %3600 = vmatpush1.msra.mxu0 0.0
        %3601 = vmatprep.subr.mxu0 0.0
        %3602 = vmatpush1.msra.mxu0 0.0
        %3603 = vmatprep.subr.mxu0 0.0
        %3604 = vmatpush1.msra.mxu0 0.0
        %3605 = vmatprep.subr.mxu0 0.0
        %3606 = vmatpush1.msra.mxu0 0.0
        %3607 = vmatprep.subr.mxu0 0.0
        %3608 = vmatpush1.msra.mxu0 0.0
        %3609 = vmatprep.subr.mxu0 0.0
        %3610 = vmatpush1.msra.mxu0 0.0
        %3611 = vmatprep.subr.mxu0 0.0
        %3612 = vmatpush1.msra.mxu0 0.0
        %3613 = vmatprep.subr.mxu0 0.0
        %3614 = vmatpush1.msra.mxu0 0.0
        %3615 = vmatprep.subr.mxu0 0.0
        %3616 = vmatpush1.msra.mxu0 0.0
        %3617 = vmatprep.subr.mxu0 0.0
        %3618 = vmatpush1.msra.mxu0 0.0
        %3619 = vmatprep.subr.mxu0 0.0
        %3620 = vmatpush1.msra.mxu0 0.0
        %3621 = vmatprep.subr.mxu0 0.0
        %3622 = vmatpush1.msra.mxu0 0.0
        %3623 = vmatprep.subr.mxu0 0.0
        %3624 = vmatpush1.msra.mxu0 0.0
        %3625 = vmatprep.subr.mxu0 0.0
        %3626 = vmatpush1.msra.mxu0 0.0
        %3627 = vmatprep.subr.mxu0 0.0
        %3628 = vmatpush1.msra.mxu0 0.0
        %3629 = vmatprep.subr.mxu0 0.0
        %3630 = vmatpush1.msra.mxu0 0.0
        %3631 = vmatprep.subr.mxu0 0.0
        %3632 = vmatpush1.msra.mxu0 0.0
        %3633 = vmatprep.subr.mxu0 0.0
        %3634 = vmatpush1.msra.mxu0 0.0
        %3635 = vmatprep.subr.mxu0 0.0
        %3636 = vmatpush1.msra.mxu0 0.0
        %3637 = vmatprep.subr.mxu0 0.0
        %3638 = vmatpush1.msra.mxu0 0.0
        %3639 = vmatprep.subr.mxu0 0.0
        %3640 = vmatpush1.msra.mxu0 0.0
        %3641 = vmatprep.subr.mxu0 0.0
        %3642 = vmatpush1.msra.mxu0 0.0
        %3643 = vmatprep.subr.mxu0 0.0
        %3644 = vmatpush1.msra.mxu0 0.0
        %3645 = vmatprep.mubr.f32.mxu0 0.0
        %3646 = vmatmul.mubr.f32.gmra.mrb[0].mxu0 %v3576
        %v3647 = vpop.f32.mrb[0].mxu0
        %v3648 = vadd.f32 %v3567, %v3647
        %v3649 = vpop.f32.mrb[0].mxu0
        %3650 = vmatprep.mubr.f32.mxu0 0.0
        %3651 = vmatmul.mubr.f32.gmra.mrb[0].mxu0 %v3579
        %v3652 = vpop.f32.mrb[0].mxu0
        %v3653 = vadd.f32 %v3572, %v3652
        %v3654 = vpop.f32.mrb[0].mxu0
        %3655 = vdwg.mxu0
        %3656 = vst.msk [vmem:[%s549] sm:$0xff] %vm639, %v2092
        %3657 = vst.msk [vmem:[%s584] sm:$0xff] %vm639, %v3648
        %3658 = vst.msk [vmem:[%s584 + $0x8] sm:$0x3] %vm933, %v3653
        %s3659 = sand.u32 %s362, 1
        %s3660 = scalar_lea.sflag [#allocation3], %s3659
        %s3661 = sand.u32 %s362, 1
        %s3662 = smul.addr %s3661, 8
        %s3663 = scalar_lea.vmem [#allocation2], %s3662
        %p3664 = scmp.lt.s32.totalorder %s30, 1
        %s3665 = scalar_select %p3664, %s30, 1
        %s3666 = smul.addr %s3665, 2
        %s3667 = smul.addr %s3666, 8
        %s3668 = scalar_lea.vmem %s15, %s3667
        // Predicated region
        $region77: #{graphformer_forward.1} parent=75 // pred_check
          %p3669 = pneg %p372
        $region78: #{graphformer_forward.1} parent=75 // pred_check_branch
          %3671 = sbr.rel (%p3669) target = $region80
        $region79: #{graphformer_forward.1} parent=75 // pred_region
          %s3673 = ssub.s32 128, 128
          %3674 = vsyncadd %s3660, %s3673
          %s3675 = smul.addr %s30, 128
          %s3676 = scalar_lea.hbm %s14, %s3675
          %s3678 = sshll.u32 %s3663, 4
          %s3679 = int_to_ptr.vmem [resolvable:$true] %s3678
          %3681 = dma.vmem_to_hbm [thread:$0]  %s3679, 128, %s3676, %s3660
        $region80: #{graphformer_forward.1} parent=75 // pred_fallthru
          _
        // Predicated region
        $region81: #{graphformer_forward.1} parent=75 // pred_check
          %p3682 = pneg %p398
        $region82: #{graphformer_forward.1} parent=75 // pred_check_branch
          %3684 = sbr.rel (%p3682) target = $region84
        $region83: #{graphformer_forward.1} parent=75 // pred_region
          _
        $region84: #{graphformer_forward.1} parent=75 // pred_fallthru
          _
      $region76: #{graphformer_forward.1} parent=5 // pred_fallthru
        _
      %p3685 = scmp.le.s32.totalorder 2, %s25
      // Predicated region
      $region85: #{graphformer_forward.1} parent=5 // pred_check
        %p3686 = pneg %p3685
      $region86: #{graphformer_forward.1} parent=5 // pred_check_branch
        %3688 = sbr.rel (%p3686) target = $region88
      $region87: #{graphformer_forward.1} parent=5 // pred_region
        %s3689 = ssub.s32 %s25, 2
        // Predicated region
        $region89: #{graphformer_forward.1} parent=87 // pred_check
          %p3690 = pneg %p378
        $region90: #{graphformer_forward.1} parent=87 // pred_check_branch
          %3692 = sbr.rel (%p3690) target = $region92
        $region91: #{graphformer_forward.1} parent=87 // pred_region
          %s3693 = sand.u32 %s363, 1
          %s3694 = scalar_lea.sflag [#allocation3], %s3693
          %s3695 = sand.u32 %s363, 1
          %s3696 = smul.addr %s3695, 8
          %s3697 = scalar_lea.vmem [#allocation2], %s3696
          %3698 = dma.done %s3694, 128
        $region92: #{graphformer_forward.1} parent=87 // pred_fallthru
          _
        // Predicated region
        $region93: #{graphformer_forward.1} parent=87 // pred_check
          %p3699 = pneg %p404
        $region94: #{graphformer_forward.1} parent=87 // pred_check_branch
          %3701 = sbr.rel (%p3699) target = $region96
        $region95: #{graphformer_forward.1} parent=87 // pred_region
          %p3702 = scmp.lt.s32.totalorder %s31, 1
          %s3703 = scalar_select %p3702, %s31, 1
          %s3704 = smul.addr %s3703, 2
          %s3705 = smul.addr %s3704, 8
          %s3706 = scalar_lea.vmem %s15, %s3705
        $region96: #{graphformer_forward.1} parent=87 // pred_fallthru
          _
      $region88: #{graphformer_forward.1} parent=5 // pred_fallthru
        _
    $region6: #{graphformer_forward.1} parent=1 // loop_footer
      %s29 = sadd.s32 1, %s25
    $region7: #{graphformer_forward.1} parent=1 // loop_footer_branch
      %24 = sbr.rel target = $region3
    $region8: #{graphformer_forward.1} parent=1 // loop_exit
      _
    %3707 = vsyncpa [#allocation3], 1
    %s3708 = scalar_lea.sflag [#allocation3], 1
    %3709 = vsyncpa %s3708, 1

</llo_original>
